<compile_context>
chip_gen: v7x
topology: tpu7x:2x2x1
jax: 0.10.0
libtpu: 0.0.40
codegen_flags: <defaults>
</compile_context>

<pallas_src>
import functools
import math

import jax
import jax.numpy as jnp
from jax.experimental import pallas as pl
from jax.experimental.pallas import tpu as pltpu

PAD = 6        # max halo rows/cols (dilation-6 branch); all branches read inside it
LANE = 128     # channel padding granularity (TPU lane width)
SUBLANE = 8    # sublane alignment for the padded width / stored width


def _round_up(x, m):
    return (x + m - 1) // m * m


def _cdiv(a, b):
    return -(-a // b)


def _vmem_capacity():
    try:
        cap = getattr(pltpu.get_tpu_info(), "vmem_capacity_bytes", None)
        if cap:
            return int(cap)
    except Exception:
        pass
    return 64 * 1024 * 1024     # conservative (v7x-sized) fallback


@functools.lru_cache(maxsize=None)
def _probe_roll(backend, dtype_name):
    """One-time probe of pltpu.roll along axis 0 for `dtype`.

    Returns (supported, matches_jnp_convention).  Keyed on the backend so a
    backend change within the process re-probes (review concern)."""
    del backend  # cache key only
    dtype = jnp.dtype(dtype_name)
    rows = 32

    def probe(x_ref, o_ref):
        o_ref[...] = pltpu.roll(x_ref[...], 3, axis=0)

    try:
        with jax.ensure_compile_time_eval():
            x = jax.lax.broadcasted_iota(jnp.int32, (rows, LANE), 0).astype(dtype)
            y = pl.pallas_call(
                probe, out_shape=jax.ShapeDtypeStruct((rows, LANE), dtype))(x)
            first = int(y[0, 0].astype(jnp.float32))
    except Exception:
        return False, True
    # jnp.roll convention: out[0] == in[-3] == rows - 3.
    return True, first == rows - 3


def _vmem_estimate(th, wp, w8, cin_p, cout_p, roll_bytes, cdt_bytes, out_bytes):
    """Rough peak-VMEM model for one grid step (used for tile selection)."""
    r = th + 2 * PAD
    tile = r * wp * cin_p
    dma_scratch = 2 * tile * cdt_bytes                 # double-buffered halo
    values = 7 * tile * roll_bytes                     # xt + rolls + fused-K concat
    acc = 2 * th * wp * cout_p * 4                     # f32 accumulator + store temp
    out_blk = 2 * th * w8 * 3 * cout_p * out_bytes     # double-buffered out block
    wts = 2 * (19 * cin_p * cout_p * cdt_bytes + 3 * cout_p * 4)
    return dma_scratch + values + acc + out_blk + wts


def aspp_forward(x_nchw, params, *, row_tile=None, row_tile_target=32,
                 compute_dtype=jnp.bfloat16, vmem_limit_bytes=None,
                 vmem_budget_bytes=None):
    """Pallas ASPP forward. x_nchw: (B, Cin, H, W) -> (B, 4*Cout, H, W)."""
    w0, b0, w1, b1, w2, b2, w3, b3 = params
    B, Cin, H, W = x_nchw.shape
    Cout = w0.shape[-1]
    out_dtype = x_nchw.dtype
    out_bytes = jnp.dtype(out_dtype).itemsize
    cdt = jnp.dtype(compute_dtype)
    cdt_bytes = cdt.itemsize

    # ---- alignment: channels -> x128 lanes, widths -> x8 sublanes ------------
    Cin_p = _round_up(Cin, LANE)
    Cout_p = _round_up(Cout, LANE)
    Wp = _round_up(W + 2 * PAD, SUBLANE)      # padded (halo) row width
    W8 = _round_up(W, SUBLANE)                # stored width (cropped in wrapper)
    # Roll wrap-around safety: for every *valid* output column w (< W) the tap
    # column w + shift (shift <= 2*PAD) stays inside the padded row.
    assert Wp >= W + 2 * PAD and W8 <= Wp, (Wp, W, W8)

    backend = jax.default_backend()
    _, roll_is_jnp = _probe_roll(backend, "int32")          # rotation convention
    if cdt_bytes == 4:
        roll_native = True
    else:
        roll_native, _ = _probe_roll(backend, cdt.name)     # sub-32-bit support
    roll_bytes = cdt_bytes if roll_native else 4

    # ---- row-tile selection against a VMEM budget ----------------------------
    cap = _vmem_capacity()
    budget = vmem_budget_bytes or int(cap * 0.7)

    def est(th):
        return _vmem_estimate(th, Wp, W8, Cin_p, Cout_p,
                              roll_bytes, cdt_bytes, out_bytes)

    def choose(tgt):
        nt = _cdiv(H, tgt)
        th = _cdiv(H, nt)
        return th, nt

    if row_tile is not None:
        TH = int(row_tile)
        nT = _cdiv(H, TH)
    else:
        tgt = max(SUBLANE, min(row_tile_target, H))
        TH, nT = choose(tgt)
        while est(TH) > budget and tgt > SUBLANE:
            tgt = max(SUBLANE, tgt // 2)
            TH, nT = choose(tgt)

    H_pad = TH * nT                      # rows >= H computed over zeros, cropped
    R = TH + 2 * PAD                     # rows per halo tile
    n_rows = R * Wp                      # flattened rows per tile
    Hp = H_pad + 2 * PAD

    limit = vmem_limit_bytes or min(int(cap * 0.9),
                                    max(est(TH) + (16 << 20), 32 << 20))

    # ---- input: NCHW -> NHWC, halo/width/channel zero-pad, compute dtype -----
    # TODO(synk): keep the surrounding model NHWC end-to-end to drop the
    # boundary transposes (kept because the module interface is NCHW).
    x_nhwc = jnp.transpose(x_nchw, (0, 2, 3, 1))
    xp = jnp.pad(x_nhwc, ((0, 0),
                          (PAD, PAD + (H_pad - H)),
                          (PAD, Wp - W - PAD),
                          (0, Cin_p - Cin))).astype(cdt)
    xp = xp.reshape(B, Hp * Wp, Cin_p)   # free collapse -> 2-D DMA slices

    # ---- weights: pad + cast; 3x3 weights folded to fused-K (3, 3*Cin_p, N) --
    def pad_w1x1(w):
        return jnp.pad(w, ((0, Cin_p - Cin), (0, Cout_p - Cout))).astype(cdt)

    def pad_w3x3(w):
        wq = jnp.pad(w, ((0, 0), (0, 0), (0, Cin_p - Cin), (0, Cout_p - Cout)))
        return wq.reshape(3, 3 * Cin_p, Cout_p).astype(cdt)   # kx folded into K

    def pad_b(b):
        return jnp.pad(b, ((0, 0), (0, Cout_p - Cout))).astype(jnp.float32)

    w0p, w1c, w2c = pad_w1x1(w0), pad_w3x3(w1), pad_w3x3(w2)
    b0p, b1p, b2p = pad_b(b0), pad_b(b1), pad_b(b2)

    # ---- branch 3: GAP -> 1x1 -> relu, once per image, in the wrapper --------
    gap = jnp.mean(x_nchw.astype(jnp.float32), axis=(2, 3))           # (B, Cin)
    o3 = jax.nn.relu(jnp.dot(gap, w3.astype(jnp.float32),
                             precision=jax.lax.Precision.HIGHEST)
                     + b3.astype(jnp.float32))                        # (B, Cout)

    # ---- the kernel -----------------------------------------------------------
    def kernel(x_hbm, w0_ref, b0_ref, w1_ref, b1_ref, w2_ref, b2_ref,
               out_ref, xbuf_ref, dma_sem):
        b = pl.program_id(0)
        t = pl.program_id(1)
        nt = pl.num_programs(1)
        slot = jax.lax.rem(t, 2)

        def copy(tt, s):
            start = pl.multiple_of(tt * (TH * Wp), Wp)
            return pltpu.make_async_copy(
                x_hbm.at[b, pl.ds(start, n_rows)], xbuf_ref.at[s], dma_sem.at[s])

        # Double-buffered halo fetch: blocking fetch for the first tile of each
        # image, then always prefetch the next row tile of the same image.
        @pl.when(t == 0)
        def _():
            copy(t, slot).start()

        @pl.when(t + 1 < nt)
        def _():
            copy(t + 1, 1 - slot).start()

        copy(t, slot).wait()

        xt = xbuf_ref[slot]                               # (n_rows, Cin_p)
        base = xt if roll_native else xt.astype(jnp.float32)

        def shift_cols(s):
            # shifted[r] == base[r + s] (column offset s for every stored col).
            if s == 0:
                return base
            amt = (n_rows - s) % n_rows if roll_is_jnp else s
            return pltpu.roll(base, amt, axis=0)

        def rows(v, oy):
            # oy*Wp is a multiple of Wp (Wp % 8 == 0): tile-aligned slice.
            return v[oy * Wp:(oy + TH) * Wp]

        def as_lhs(v):
            return v if v.dtype == cdt else v.astype(cdt)

        def store(slab, acc, b_ref):
            # bias + relu in f32; store the lane-aligned slab, width W8 (x8).
            y = jnp.maximum(acc + b_ref[...], 0.0)
            y = y.reshape(TH, Wp, Cout_p)[:, :W8, :]
            out_ref[0, :, :, slab * Cout_p:(slab + 1) * Cout_p] = (
                y.astype(out_ref.dtype))

        x6 = shift_cols(PAD)     # centre columns, shared by all three branches

        # branch 0: 1x1 conv.  (M = TH*Wp includes Wp - W dead halo columns.)
        store(0, jnp.dot(as_lhs(rows(x6, PAD)), w0_ref[...],
                         preferred_element_type=jnp.float32), b0_ref)

        def dilated(slab, w_ref, b_ref, d, left, right):
            # Fused-K: concat the three column taps once per branch; each
            # dilated conv is 3 matmuls (K = 3*Cin_p) instead of 9, and the
            # accumulator is initialized from the first dot (no zeros + add).
            big = jnp.concatenate([left, x6, right], axis=-1)  # (n_rows, 3*Cin_p)
            acc = None
            for ky in range(3):
                part = jnp.dot(as_lhs(rows(big, PAD + (ky - 1) * d)), w_ref[ky],
                               preferred_element_type=jnp.float32)
                acc = part if acc is None else acc + part
            store(slab, acc, b_ref)

        # branch-local column shifts keep rolled-copy live ranges short.
        dilated(1, w1_ref, b1_ref, 3, shift_cols(PAD - 3), shift_cols(PAD + 3))
        dilated(2, w2_ref, b2_ref, 6, shift_cols(PAD - 6), shift_cols(PAD + 6))

    grid = (B, nT)
    flops = 2 * 19 * B * H_pad * W8 * Cin_p * Cout_p
    bytes_accessed = int(B * Hp * Wp * Cin_p * cdt_bytes
                         + 19 * Cin_p * Cout_p * cdt_bytes
                         + B * H_pad * W8 * 3 * Cout_p * out_bytes)

    out = pl.pallas_call(
        kernel,
        out_shape=jax.ShapeDtypeStruct((B, H_pad, W8, 3 * Cout_p), out_dtype),
        grid=grid,
        in_specs=[
            pl.BlockSpec(memory_space=pl.ANY),             # input stays in HBM
            pl.BlockSpec(w0p.shape, lambda b, t: (0, 0)),
            pl.BlockSpec(b0p.shape, lambda b, t: (0, 0)),
            pl.BlockSpec(w1c.shape, lambda b, t: (0, 0, 0)),
            pl.BlockSpec(b1p.shape, lambda b, t: (0, 0)),
            pl.BlockSpec(w2c.shape, lambda b, t: (0, 0, 0)),
            pl.BlockSpec(b2p.shape, lambda b, t: (0, 0)),
        ],
        out_specs=pl.BlockSpec((1, TH, W8, 3 * Cout_p), lambda b, t: (b, t, 0, 0)),
        scratch_shapes=[
            pltpu.VMEM((2, n_rows, Cin_p), cdt),           # double-buffered halo
            pltpu.SemaphoreType.DMA((2,)),
        ],
        compiler_params=pltpu.CompilerParams(
            # Row axis must stay sequential ("arbitrary") for the prefetch slot
            # parity; batch axis carries the v7x megacore split.
            dimension_semantics=("parallel", "arbitrary"),
            vmem_limit_bytes=limit),
        cost_estimate=pl.CostEstimate(flops=flops, transcendentals=0,
                                      bytes_accessed=bytes_accessed),
    )(xp, w0p, b0p, w1c, b1p, w2c, b2p)

    # ---- crop padding, append the broadcast GAP branch, return NCHW ----------
    out = out[:, :H, :W, :]
    slabs = [out[..., k * Cout_p:k * Cout_p + Cout] for k in range(3)]
    o3b = jnp.broadcast_to(o3.reshape(B, 1, 1, Cout), (B, H, W, Cout))
    y = jnp.concatenate(slabs + [o3b.astype(out_dtype)], axis=-1)
    return jnp.transpose(y, (0, 3, 1, 2))


def init_params(key, cin, cout):
    """Deterministic synthetic init matching the module's __init__:
    weight ~ N(0, sqrt(2/(k*k*out_channels))), bias = 0."""
    kernel_sizes = [1, 3, 3, 1]
    keys = jax.random.split(key, 4)
    params = []
    for i, k in enumerate(kernel_sizes):
        std = math.sqrt(2.0 / (k * k * cout))
        if k == 1:
            w = jax.random.normal(keys[i], (cin, cout), jnp.float32) * std
        else:
            w = jax.random.normal(keys[i], (3, 3, cin, cout), jnp.float32) * std
        b = jnp.zeros((1, cout), jnp.float32)
        params += [w, b]
    return tuple(params)


def aspp_ref(x_nchw, params):
    """Pure-JAX reference (lax conv) for correctness checks."""
    w0, b0, w1, b1, w2, b2, w3, b3 = params

    def conv(x, w_hwio, b, dil, pad):
        y = jax.lax.conv_general_dilated(
            x, w_hwio, window_strides=(1, 1),
            padding=((pad, pad), (pad, pad)),
            rhs_dilation=(dil, dil),
            dimension_numbers=("NCHW", "HWIO", "NCHW"))
        return jax.nn.relu(y + b.reshape(1, -1, 1, 1))

    w0_ = w0.reshape(1, 1, *w0.shape)
    w3_ = w3.reshape(1, 1, *w3.shape)
    avg = jnp.mean(x_nchw, axis=(2, 3), keepdims=True)
    o0 = conv(x_nchw, w0_, b0, 1, 0)
    o1 = conv(x_nchw, w1, b1, 3, 3)
    o2 = conv(x_nchw, w2, b2, 6, 6)
    o3 = jnp.broadcast_to(conv(avg, w3_, b3, 1, 0), o2.shape)
    return jnp.concatenate([o0, o1, o2, o3], axis=1)


if __name__ == "__main__":
    B, Cin, H, W, Cout = 2, 4, 16, 16, 8
    key = jax.random.PRNGKey(0)
    kx, kp = jax.random.split(key)
    x = jax.random.normal(kx, (B, Cin, H, W), jnp.float32)
    params = init_params(kp, Cin, Cout)

    ref = jax.block_until_ready(aspp_ref(x, params))

    # 1) f32 compute path: tight check; row_tile=8 -> grid (2, 2) exercises the
    #    halo-tiled, double-buffered multi-step path.
    out32 = jax.block_until_ready(
        aspp_forward(x, params, row_tile=8, compute_dtype=jnp.float32))
    assert out32.shape == (B, 4 * Cout, H, W), out32.shape
    err32 = float(jnp.max(jnp.abs(out32 - ref)))
    assert err32 < 1e-3, err32

    # 2) default bf16 compute path (production config): compare against a
    #    reference whose conv inputs/weights are bf16-quantized the same way.
    def q(a):
        return a.astype(jnp.bfloat16).astype(jnp.float32)
    w0, b0, w1, b1, w2, b2, w3, b3 = params
    ref_bf = jax.block_until_ready(
        aspp_ref(q(x), (q(w0), b0, q(w1), b1, q(w2), b2, w3, b3)))
    outbf = jax.block_until_ready(aspp_forward(x, params, row_tile=8))
    assert outbf.shape == (B, 4 * Cout, H, W), outbf.shape
    errbf = float(jnp.max(jnp.abs(outbf - ref_bf)))
    assert errbf < 5e-3, errbf

    print("KERNEL_OK")
</pallas_src>

<mosaic_0001>
module attributes {stable_mosaic.version = 11 : i64} {
  func.func @probe(%arg0: memref<32x128xi32, #tpu.memory_space<vmem>>, %arg1: memref<32x128xi32, #tpu.memory_space<vmem>>) attributes {dimension_semantics = [], scalar_prefetch = 0 : i64, scratch_operands = 0 : i64, tpu.core_type = #tpu.core_type<tc>} {
    %c0 = arith.constant 0 : index
    %c0_0 = arith.constant 0 : index
    %0 = vector.load %arg0[%c0, %c0_0] : memref<32x128xi32, #tpu.memory_space<vmem>>, vector<32x128xi32>
    %c3_i32 = arith.constant 3 : i32
    %1 = tpu.dynamic_rotate %0 by %c3_i32 dim 0 : vector<32x128xi32>, i32 -> vector<32x128xi32>
    %c0_1 = arith.constant 0 : index
    %c0_2 = arith.constant 0 : index
    %2 = vector.load %arg1[%c0_1, %c0_2] : memref<32x128xi32, #tpu.memory_space<vmem>>, vector<32x128xi32>
    tpu.vector_store %arg1[%c0_1, %c0_2], %1 {strides = array<i32>} : memref<32x128xi32, #tpu.memory_space<vmem>>, vector<32x128xi32>,
    return
  }
}

module attributes {stable_mosaic.version = 11 : i64} {
  func.func @kernel(%arg0: i32, %arg1: i32, %arg2: memref<2x896x128xf32, #tpu.memory_space<any>>, %arg3: memref<128x128xf32, #tpu.memory_space<vmem>>, %arg4: memref<1x128xf32, #tpu.memory_space<vmem>>, %arg5: memref<3x384x128xf32, #tpu.memory_space<vmem>>, %arg6: memref<1x128xf32, #tpu.memory_space<vmem>>, %arg7: memref<3x384x128xf32, #tpu.memory_space<vmem>>, %arg8: memref<1x128xf32, #tpu.memory_space<vmem>>, %arg9: memref<1x8x16x384xf32, #tpu.memory_space<vmem>>, %arg10: memref<2x640x128xf32, #tpu.memory_space<vmem>>, %arg11: memref<2x!tpu.dma_semaphore, #tpu.memory_space<semaphore_mem>>) attributes {dimension_semantics = [#tpu.dimension_semantics<parallel>, #tpu.dimension_semantics<arbitrary>], iteration_bounds = array<i64: 2, 2>, scalar_prefetch = 0 : i64, scratch_operands = 2 : i64, tpu.core_type = #tpu.core_type<tc>, window_params = [{}, {pipeline_mode = #tpu.pipeline_mode<synchronous>, transform_indices = @transform_1, window_bounds = array<i64: 128, 128>}, {pipeline_mode = #tpu.pipeline_mode<synchronous>, transform_indices = @transform_2, window_bounds = array<i64: 1, 128>}, {pipeline_mode = #tpu.pipeline_mode<synchronous>, transform_indices = @transform_3, window_bounds = array<i64: 3, 384, 128>}, {pipeline_mode = #tpu.pipeline_mode<synchronous>, transform_indices = @transform_4, window_bounds = array<i64: 1, 128>}, {pipeline_mode = #tpu.pipeline_mode<synchronous>, transform_indices = @transform_5, window_bounds = array<i64: 3, 384, 128>}, {pipeline_mode = #tpu.pipeline_mode<synchronous>, transform_indices = @transform_6, window_bounds = array<i64: 1, 128>}, {transform_indices = @transform_7, window_bounds = array<i64: 1, 8, 16, 384>}]} {
    %c2_i32 = arith.constant 2 : i32
    %0 = arith.remsi %arg1, %c2_i32 : i32
    %c0_i32 = arith.constant 0 : i32
    %1 = arith.cmpi eq, %arg1, %c0_i32 : i32
    %2 = arith.extui %1 : i1 to i32
    %c0_i32_0 = arith.constant 0 : i32
    %3 = arith.cmpi ne, %2, %c0_i32_0 : i32
    scf.if %3 {
      %c256_i32_50 = arith.constant 256 : i32
      %86 = arith.muli %arg1, %c256_i32_50 : i32
      %87 = tpu.assume_multiple %86, 32 : i32
      %c0_i32_51 = arith.constant 0 : i32
      %88 = tpu.memref_slice %arg2[%arg0, %87, %c0_i32_51] : memref<2x896x128xf32, #tpu.memory_space<any>> -> memref<1x640x128xf32, #tpu.memory_space<any>>
      %89 = tpu.memref_squeeze %88 : memref<1x640x128xf32, #tpu.memory_space<any>> -> memref<640x128xf32, #tpu.memory_space<any>>
      %c0_i32_52 = arith.constant 0 : i32
      %c0_i32_53 = arith.constant 0 : i32
      %90 = tpu.memref_slice %arg10[%0, %c0_i32_52, %c0_i32_53] : memref<2x640x128xf32, #tpu.memory_space<vmem>> -> memref<1x640x128xf32, #tpu.memory_space<vmem>>
      %91 = tpu.memref_squeeze %90 : memref<1x640x128xf32, #tpu.memory_space<vmem>> -> memref<640x128xf32, #tpu.memory_space<vmem>>
      %92 = tpu.memref_slice %arg11[%0] : memref<2x!tpu.dma_semaphore, #tpu.memory_space<semaphore_mem>> -> memref<1x!tpu.dma_semaphore, #tpu.memory_space<semaphore_mem>>
      %93 = tpu.memref_squeeze %92 : memref<1x!tpu.dma_semaphore, #tpu.memory_space<semaphore_mem>> -> memref<!tpu.dma_semaphore, #tpu.memory_space<semaphore_mem>>
      tpu.enqueue_dma source(%89 : memref<640x128xf32, #tpu.memory_space<any>>) target(%91 : memref<640x128xf32, #tpu.memory_space<vmem>>) target_semaphore(%93 : memref<!tpu.dma_semaphore, #tpu.memory_space<semaphore_mem>>)
    } else {
    }
    %c1_i32 = arith.constant 1 : i32
    %4 = arith.addi %arg1, %c1_i32 : i32
    %c2_i32_1 = arith.constant 2 : i32
    %5 = arith.cmpi slt, %4, %c2_i32_1 : i32
    %6 = arith.extui %5 : i1 to i32
    %c0_i32_2 = arith.constant 0 : i32
    %7 = arith.cmpi ne, %6, %c0_i32_2 : i32
    scf.if %7 {
      %c1_i32_50 = arith.constant 1 : i32
      %86 = arith.addi %arg1, %c1_i32_50 : i32
      %c1_i32_51 = arith.constant 1 : i32
      %87 = arith.subi %c1_i32_51, %0 : i32
      %c256_i32_52 = arith.constant 256 : i32
      %88 = arith.muli %86, %c256_i32_52 : i32
      %89 = tpu.assume_multiple %88, 32 : i32
      %c0_i32_53 = arith.constant 0 : i32
      %90 = tpu.memref_slice %arg2[%arg0, %89, %c0_i32_53] : memref<2x896x128xf32, #tpu.memory_space<any>> -> memref<1x640x128xf32, #tpu.memory_space<any>>
      %91 = tpu.memref_squeeze %90 : memref<1x640x128xf32, #tpu.memory_space<any>> -> memref<640x128xf32, #tpu.memory_space<any>>
      %c0_i32_54 = arith.constant 0 : i32
      %c0_i32_55 = arith.constant 0 : i32
      %92 = tpu.memref_slice %arg10[%87, %c0_i32_54, %c0_i32_55] : memref<2x640x128xf32, #tpu.memory_space<vmem>> -> memref<1x640x128xf32, #tpu.memory_space<vmem>>
      %93 = tpu.memref_squeeze %92 : memref<1x640x128xf32, #tpu.memory_space<vmem>> -> memref<640x128xf32, #tpu.memory_space<vmem>>
      %94 = tpu.memref_slice %arg11[%87] : memref<2x!tpu.dma_semaphore, #tpu.memory_space<semaphore_mem>> -> memref<1x!tpu.dma_semaphore, #tpu.memory_space<semaphore_mem>>
      %95 = tpu.memref_squeeze %94 : memref<1x!tpu.dma_semaphore, #tpu.memory_space<semaphore_mem>> -> memref<!tpu.dma_semaphore, #tpu.memory_space<semaphore_mem>>
      tpu.enqueue_dma source(%91 : memref<640x128xf32, #tpu.memory_space<any>>) target(%93 : memref<640x128xf32, #tpu.memory_space<vmem>>) target_semaphore(%95 : memref<!tpu.dma_semaphore, #tpu.memory_space<semaphore_mem>>)
    } else {
    }
    %c256_i32 = arith.constant 256 : i32
    %8 = arith.muli %arg1, %c256_i32 : i32
    %9 = tpu.assume_multiple %8, 32 : i32
    %c0_i32_3 = arith.constant 0 : i32
    %10 = tpu.memref_slice %arg2[%arg0, %9, %c0_i32_3] : memref<2x896x128xf32, #tpu.memory_space<any>> -> memref<1x640x128xf32, #tpu.memory_space<any>>
    %11 = tpu.memref_squeeze %10 : memref<1x640x128xf32, #tpu.memory_space<any>> -> memref<640x128xf32, #tpu.memory_space<any>>
    %c0_i32_4 = arith.constant 0 : i32
    %c0_i32_5 = arith.constant 0 : i32
    %12 = tpu.memref_slice %arg10[%0, %c0_i32_4, %c0_i32_5] : memref<2x640x128xf32, #tpu.memory_space<vmem>> -> memref<1x640x128xf32, #tpu.memory_space<vmem>>
    %13 = tpu.memref_squeeze %12 : memref<1x640x128xf32, #tpu.memory_space<vmem>> -> memref<640x128xf32, #tpu.memory_space<vmem>>
    %14 = tpu.memref_slice %arg11[%0] : memref<2x!tpu.dma_semaphore, #tpu.memory_space<semaphore_mem>> -> memref<1x!tpu.dma_semaphore, #tpu.memory_space<semaphore_mem>>
    %15 = tpu.memref_squeeze %14 : memref<1x!tpu.dma_semaphore, #tpu.memory_space<semaphore_mem>> -> memref<!tpu.dma_semaphore, #tpu.memory_space<semaphore_mem>>
    tpu.wait_dma2 semaphore(%15 : memref<!tpu.dma_semaphore, #tpu.memory_space<semaphore_mem>>) src(%11 : memref<640x128xf32, #tpu.memory_space<any>>) dst(%13 : memref<640x128xf32, #tpu.memory_space<vmem>>)
    %16 = arith.index_cast %0 : i32 to index
    %c0 = arith.constant 0 : index
    %c0_6 = arith.constant 0 : index
    %17 = vector.load %arg10[%16, %c0, %c0_6] : memref<2x640x128xf32, #tpu.memory_space<vmem>>, vector<1x640x128xf32>
    %18 = vector.shape_cast %17 : vector<1x640x128xf32> to vector<640x128xf32>
    %c634_i32 = arith.constant 634 : i32
    %19 = tpu.dynamic_rotate %18 by %c634_i32 dim 0 : vector<640x128xf32>, i32 -> vector<640x128xf32>
    %20 = vector.extract_strided_slice %19 {offsets = [192, 0], sizes = [256, 128], strides = [1, 1]} : vector<640x128xf32> to vector<256x128xf32>
    %c0_7 = arith.constant 0 : index
    %c0_8 = arith.constant 0 : index
    %21 = vector.load %arg3[%c0_7, %c0_8] : memref<128x128xf32, #tpu.memory_space<vmem>>, vector<128x128xf32>
    %cst = arith.constant dense<0.000000e+00> : vector<256x128xf32>
    %22 = tpu.matmul %20, %21, %cst {dimension_numbers = #tpu.dot_dimension_numbers<[1], [0], [0], [1], [0, 0, 1, 1], [], []>} : vector<256x128xf32>, vector<128x128xf32>, vector<256x128xf32> -> vector<256x128xf32>
    %c0_9 = arith.constant 0 : index
    %c0_10 = arith.constant 0 : index
    %23 = vector.load %arg4[%c0_9, %c0_10] : memref<1x128xf32, #tpu.memory_space<vmem>>, vector<1x128xf32>
    %24 = vector.broadcast %23 : vector<1x128xf32> to vector<256x128xf32>
    %25 = arith.addf %22, %24 : vector<256x128xf32>
    %cst_11 = arith.constant 0.000000e+00 : f32
    %26 = vector.broadcast %cst_11 : f32 to vector<256x128xf32>
    %27 = arith.maximumf %25, %26 : vector<256x128xf32>
    %28 = vector.shape_cast %27 : vector<256x128xf32> to vector<8x32x128xf32>
    %29 = vector.extract_strided_slice %28 {offsets = [0, 0, 0], sizes = [8, 16, 128], strides = [1, 1, 1]} : vector<8x32x128xf32> to vector<8x16x128xf32>
    %c0_12 = arith.constant 0 : index
    %c0_13 = arith.constant 0 : index
    %c0_14 = arith.constant 0 : index
    %c0_15 = arith.constant 0 : index
    %30 = vector.load %arg9[%c0_12, %c0_13, %c0_14, %c0_15] : memref<1x8x16x384xf32, #tpu.memory_space<vmem>>, vector<1x8x16x128xf32>
    %31 = vector.shape_cast %30 : vector<1x8x16x128xf32> to vector<8x16x128xf32>
    %32 = vector.shape_cast %29 : vector<8x16x128xf32> to vector<1x8x16x128xf32>
    tpu.vector_store %arg9[%c0_12, %c0_13, %c0_14, %c0_15], %32 {strides = array<i32>} : memref<1x8x16x384xf32, #tpu.memory_space<vmem>>, vector<1x8x16x128xf32>,
    %c637_i32 = arith.constant 637 : i32
    %33 = tpu.dynamic_rotate %18 by %c637_i32 dim 0 : vector<640x128xf32>, i32 -> vector<640x128xf32>
    %c631_i32 = arith.constant 631 : i32
    %34 = tpu.dynamic_rotate %18 by %c631_i32 dim 0 : vector<640x128xf32>, i32 -> vector<640x128xf32>
    %35 = tpu.concatenate %33, %19, %34 in 1 : vector<640x128xf32>, vector<640x128xf32>, vector<640x128xf32> -> vector<640x384xf32>
    %36 = vector.extract_strided_slice %35 {offsets = [96, 0], sizes = [256, 384], strides = [1, 1]} : vector<640x384xf32> to vector<256x384xf32>
    %c0_16 = arith.constant 0 : index
    %c0_17 = arith.constant 0 : index
    %c0_18 = arith.constant 0 : index
    %37 = vector.load %arg5[%c0_16, %c0_17, %c0_18] : memref<3x384x128xf32, #tpu.memory_space<vmem>>, vector<1x384x128xf32>
    %38 = vector.shape_cast %37 : vector<1x384x128xf32> to vector<384x128xf32>
    %cst_19 = arith.constant dense<0.000000e+00> : vector<256x128xf32>
    %39 = tpu.matmul %36, %38, %cst_19 {dimension_numbers = #tpu.dot_dimension_numbers<[1], [0], [0], [1], [0, 0, 1, 1], [], []>} : vector<256x384xf32>, vector<384x128xf32>, vector<256x128xf32> -> vector<256x128xf32>
    %40 = vector.extract_strided_slice %35 {offsets = [192, 0], sizes = [256, 384], strides = [1, 1]} : vector<640x384xf32> to vector<256x384xf32>
    %c1 = arith.constant 1 : index
    %c0_20 = arith.constant 0 : index
    %c0_21 = arith.constant 0 : index
    %41 = vector.load %arg5[%c1, %c0_20, %c0_21] : memref<3x384x128xf32, #tpu.memory_space<vmem>>, vector<1x384x128xf32>
    %42 = vector.shape_cast %41 : vector<1x384x128xf32> to vector<384x128xf32>
    %cst_22 = arith.constant dense<0.000000e+00> : vector<256x128xf32>
    %43 = tpu.matmul %40, %42, %cst_22 {dimension_numbers = #tpu.dot_dimension_numbers<[1], [0], [0], [1], [0, 0, 1, 1], [], []>} : vector<256x384xf32>, vector<384x128xf32>, vector<256x128xf32> -> vector<256x128xf32>
    %44 = arith.addf %39, %43 : vector<256x128xf32>
    %45 = vector.extract_strided_slice %35 {offsets = [288, 0], sizes = [256, 384], strides = [1, 1]} : vector<640x384xf32> to vector<256x384xf32>
    %c2 = arith.constant 2 : index
    %c0_23 = arith.constant 0 : index
    %c0_24 = arith.constant 0 : index
    %46 = vector.load %arg5[%c2, %c0_23, %c0_24] : memref<3x384x128xf32, #tpu.memory_space<vmem>>, vector<1x384x128xf32>
    %47 = vector.shape_cast %46 : vector<1x384x128xf32> to vector<384x128xf32>
    %cst_25 = arith.constant dense<0.000000e+00> : vector<256x128xf32>
    %48 = tpu.matmul %45, %47, %cst_25 {dimension_numbers = #tpu.dot_dimension_numbers<[1], [0], [0], [1], [0, 0, 1, 1], [], []>} : vector<256x384xf32>, vector<384x128xf32>, vector<256x128xf32> -> vector<256x128xf32>
    %49 = arith.addf %44, %48 : vector<256x128xf32>
    %c0_26 = arith.constant 0 : index
    %c0_27 = arith.constant 0 : index
    %50 = vector.load %arg6[%c0_26, %c0_27] : memref<1x128xf32, #tpu.memory_space<vmem>>, vector<1x128xf32>
    %51 = vector.broadcast %50 : vector<1x128xf32> to vector<256x128xf32>
    %52 = arith.addf %49, %51 : vector<256x128xf32>
    %cst_28 = arith.constant 0.000000e+00 : f32
    %53 = vector.broadcast %cst_28 : f32 to vector<256x128xf32>
    %54 = arith.maximumf %52, %53 : vector<256x128xf32>
    %55 = vector.shape_cast %54 : vector<256x128xf32> to vector<8x32x128xf32>
    %56 = vector.extract_strided_slice %55 {offsets = [0, 0, 0], sizes = [8, 16, 128], strides = [1, 1, 1]} : vector<8x32x128xf32> to vector<8x16x128xf32>
    %c0_29 = arith.constant 0 : index
    %c0_30 = arith.constant 0 : index
    %c0_31 = arith.constant 0 : index
    %c128 = arith.constant 128 : index
    %57 = vector.load %arg9[%c0_29, %c0_30, %c0_31, %c128] : memref<1x8x16x384xf32, #tpu.memory_space<vmem>>, vector<1x8x16x128xf32>
    %58 = vector.shape_cast %57 : vector<1x8x16x128xf32> to vector<8x16x128xf32>
    %59 = vector.shape_cast %56 : vector<8x16x128xf32> to vector<1x8x16x128xf32>
    tpu.vector_store %arg9[%c0_29, %c0_30, %c0_31, %c128], %59 {strides = array<i32>} : memref<1x8x16x384xf32, #tpu.memory_space<vmem>>, vector<1x8x16x128xf32>,
    %c628_i32 = arith.constant 628 : i32
    %60 = tpu.dynamic_rotate %18 by %c628_i32 dim 0 : vector<640x128xf32>, i32 -> vector<640x128xf32>
    %61 = tpu.concatenate %18, %19, %60 in 1 : vector<640x128xf32>, vector<640x128xf32>, vector<640x128xf32> -> vector<640x384xf32>
    %62 = vector.extract_strided_slice %61 {offsets = [0, 0], sizes = [256, 384], strides = [1, 1]} : vector<640x384xf32> to vector<256x384xf32>
    %c0_32 = arith.constant 0 : index
    %c0_33 = arith.constant 0 : index
    %c0_34 = arith.constant 0 : index
    %63 = vector.load %arg7[%c0_32, %c0_33, %c0_34] : memref<3x384x128xf32, #tpu.memory_space<vmem>>, vector<1x384x128xf32>
    %64 = vector.shape_cast %63 : vector<1x384x128xf32> to vector<384x128xf32>
    %cst_35 = arith.constant dense<0.000000e+00> : vector<256x128xf32>
    %65 = tpu.matmul %62, %64, %cst_35 {dimension_numbers = #tpu.dot_dimension_numbers<[1], [0], [0], [1], [0, 0, 1, 1], [], []>} : vector<256x384xf32>, vector<384x128xf32>, vector<256x128xf32> -> vector<256x128xf32>
    %66 = vector.extract_strided_slice %61 {offsets = [192, 0], sizes = [256, 384], strides = [1, 1]} : vector<640x384xf32> to vector<256x384xf32>
    %c1_36 = arith.constant 1 : index
    %c0_37 = arith.constant 0 : index
    %c0_38 = arith.constant 0 : index
    %67 = vector.load %arg7[%c1_36, %c0_37, %c0_38] : memref<3x384x128xf32, #tpu.memory_space<vmem>>, vector<1x384x128xf32>
    %68 = vector.shape_cast %67 : vector<1x384x128xf32> to vector<384x128xf32>
    %cst_39 = arith.constant dense<0.000000e+00> : vector<256x128xf32>
    %69 = tpu.matmul %66, %68, %cst_39 {dimension_numbers = #tpu.dot_dimension_numbers<[1], [0], [0], [1], [0, 0, 1, 1], [], []>} : vector<256x384xf32>, vector<384x128xf32>, vector<256x128xf32> -> vector<256x128xf32>
    %70 = arith.addf %65, %69 : vector<256x128xf32>
    %71 = vector.extract_strided_slice %61 {offsets = [384, 0], sizes = [256, 384], strides = [1, 1]} : vector<640x384xf32> to vector<256x384xf32>
    %c2_40 = arith.constant 2 : index
    %c0_41 = arith.constant 0 : index
    %c0_42 = arith.constant 0 : index
    %72 = vector.load %arg7[%c2_40, %c0_41, %c0_42] : memref<3x384x128xf32, #tpu.memory_space<vmem>>, vector<1x384x128xf32>
    %73 = vector.shape_cast %72 : vector<1x384x128xf32> to vector<384x128xf32>
    %cst_43 = arith.constant dense<0.000000e+00> : vector<256x128xf32>
    %74 = tpu.matmul %71, %73, %cst_43 {dimension_numbers = #tpu.dot_dimension_numbers<[1], [0], [0], [1], [0, 0, 1, 1], [], []>} : vector<256x384xf32>, vector<384x128xf32>, vector<256x128xf32> -> vector<256x128xf32>
    %75 = arith.addf %70, %74 : vector<256x128xf32>
    %c0_44 = arith.constant 0 : index
    %c0_45 = arith.constant 0 : index
    %76 = vector.load %arg8[%c0_44, %c0_45] : memref<1x128xf32, #tpu.memory_space<vmem>>, vector<1x128xf32>
    %77 = vector.broadcast %76 : vector<1x128xf32> to vector<256x128xf32>
    %78 = arith.addf %75, %77 : vector<256x128xf32>
    %cst_46 = arith.constant 0.000000e+00 : f32
    %79 = vector.broadcast %cst_46 : f32 to vector<256x128xf32>
    %80 = arith.maximumf %78, %79 : vector<256x128xf32>
    %81 = vector.shape_cast %80 : vector<256x128xf32> to vector<8x32x128xf32>
    %82 = vector.extract_strided_slice %81 {offsets = [0, 0, 0], sizes = [8, 16, 128], strides = [1, 1, 1]} : vector<8x32x128xf32> to vector<8x16x128xf32>
    %c0_47 = arith.constant 0 : index
    %c0_48 = arith.constant 0 : index
    %c0_49 = arith.constant 0 : index
    %c256 = arith.constant 256 : index
    %83 = vector.load %arg9[%c0_47, %c0_48, %c0_49, %c256] : memref<1x8x16x384xf32, #tpu.memory_space<vmem>>, vector<1x8x16x128xf32>
    %84 = vector.shape_cast %83 : vector<1x8x16x128xf32> to vector<8x16x128xf32>
    %85 = vector.shape_cast %82 : vector<8x16x128xf32> to vector<1x8x16x128xf32>
    tpu.vector_store %arg9[%c0_47, %c0_48, %c0_49, %c256], %85 {strides = array<i32>} : memref<1x8x16x384xf32, #tpu.memory_space<vmem>>, vector<1x8x16x128xf32>,
    return
  }
  func.func @transform_1(%arg0: i32, %arg1: i32) -> (i32, i32) {
    %c0_i32 = arith.constant 0 : i32
    %c0_i32_0 = arith.constant 0 : i32
    %c0_i32_1 = arith.constant 0 : i32
    return %c0_i32, %c0_i32_0 : i32, i32
  }
  func.func @transform_2(%arg0: i32, %arg1: i32) -> (i32, i32) {
    %c0_i32 = arith.constant 0 : i32
    %c0_i32_0 = arith.constant 0 : i32
    %c0_i32_1 = arith.constant 0 : i32
    return %c0_i32, %c0_i32_0 : i32, i32
  }
  func.func @transform_3(%arg0: i32, %arg1: i32) -> (i32, i32, i32) {
    %c0_i32 = arith.constant 0 : i32
    %c0_i32_0 = arith.constant 0 : i32
    %c0_i32_1 = arith.constant 0 : i32
    %c0_i32_2 = arith.constant 0 : i32
    return %c0_i32, %c0_i32_0, %c0_i32_1 : i32, i32, i32
  }
  func.func @transform_4(%arg0: i32, %arg1: i32) -> (i32, i32) {
    %c0_i32 = arith.constant 0 : i32
    %c0_i32_0 = arith.constant 0 : i32
    %c0_i32_1 = arith.constant 0 : i32
    return %c0_i32, %c0_i32_0 : i32, i32
  }
  func.func @transform_5(%arg0: i32, %arg1: i32) -> (i32, i32, i32) {
    %c0_i32 = arith.constant 0 : i32
    %c0_i32_0 = arith.constant 0 : i32
    %c0_i32_1 = arith.constant 0 : i32
    %c0_i32_2 = arith.constant 0 : i32
    return %c0_i32, %c0_i32_0, %c0_i32_1 : i32, i32, i32
  }
  func.func @transform_6(%arg0: i32, %arg1: i32) -> (i32, i32) {
    %c0_i32 = arith.constant 0 : i32
    %c0_i32_0 = arith.constant 0 : i32
    %c0_i32_1 = arith.constant 0 : i32
    return %c0_i32, %c0_i32_0 : i32, i32
  }
  func.func @transform_7(%arg0: i32, %arg1: i32) -> (i32, i32, i32, i32) {
    %c0_i32 = arith.constant 0 : i32
    %c0_i32_0 = arith.constant 0 : i32
    %c0_i32_1 = arith.constant 0 : i32
    return %arg0, %arg1, %c0_i32, %c0_i32_0 : i32, i32, i32, i32
  }
}

</mosaic_0001>

<llo_original>
// kernel: tpu_custom_call.1
$region0: #{tpu_custom_call.1}
  #allocation0 [shape = 'u32[]', space=smem, size = 0x4, offset = 0x4, fixed_abs, tag = 'smem constant byte address 0x4 - core index']
  #allocation1 [shape = 'u32[144,128]{1,0:T(1,128)}', space=vmem, size = 0x12000, scoped, tag = 'internal scratch']
  %s0 = inlined_call_operand.hbm [shape: s32[32,128], index: 0, kind: input, shape index: {}]
  %s1 = inlined_call_operand.hbm [shape: s32[32,128], index: 1, kind: output, shape index: {}]
  %s2 = sld [smem:[#allocation0]]
  $region18: #{tpu_custom_call.1} parent=0
    _
  %s4 = ssub.s32 1, %s2
  %s5 = scalar_select 0, %s4, %s2
  $region1: #{tpu_custom_call.1} parent=0
    #allocation2 [shape = 'u8[16384]{0}', space=vmem, size = 0x4000, scoped, tag = 'input window, operand 0, single buffered']
    #allocation3 [shape = 's32[1]{0}', space=sflag, size = 0x4, scoped, tag = 'scoped memory for tpu_custom_call.1']
    #allocation4 [shape = 's32[1]{0}', space=sflag, size = 0x4, scoped, tag = 'scoped memory for tpu_custom_call.1']
    #allocation5 [shape = 'u8[16384]{0}', space=vmem, size = 0x4000, scoped, tag = 'output window, operand 0, single buffered']
    %6 = vsyncpa [#allocation3], 0
    %7 = vsyncpa [#allocation4], 0
    // Predicated region
    $region2: #{tpu_custom_call.1} parent=1 // pred_check
      _
    $region3: #{tpu_custom_call.1} parent=1 // pred_check_branch
      %9 = sbr.rel (0) target = $region5
    $region4: #{tpu_custom_call.1} parent=1 // pred_region
      %s11 = ssub.s32 512, 512
      %12 = vsyncadd [#allocation3], %s11
      %s13 = sshll.u32 [#allocation2], 4
      %s14 = int_to_ptr.vmem [resolvable:$true] %s13
      %19 = dma.hbm_to_vmem [thread:$0]  %s0, 512, %s14, [#allocation3], 128, 128, 8
    $region5: #{tpu_custom_call.1} parent=1 // pred_fallthru
      _
    // Predicated region
    $region6: #{tpu_custom_call.1} parent=1 // pred_check
      _
    $region7: #{tpu_custom_call.1} parent=1 // pred_check_branch
      %21 = sbr.rel (0) target = $region9
    $region8: #{tpu_custom_call.1} parent=1 // pred_region
      %22 = dma.done [#allocation3], 512
    $region9: #{tpu_custom_call.1} parent=1 // pred_fallthru
      _
    %v23 = vld [vmem:[#allocation2] sm:$0xff]
    %v24 = vld [vmem:[#allocation2 + $0x8] sm:$0xff]
    %v25 = vld [vmem:[#allocation2 + $0x10] sm:$0xff]
    %v26 = vld [vmem:[#allocation2 + $0x18] sm:$0xff]
    %v27 = vrot.slane %v23, 5
    %v28 = vrot.slane %v24, 5
    %v29 = vrot.slane %v25, 5
    %v30 = vrot.slane %v26, 5
    %v31 = vlaneseq
    %v32 = vshrl.u32 %v31, 7
    %vm33 = vcmp.lt.s32.totalorder %v32, 3
    %v34 = vsel %vm33, %v29, %v30
    %v35 = vsel %vm33, %v28, %v29
    %v36 = vsel %vm33, %v27, %v28
    %v37 = vsel %vm33, %v30, %v27
    %38 = vst [vmem:[#allocation5] sm:$0xff] %v37
    %39 = vst [vmem:[#allocation5 + $0x8] sm:$0xff] %v36
    %40 = vst [vmem:[#allocation5 + $0x10] sm:$0xff] %v35
    %41 = vst [vmem:[#allocation5 + $0x18] sm:$0xff] %v34
    // Predicated region
    $region10: #{tpu_custom_call.1} parent=1 // pred_check
      _
    $region11: #{tpu_custom_call.1} parent=1 // pred_check_branch
      %43 = sbr.rel (0) target = $region13
    $region12: #{tpu_custom_call.1} parent=1 // pred_region
      %s45 = ssub.s32 512, 512
      %46 = vsyncadd [#allocation4], %s45
      %s47 = sshll.u32 [#allocation5], 4
      %s48 = int_to_ptr.vmem [resolvable:$true] %s47
      %53 = dma.vmem_to_hbm [thread:$0]  %s48, 512, %s1, [#allocation4], 128, 128, 8
    $region13: #{tpu_custom_call.1} parent=1 // pred_fallthru
      _
    // Predicated region
    $region14: #{tpu_custom_call.1} parent=1 // pred_check
      _
    $region15: #{tpu_custom_call.1} parent=1 // pred_check_branch
      %55 = sbr.rel (0) target = $region17
    $region16: #{tpu_custom_call.1} parent=1 // pred_region
      %56 = dma.done [#allocation4], 512
    $region17: #{tpu_custom_call.1} parent=1 // pred_fallthru
      _
    %57 = vsyncpa [#allocation3], 1
    %58 = vsyncpa [#allocation4], 1

// kernel: tpu_custom_call.1
$region0: #{tpu_custom_call.1}
  #allocation0 [shape = 'u32[]', space=smem, size = 0x4, offset = 0x4, fixed_abs, tag = 'smem constant byte address 0x4 - core index']
  #allocation1 [shape = 'u32[144,128]{1,0:T(1,128)}', space=vmem, size = 0x12000, scoped, tag = 'internal scratch']
  #allocation2 [shape = 'f32[2,640,128]{2,1,0:T(8,128)}', space=vmem, size = 0xa0000, scoped, tag = 'scratch operand']
  #allocation3 [shape = 's32[2]{0}', space=sflag, size = 0x8, scoped, tag = 'scratch operand']
  #allocation11 [shape = 's32[]', space=sflag, size = 0x4, offset = 0, fixed_abs, tag = 'sflag constant byte address 0x0 - dummy sync flag']
  #allocation12 [shape = 's32[]', space=sflag, size = 0x4, offset = 0, fixed_abs, tag = 'sflag constant byte address 0x0 - dummy sync flag']
  #allocation13 [shape = 'u32[]', space=smem, size = 0x4, offset = 0x44, fixed_abs, tag = 'smem constant byte address 0x44 - assertion arg 0']
  #allocation14 [shape = 'u32[]', space=smem, size = 0x4, offset = 0x48, fixed_abs, tag = 'smem constant byte address 0x48 - assertion arg 1']
  #allocation15 [shape = 's32[]', space=sflag, size = 0x4, offset = 0, fixed_abs, tag = 'sflag constant byte address 0x0 - dummy sync flag']
  #allocation16 [shape = 's32[]', space=sflag, size = 0x4, offset = 0, fixed_abs, tag = 'sflag constant byte address 0x0 - dummy sync flag']
  %s0 = inlined_call_operand.hbm [shape: f32[2,896,128], index: 0, kind: input, shape index: {}]
  %s1 = inlined_call_operand.hbm [shape: f32[128,128], index: 1, kind: input, shape index: {}]
  %s2 = inlined_call_operand.vmem [shape: f32[1,128], index: 2, kind: input, shape index: {}]
  %s3 = inlined_call_operand.hbm [shape: f32[3,384,128], index: 3, kind: input, shape index: {}]
  %s4 = inlined_call_operand.vmem [shape: f32[1,128], index: 4, kind: input, shape index: {}]
  %s5 = inlined_call_operand.hbm [shape: f32[3,384,128], index: 5, kind: input, shape index: {}]
  %s6 = inlined_call_operand.vmem [shape: f32[1,128], index: 6, kind: input, shape index: {}]
  %s7 = inlined_call_operand.hbm [shape: f32[2,16,16,384], index: 7, kind: output, shape index: {}]
  %s8 = sld [smem:[#allocation0]]
  $region85: #{tpu_custom_call.1} parent=0
    _
  %s10 = ssub.s32 1, %s8
  %s11 = scalar_select 0, %s10, %s8
  $region1: #{tpu_custom_call.1} parent=0
    #allocation4 [shape = 'u8[65536]{0}', space=vmem, size = 0x10000, scoped, tag = 'input window, operand 1, single buffered']
    #allocation5 [shape = 's32[2]{0}', space=sflag, size = 0x8, scoped, tag = 'scoped memory for tpu_custom_call.1']
    #allocation6 [shape = 's32[2]{0}', space=sflag, size = 0x8, scoped, tag = 'scoped memory for tpu_custom_call.1']
    #allocation7 [shape = 'u8[589824]{0}', space=vmem, size = 0x90000, scoped, tag = 'input window, operand 3, single buffered']
    #allocation8 [shape = 's32[1]{0}', space=sflag, size = 0x4, scoped, tag = 'scoped memory for tpu_custom_call.1']
    #allocation9 [shape = 'u8[589824]{0}', space=vmem, size = 0x90000, scoped, tag = 'input window, operand 5, single buffered']
    #allocation10 [shape = 'u8[393216]{0}', space=vmem, size = 0x60000, scoped, tag = 'output window, operand 0']
    %12 = vsyncpa [#allocation5], 0
    %13 = vsyncpa [#allocation8], 0
    %14 = vsyncpa [#allocation6], 0
    %s15 = scalar_lea.sflag [#allocation6], 1
    %16 = vsyncpa %s15, 0
    loop: start=0, step=1, limit=6
    $region2: #{tpu_custom_call.1} parent=1 // loop_pre_header
      _
    $region3: #{tpu_custom_call.1} parent=1 // loop_header
      %s18 = sphi 0, %s22
      %p19 = scmp.ge.s32.totalorder %s18, 6
      %s25 = sphi 0, %s37
      %s26 = sphi 0, %s33
      %s27 = sphi 0, %s25
      %s28 = sphi 0, %s26
      %s29 = sphi 0, %s27
      %s30 = sphi 0, %s28
      %s38 = sphi 0, %s38
      %s40 = sphi 0, %s38
      %s41 = sphi 0, %s40
      %s55 = sphi 0, %s41
      %s59 = sphi 0, %s59
      %s61 = sphi 0, %s59
      %s62 = sphi 0, %s61
      %s76 = sphi 0, %s62
      %s80 = sphi 0, %s80
      %s82 = sphi 0, %s80
      %s83 = sphi 0, %s82
      %s97 = sphi 0, %s83
      %s101 = sphi 0, %s101
      %s103 = sphi 0, %s101
      %s104 = sphi 0, %s103
      %s118 = sphi 0, %s104
      %s122 = sphi 0, %s122
      %s124 = sphi 0, %s122
      %s125 = sphi 0, %s124
      %s139 = sphi 0, %s125
      %s143 = sphi 0, %s143
      %s145 = sphi 0, %s143
      %s146 = sphi 0, %s145
      %s160 = sphi 0, %s146
      %s168 = sphi 0, %s170
      %s171 = sphi 0, %s168
      %s172 = sphi 0, %s171
      %s188 = sphi 0, %s172
    $region4: #{tpu_custom_call.1} parent=1 // loop_header_branch
      %21 = sbr.rel (%p19) target = $region8
    $region5: #{tpu_custom_call.1} parent=1 // loop_body
      %s23 = ssub.s32 %s18, 1
      %s24 = ssub.s32 %s18, 2
      %s31 = sadd.s32 1, %s26
      %p32 = scmp.ge.s32.totalorder %s31, 2
      %s33 = scalar_select %p32, 0, %s31
      %s34 = sadd.s32 1, %s25
      %s35 = scalar_select %p32, %s34, %s25
      %p36 = scmp.ge.s32.totalorder %s35, 2
      %s37 = scalar_select %p36, 0, %s35
      %s39 = sadd.s32 %s38, 1
      %p42 = scmp.eq.s32.totalorder %s18, 3
      %p43 = scmp.ne.s32.totalorder %s38, %s40
      %p44 = scmp.eq.s32.totalorder %s18, 0
      %p45 = por %p43, %p44
      %p46 = scmp.ne.s32.totalorder %s38, %s40
      %p47 = scmp.eq.s32.totalorder %s23, 3
      %p48 = por %p46, %p47
      %p49 = scmp.ne.s32.totalorder %s40, %s41
      %p50 = scmp.eq.s32.totalorder %s23, 0
      %p51 = por %p49, %p50
      %p52 = scmp.ne.s32.totalorder %s40, %s41
      %p53 = scmp.eq.s32.totalorder %s24, 3
      %p54 = por %p52, %p53
      %p56 = scmp.ne.s32.totalorder %s41, %s55
      %p57 = scmp.eq.s32.totalorder %s24, 0
      %p58 = por %p56, %p57
      %s60 = sadd.s32 %s59, 1
      %p63 = scmp.eq.s32.totalorder %s18, 3
      %p64 = scmp.ne.s32.totalorder %s59, %s61
      %p65 = scmp.eq.s32.totalorder %s18, 0
      %p66 = por %p64, %p65
      %p67 = scmp.ne.s32.totalorder %s59, %s61
      %p68 = scmp.eq.s32.totalorder %s23, 3
      %p69 = por %p67, %p68
      %p70 = scmp.ne.s32.totalorder %s61, %s62
      %p71 = scmp.eq.s32.totalorder %s23, 0
      %p72 = por %p70, %p71
      %p73 = scmp.ne.s32.totalorder %s61, %s62
      %p74 = scmp.eq.s32.totalorder %s24, 3
      %p75 = por %p73, %p74
      %p77 = scmp.ne.s32.totalorder %s62, %s76
      %p78 = scmp.eq.s32.totalorder %s24, 0
      %p79 = por %p77, %p78
      %s81 = sadd.s32 %s80, 1
      %p84 = scmp.eq.s32.totalorder %s18, 3
      %p85 = scmp.ne.s32.totalorder %s80, %s82
      %p86 = scmp.eq.s32.totalorder %s18, 0
      %p87 = por %p85, %p86
      %p88 = scmp.ne.s32.totalorder %s80, %s82
      %p89 = scmp.eq.s32.totalorder %s23, 3
      %p90 = por %p88, %p89
      %p91 = scmp.ne.s32.totalorder %s82, %s83
      %p92 = scmp.eq.s32.totalorder %s23, 0
      %p93 = por %p91, %p92
      %p94 = scmp.ne.s32.totalorder %s82, %s83
      %p95 = scmp.eq.s32.totalorder %s24, 3
      %p96 = por %p94, %p95
      %p98 = scmp.ne.s32.totalorder %s83, %s97
      %p99 = scmp.eq.s32.totalorder %s24, 0
      %p100 = por %p98, %p99
      %s102 = sadd.s32 %s101, 1
      %p105 = scmp.eq.s32.totalorder %s18, 3
      %p106 = scmp.ne.s32.totalorder %s101, %s103
      %p107 = scmp.eq.s32.totalorder %s18, 0
      %p108 = por %p106, %p107
      %p109 = scmp.ne.s32.totalorder %s101, %s103
      %p110 = scmp.eq.s32.totalorder %s23, 3
      %p111 = por %p109, %p110
      %p112 = scmp.ne.s32.totalorder %s103, %s104
      %p113 = scmp.eq.s32.totalorder %s23, 0
      %p114 = por %p112, %p113
      %p115 = scmp.ne.s32.totalorder %s103, %s104
      %p116 = scmp.eq.s32.totalorder %s24, 3
      %p117 = por %p115, %p116
      %p119 = scmp.ne.s32.totalorder %s104, %s118
      %p120 = scmp.eq.s32.totalorder %s24, 0
      %p121 = por %p119, %p120
      %s123 = sadd.s32 %s122, 1
      %p126 = scmp.eq.s32.totalorder %s18, 3
      %p127 = scmp.ne.s32.totalorder %s122, %s124
      %p128 = scmp.eq.s32.totalorder %s18, 0
      %p129 = por %p127, %p128
      %p130 = scmp.ne.s32.totalorder %s122, %s124
      %p131 = scmp.eq.s32.totalorder %s23, 3
      %p132 = por %p130, %p131
      %p133 = scmp.ne.s32.totalorder %s124, %s125
      %p134 = scmp.eq.s32.totalorder %s23, 0
      %p135 = por %p133, %p134
      %p136 = scmp.ne.s32.totalorder %s124, %s125
      %p137 = scmp.eq.s32.totalorder %s24, 3
      %p138 = por %p136, %p137
      %p140 = scmp.ne.s32.totalorder %s125, %s139
      %p141 = scmp.eq.s32.totalorder %s24, 0
      %p142 = por %p140, %p141
      %s144 = sadd.s32 %s143, 1
      %p147 = scmp.eq.s32.totalorder %s18, 3
      %p148 = scmp.ne.s32.totalorder %s143, %s145
      %p149 = scmp.eq.s32.totalorder %s18, 0
      %p150 = por %p148, %p149
      %p151 = scmp.ne.s32.totalorder %s143, %s145
      %p152 = scmp.eq.s32.totalorder %s23, 3
      %p153 = por %p151, %p152
      %p154 = scmp.ne.s32.totalorder %s145, %s146
      %p155 = scmp.eq.s32.totalorder %s23, 0
      %p156 = por %p154, %p155
      %p157 = scmp.ne.s32.totalorder %s145, %s146
      %p158 = scmp.eq.s32.totalorder %s24, 3
      %p159 = por %p157, %p158
      %p161 = scmp.ne.s32.totalorder %s146, %s160
      %p162 = scmp.eq.s32.totalorder %s24, 0
      %p163 = por %p161, %p162
      %s164 = ssub.s32 %s25, %s37
      %s165 = ssub.s32 %s26, %s33
      %s166 = sor.u32 %s164, %s165
      %p167 = scmp.eq.s32.totalorder %s166, 0
      %s169 = sadd.s32 %s168, 1
      %s170 = scalar_select %p167, %s168, %s169
      %p173 = pneg %p167
      %p174 = scmp.eq.s32.totalorder %s18, 3
      %p175 = por %p173, %p174
      %p176 = scmp.ne.s32.totalorder %s168, %s171
      %p177 = scmp.eq.s32.totalorder %s18, 0
      %p178 = por %p176, %p177
      %p179 = scmp.ne.s32.totalorder %s168, %s171
      %p180 = scmp.eq.s32.totalorder %s23, 3
      %p181 = por %p179, %p180
      %p182 = scmp.ne.s32.totalorder %s171, %s172
      %p183 = scmp.eq.s32.totalorder %s23, 0
      %p184 = por %p182, %p183
      %p185 = scmp.ne.s32.totalorder %s171, %s172
      %p186 = scmp.eq.s32.totalorder %s24, 3
      %p187 = por %p185, %p186
      %p189 = scmp.ne.s32.totalorder %s172, %s188
      %p190 = scmp.eq.s32.totalorder %s24, 0
      %p191 = por %p189, %p190
      %p192 = scmp.le.s32.totalorder 1, %s18
      %p193 = scmp.lt.s32.totalorder %s18, 5
      %p194 = pnand %p192, %p193
      %p195 = pneg %p194
      // Predicated region
      $region9: #{tpu_custom_call.1} parent=5 // pred_check
        _
      $region10: #{tpu_custom_call.1} parent=5 // pred_check_branch
        %197 = sbr.rel (%p194) target = $region12
      $region11: #{tpu_custom_call.1} parent=5 // pred_region
        %s198 = ssub.s32 %s18, 1
        // Predicated region
        $region13: #{tpu_custom_call.1} parent=11 // pred_check
          %p199 = pneg %p51
        $region14: #{tpu_custom_call.1} parent=11 // pred_check_branch
          %201 = sbr.rel (%p199) target = $region16
        $region15: #{tpu_custom_call.1} parent=11 // pred_region
          %s203 = ssub.s32 2048, 2048
          %204 = vsyncadd [#allocation5], %s203
          %s205 = sshll.u32 [#allocation4], 4
          %s206 = int_to_ptr.vmem [resolvable:$true] %s205
          %211 = dma.hbm_to_vmem [thread:$0]  %s1, 2048, %s206, [#allocation5], 128, 128, 8
        $region16: #{tpu_custom_call.1} parent=11 // pred_fallthru
          _
        // Predicated region
        $region17: #{tpu_custom_call.1} parent=11 // pred_check
          %p212 = pneg %p72
        $region18: #{tpu_custom_call.1} parent=11 // pred_check_branch
          %214 = sbr.rel (%p212) target = $region20
        $region19: #{tpu_custom_call.1} parent=11 // pred_region
          _
        $region20: #{tpu_custom_call.1} parent=11 // pred_fallthru
          _
        // Predicated region
        $region21: #{tpu_custom_call.1} parent=11 // pred_check
          %p215 = pneg %p93
        $region22: #{tpu_custom_call.1} parent=11 // pred_check_branch
          %217 = sbr.rel (%p215) target = $region24
        $region23: #{tpu_custom_call.1} parent=11 // pred_region
          %s219 = ssub.s32 18432, 18432
          %220 = vsyncadd [#allocation8], %s219
          %s221 = sshll.u32 [#allocation7], 4
          %s222 = int_to_ptr.vmem [resolvable:$true] %s221
          %227 = dma.hbm_to_vmem [thread:$0]  %s3, 18432, %s222, [#allocation8], 128, 128, 8
        $region24: #{tpu_custom_call.1} parent=11 // pred_fallthru
          _
        // Predicated region
        $region25: #{tpu_custom_call.1} parent=11 // pred_check
          %p228 = pneg %p114
        $region26: #{tpu_custom_call.1} parent=11 // pred_check_branch
          %230 = sbr.rel (%p228) target = $region28
        $region27: #{tpu_custom_call.1} parent=11 // pred_region
          _
        $region28: #{tpu_custom_call.1} parent=11 // pred_fallthru
          _
        // Predicated region
        $region29: #{tpu_custom_call.1} parent=11 // pred_check
          %p231 = pneg %p135
        $region30: #{tpu_custom_call.1} parent=11 // pred_check_branch
          %233 = sbr.rel (%p231) target = $region32
        $region31: #{tpu_custom_call.1} parent=11 // pred_region
          %s235 = ssub.s32 18432, 18432
          %236 = vsyncadd [#allocation8], %s235
          %s237 = sshll.u32 [#allocation9], 4
          %s238 = int_to_ptr.vmem [resolvable:$true] %s237
          %243 = dma.hbm_to_vmem [thread:$0]  %s5, 18432, %s238, [#allocation8], 128, 128, 8
        $region32: #{tpu_custom_call.1} parent=11 // pred_fallthru
          _
        // Predicated region
        $region33: #{tpu_custom_call.1} parent=11 // pred_check
          %p244 = pneg %p156
        $region34: #{tpu_custom_call.1} parent=11 // pred_check_branch
          %246 = sbr.rel (%p244) target = $region36
        $region35: #{tpu_custom_call.1} parent=11 // pred_region
          _
        $region36: #{tpu_custom_call.1} parent=11 // pred_fallthru
          _
      $region12: #{tpu_custom_call.1} parent=5 // pred_fallthru
        _
      %p247 = scmp.lt.s32.totalorder %s18, 4
      // Predicated region
      $region37: #{tpu_custom_call.1} parent=5 // pred_check
        %p248 = pneg %p247
      $region38: #{tpu_custom_call.1} parent=5 // pred_check_branch
        %250 = sbr.rel (%p248) target = $region40
      $region39: #{tpu_custom_call.1} parent=5 // pred_region
        _
      $region40: #{tpu_custom_call.1} parent=5 // pred_fallthru
        _
      %p251 = scmp.le.s32.totalorder 1, %s18
      %p252 = scmp.lt.s32.totalorder %s18, 5
      %p253 = pnand %p251, %p252
      %p254 = pneg %p253
      // Predicated region
      $region41: #{tpu_custom_call.1} parent=5 // pred_check
        _
      $region42: #{tpu_custom_call.1} parent=5 // pred_check_branch
        %256 = sbr.rel (%p253) target = $region44
      $region43: #{tpu_custom_call.1} parent=5 // pred_region
        %s257 = ssub.s32 %s18, 1
        // Predicated region
        $region45: #{tpu_custom_call.1} parent=43 // pred_check
          %p258 = pneg %p51
        $region46: #{tpu_custom_call.1} parent=43 // pred_check_branch
          %260 = sbr.rel (%p258) target = $region48
        $region47: #{tpu_custom_call.1} parent=43 // pred_region
          %261 = dma.done [#allocation5], 2048
        $region48: #{tpu_custom_call.1} parent=43 // pred_fallthru
          _
        // Predicated region
        $region49: #{tpu_custom_call.1} parent=43 // pred_check
          %p262 = pneg %p93
        $region50: #{tpu_custom_call.1} parent=43 // pred_check_branch
          %264 = sbr.rel (%p262) target = $region52
        $region51: #{tpu_custom_call.1} parent=43 // pred_region
          %265 = dma.done [#allocation8], 18432
        $region52: #{tpu_custom_call.1} parent=43 // pred_fallthru
          _
        // Predicated region
        $region53: #{tpu_custom_call.1} parent=43 // pred_check
          %p266 = pneg %p135
        $region54: #{tpu_custom_call.1} parent=43 // pred_check_branch
          %268 = sbr.rel (%p266) target = $region56
        $region55: #{tpu_custom_call.1} parent=43 // pred_region
          %269 = dma.done [#allocation8], 18432
        $region56: #{tpu_custom_call.1} parent=43 // pred_fallthru
          _
        %p270 = pneg %p51
        %p271 = pneg %p48
        %p272 = pneg %p72
        %p273 = pneg %p69
        %p274 = pneg %p93
        %p275 = pneg %p90
        %p276 = pneg %p114
        %p277 = pneg %p111
        %p278 = pneg %p135
        %p279 = pneg %p132
        %p280 = pneg %p156
        %p281 = pneg %p153
        %p282 = pneg %p184
        %p283 = pneg %p181
        %s284 = sand.u32 %s171, 1
        %s285 = scalar_lea.sflag [#allocation6], %s284
        %s286 = sand.u32 %s171, 1
        %s287 = smul.addr %s286, 384
        %s288 = scalar_lea.vmem [#allocation10], %s287
        %s289 = smul.u32 8, %s28
        %p290 = scmp.lt.s32.totalorder %s28, 0
        %s291 = ssub.s32 0, %s28
        %s292 = scalar_select %p290, %s291, %s28
        %s293 = sand.u32 %s292, 1
        %s294 = ssub.s32 0, %s293
        %s295 = scalar_select %p290, %s294, %s293
        %p296 = scmp.eq.s32.totalorder %s28, 0
        // Predicated region
        $region57: #{tpu_custom_call.1} parent=43 // pred_check
          %p297 = pneg %p296
        $region58: #{tpu_custom_call.1} parent=43 // pred_check_branch
          %299 = sbr.rel (%p297) target = $region60
        $region59: #{tpu_custom_call.1} parent=43 // pred_region
          %s300 = smul.u32 %s28, 256
          %s301 = smul.u32 %s27, 896
          %s302 = sadd.s32 %s300, %s301
          %s303 = smul.addr %s302, 16
          %s304 = scalar_lea.hbm %s0, %s303
          %s305 = smul.u32 %s295, 640
          %s306 = scalar_lea.vmem [#allocation2], %s305
          %s307 = scalar_lea.sflag [#allocation3], %s295
          // Predicated region
          $region61: #{tpu_custom_call.1} parent=59 // pred_check
            _
          $region62: #{tpu_custom_call.1} parent=59 // pred_check_branch
            %309 = sbr.rel target = $region64
          $region63: #{tpu_custom_call.1} parent=59 // pred_region
            %310 = sst [smem:[#allocation13]] [#allocation12]
            %311 = sst [smem:[#allocation14]] [#allocation11]
          $region64: #{tpu_custom_call.1} parent=59 // pred_fallthru
            _
          %313 = shalt.err (0)
          %s315 = sshll.u32 %s306, 4
          %s316 = int_to_ptr.vmem [resolvable:$true] %s315
          %318 = dma.hbm_to_vmem [thread:$0]  %s304, 10240, %s316, %s307
        $region60: #{tpu_custom_call.1} parent=43 // pred_fallthru
          _
        %s319 = sadd.s32 %s28, 1
        %p320 = scmp.lt.s32.totalorder %s319, 2
        // Predicated region
        $region65: #{tpu_custom_call.1} parent=43 // pred_check
          %p321 = pneg %p320
        $region66: #{tpu_custom_call.1} parent=43 // pred_check_branch
          %323 = sbr.rel (%p321) target = $region68
        $region67: #{tpu_custom_call.1} parent=43 // pred_region
          %s324 = ssub.s32 1, %s295
          %s325 = smul.u32 %s319, 256
          %s326 = smul.u32 %s27, 896
          %s327 = sadd.s32 %s325, %s326
          %s328 = smul.addr %s327, 16
          %s329 = scalar_lea.hbm %s0, %s328
          %s330 = smul.u32 %s324, 640
          %s331 = scalar_lea.vmem [#allocation2], %s330
          %s332 = scalar_lea.sflag [#allocation3], %s324
          // Predicated region
          $region69: #{tpu_custom_call.1} parent=67 // pred_check
            _
          $region70: #{tpu_custom_call.1} parent=67 // pred_check_branch
            %334 = sbr.rel target = $region72
          $region71: #{tpu_custom_call.1} parent=67 // pred_region
            %335 = sst [smem:[#allocation13]] [#allocation16]
            %336 = sst [smem:[#allocation14]] [#allocation15]
          $region72: #{tpu_custom_call.1} parent=67 // pred_fallthru
            _
          %338 = shalt.err (0)
          %s340 = sshll.u32 %s331, 4
          %s341 = int_to_ptr.vmem [resolvable:$true] %s340
          %343 = dma.hbm_to_vmem [thread:$0]  %s329, 10240, %s341, %s332
        $region68: #{tpu_custom_call.1} parent=43 // pred_fallthru
          _
        %s344 = smul.u32 %s28, 256
        %s345 = smul.u32 %s295, 640
        %s346 = scalar_lea.vmem [#allocation2], %s345
        %s347 = scalar_lea.sflag [#allocation3], %s295
        %s348 = smul.u32 640, 1
        %s349 = sshll.u32 %s348, 4
        %350 = dma.done %s347, %s349
        %v351 = vld [vmem:[%s346] sm:$0xff]
        %v352 = vld [vmem:[%s346 + $0x8] sm:$0xff]
        %v353 = vld [vmem:[%s346 + $0x10] sm:$0xff]
        %v354 = vld [vmem:[%s346 + $0x18] sm:$0xff]
        %v355 = vld [vmem:[%s346 + $0x20] sm:$0xff]
        %v356 = vld [vmem:[%s346 + $0x28] sm:$0xff]
        %v357 = vld [vmem:[%s346 + $0x30] sm:$0xff]
        %v358 = vld [vmem:[%s346 + $0x38] sm:$0xff]
        %v359 = vld [vmem:[%s346 + $0x40] sm:$0xff]
        %v360 = vld [vmem:[%s346 + $0x48] sm:$0xff]
        %v361 = vld [vmem:[%s346 + $0x50] sm:$0xff]
        %v362 = vld [vmem:[%s346 + $0x58] sm:$0xff]
        %v363 = vld [vmem:[%s346 + $0x60] sm:$0xff]
        %v364 = vld [vmem:[%s346 + $0x68] sm:$0xff]
        %v365 = vld [vmem:[%s346 + $0x70] sm:$0xff]
        %v366 = vld [vmem:[%s346 + $0x78] sm:$0xff]
        %v367 = vld [vmem:[%s346 + $0x80] sm:$0xff]
        %v368 = vld [vmem:[%s346 + $0x88] sm:$0xff]
        %v369 = vld [vmem:[%s346 + $0x90] sm:$0xff]
        %v370 = vld [vmem:[%s346 + $0x98] sm:$0xff]
        %v371 = vld [vmem:[%s346 + $0xa0] sm:$0xff]
        %v372 = vld [vmem:[%s346 + $0xa8] sm:$0xff]
        %v373 = vld [vmem:[%s346 + $0xb0] sm:$0xff]
        %v374 = vld [vmem:[%s346 + $0xb8] sm:$0xff]
        %v375 = vld [vmem:[%s346 + $0xc0] sm:$0xff]
        %v376 = vld [vmem:[%s346 + $0xc8] sm:$0xff]
        %v377 = vld [vmem:[%s346 + $0xd0] sm:$0xff]
        %v378 = vld [vmem:[%s346 + $0xd8] sm:$0xff]
        %v379 = vld [vmem:[%s346 + $0xe0] sm:$0xff]
        %v380 = vld [vmem:[%s346 + $0xe8] sm:$0xff]
        %v381 = vld [vmem:[%s346 + $0xf0] sm:$0xff]
        %v382 = vld [vmem:[%s346 + $0xf8] sm:$0xff]
        %v383 = vld [vmem:[%s346 + $0x100] sm:$0xff]
        %v384 = vld [vmem:[%s346 + $0x108] sm:$0xff]
        %v385 = vld [vmem:[%s346 + $0x110] sm:$0xff]
        %v386 = vld [vmem:[%s346 + $0x118] sm:$0xff]
        %v387 = vld [vmem:[%s346 + $0x120] sm:$0xff]
        %v388 = vld [vmem:[%s346 + $0x128] sm:$0xff]
        %v389 = vld [vmem:[%s346 + $0x130] sm:$0xff]
        %v390 = vld [vmem:[%s346 + $0x138] sm:$0xff]
        %v391 = vld [vmem:[%s346 + $0x140] sm:$0xff]
        %v392 = vld [vmem:[%s346 + $0x148] sm:$0xff]
        %v393 = vld [vmem:[%s346 + $0x150] sm:$0xff]
        %v394 = vld [vmem:[%s346 + $0x158] sm:$0xff]
        %v395 = vld [vmem:[%s346 + $0x160] sm:$0xff]
        %v396 = vld [vmem:[%s346 + $0x168] sm:$0xff]
        %v397 = vld [vmem:[%s346 + $0x170] sm:$0xff]
        %v398 = vld [vmem:[%s346 + $0x178] sm:$0xff]
        %v399 = vld [vmem:[%s346 + $0x180] sm:$0xff]
        %v400 = vld [vmem:[%s346 + $0x188] sm:$0xff]
        %v401 = vld [vmem:[%s346 + $0x190] sm:$0xff]
        %v402 = vld [vmem:[%s346 + $0x198] sm:$0xff]
        %v403 = vld [vmem:[%s346 + $0x1a0] sm:$0xff]
        %v404 = vld [vmem:[%s346 + $0x1a8] sm:$0xff]
        %v405 = vld [vmem:[%s346 + $0x1b0] sm:$0xff]
        %v406 = vld [vmem:[%s346 + $0x1b8] sm:$0xff]
        %v407 = vld [vmem:[%s346 + $0x1c0] sm:$0xff]
        %v408 = vld [vmem:[%s346 + $0x1c8] sm:$0xff]
        %v409 = vld [vmem:[%s346 + $0x1d0] sm:$0xff]
        %v410 = vld [vmem:[%s346 + $0x1d8] sm:$0xff]
        %v411 = vld [vmem:[%s346 + $0x1e0] sm:$0xff]
        %v412 = vld [vmem:[%s346 + $0x1e8] sm:$0xff]
        %v413 = vld [vmem:[%s346 + $0x1f0] sm:$0xff]
        %v414 = vld [vmem:[%s346 + $0x1f8] sm:$0xff]
        %v415 = vld [vmem:[%s346 + $0x200] sm:$0xff]
        %v416 = vld [vmem:[%s346 + $0x208] sm:$0xff]
        %v417 = vld [vmem:[%s346 + $0x210] sm:$0xff]
        %v418 = vld [vmem:[%s346 + $0x218] sm:$0xff]
        %v419 = vld [vmem:[%s346 + $0x220] sm:$0xff]
        %v420 = vld [vmem:[%s346 + $0x228] sm:$0xff]
        %v421 = vld [vmem:[%s346 + $0x230] sm:$0xff]
        %v422 = vld [vmem:[%s346 + $0x238] sm:$0xff]
        %v423 = vld [vmem:[%s346 + $0x240] sm:$0xff]
        %v424 = vld [vmem:[%s346 + $0x248] sm:$0xff]
        %v425 = vld [vmem:[%s346 + $0x250] sm:$0xff]
        %v426 = vld [vmem:[%s346 + $0x258] sm:$0xff]
        %v427 = vld [vmem:[%s346 + $0x260] sm:$0xff]
        %v428 = vld [vmem:[%s346 + $0x268] sm:$0xff]
        %v429 = vld [vmem:[%s346 + $0x270] sm:$0xff]
        %v430 = vld [vmem:[%s346 + $0x278] sm:$0xff]
        %v431 = vrot.slane %v351, 6
        %v432 = vrot.slane %v352, 6
        %v433 = vrot.slane %v353, 6
        %v434 = vrot.slane %v354, 6
        %v435 = vrot.slane %v355, 6
        %v436 = vrot.slane %v356, 6
        %v437 = vrot.slane %v357, 6
        %v438 = vrot.slane %v358, 6
        %v439 = vrot.slane %v359, 6
        %v440 = vrot.slane %v360, 6
        %v441 = vrot.slane %v361, 6
        %v442 = vrot.slane %v362, 6
        %v443 = vrot.slane %v363, 6
        %v444 = vrot.slane %v364, 6
        %v445 = vrot.slane %v365, 6
        %v446 = vrot.slane %v366, 6
        %v447 = vrot.slane %v367, 6
        %v448 = vrot.slane %v368, 6
        %v449 = vrot.slane %v369, 6
        %v450 = vrot.slane %v370, 6
        %v451 = vrot.slane %v371, 6
        %v452 = vrot.slane %v372, 6
        %v453 = vrot.slane %v373, 6
        %v454 = vrot.slane %v374, 6
        %v455 = vrot.slane %v375, 6
        %v456 = vrot.slane %v376, 6
        %v457 = vrot.slane %v377, 6
        %v458 = vrot.slane %v378, 6
        %v459 = vrot.slane %v379, 6
        %v460 = vrot.slane %v380, 6
        %v461 = vrot.slane %v381, 6
        %v462 = vrot.slane %v382, 6
        %v463 = vrot.slane %v383, 6
        %v464 = vrot.slane %v384, 6
        %v465 = vrot.slane %v385, 6
        %v466 = vrot.slane %v386, 6
        %v467 = vrot.slane %v387, 6
        %v468 = vrot.slane %v388, 6
        %v469 = vrot.slane %v389, 6
        %v470 = vrot.slane %v390, 6
        %v471 = vrot.slane %v391, 6
        %v472 = vrot.slane %v392, 6
        %v473 = vrot.slane %v393, 6
        %v474 = vrot.slane %v394, 6
        %v475 = vrot.slane %v395, 6
        %v476 = vrot.slane %v396, 6
        %v477 = vrot.slane %v397, 6
        %v478 = vrot.slane %v398, 6
        %v479 = vrot.slane %v399, 6
        %v480 = vrot.slane %v400, 6
        %v481 = vrot.slane %v401, 6
        %v482 = vrot.slane %v402, 6
        %v483 = vrot.slane %v403, 6
        %v484 = vrot.slane %v404, 6
        %v485 = vrot.slane %v405, 6
        %v486 = vrot.slane %v406, 6
        %v487 = vrot.slane %v407, 6
        %v488 = vrot.slane %v408, 6
        %v489 = vrot.slane %v409, 6
        %v490 = vrot.slane %v410, 6
        %v491 = vrot.slane %v411, 6
        %v492 = vrot.slane %v412, 6
        %v493 = vrot.slane %v413, 6
        %v494 = vrot.slane %v414, 6
        %v495 = vrot.slane %v415, 6
        %v496 = vrot.slane %v416, 6
        %v497 = vrot.slane %v417, 6
        %v498 = vrot.slane %v418, 6
        %v499 = vrot.slane %v419, 6
        %v500 = vrot.slane %v420, 6
        %v501 = vrot.slane %v421, 6
        %v502 = vrot.slane %v422, 6
        %v503 = vrot.slane %v423, 6
        %v504 = vrot.slane %v424, 6
        %v505 = vrot.slane %v425, 6
        %v506 = vrot.slane %v426, 6
        %v507 = vrot.slane %v427, 6
        %v508 = vrot.slane %v428, 6
        %v509 = vrot.slane %v429, 6
        %v510 = vrot.slane %v430, 6
        %v511 = vlaneseq
        %v512 = vshrl.u32 %v511, 7
        %vm513 = vcmp.lt.s32.totalorder %v512, 2
        %v514 = vsel %vm513, %v509, %v510
        %v515 = vsel %vm513, %v508, %v509
        %v516 = vsel %vm513, %v507, %v508
        %v517 = vsel %vm513, %v506, %v507
        %v518 = vsel %vm513, %v505, %v506
        %v519 = vsel %vm513, %v504, %v505
        %v520 = vsel %vm513, %v503, %v504
        %v521 = vsel %vm513, %v502, %v503
        %v522 = vsel %vm513, %v501, %v502
        %v523 = vsel %vm513, %v500, %v501
        %v524 = vsel %vm513, %v499, %v500
        %v525 = vsel %vm513, %v498, %v499
        %v526 = vsel %vm513, %v497, %v498
        %v527 = vsel %vm513, %v496, %v497
        %v528 = vsel %vm513, %v495, %v496
        %v529 = vsel %vm513, %v494, %v495
        %v530 = vsel %vm513, %v493, %v494
        %v531 = vsel %vm513, %v492, %v493
        %v532 = vsel %vm513, %v491, %v492
        %v533 = vsel %vm513, %v490, %v491
        %v534 = vsel %vm513, %v489, %v490
        %v535 = vsel %vm513, %v488, %v489
        %v536 = vsel %vm513, %v487, %v488
        %v537 = vsel %vm513, %v486, %v487
        %v538 = vsel %vm513, %v485, %v486
        %v539 = vsel %vm513, %v484, %v485
        %v540 = vsel %vm513, %v483, %v484
        %v541 = vsel %vm513, %v482, %v483
        %v542 = vsel %vm513, %v481, %v482
        %v543 = vsel %vm513, %v480, %v481
        %v544 = vsel %vm513, %v479, %v480
        %v545 = vsel %vm513, %v478, %v479
        %v546 = vsel %vm513, %v477, %v478
        %v547 = vsel %vm513, %v476, %v477
        %v548 = vsel %vm513, %v475, %v476
        %v549 = vsel %vm513, %v474, %v475
        %v550 = vsel %vm513, %v473, %v474
        %v551 = vsel %vm513, %v472, %v473
        %v552 = vsel %vm513, %v471, %v472
        %v553 = vsel %vm513, %v470, %v471
        %v554 = vsel %vm513, %v469, %v470
        %v555 = vsel %vm513, %v468, %v469
        %v556 = vsel %vm513, %v467, %v468
        %v557 = vsel %vm513, %v466, %v467
        %v558 = vsel %vm513, %v465, %v466
        %v559 = vsel %vm513, %v464, %v465
        %v560 = vsel %vm513, %v463, %v464
        %v561 = vsel %vm513, %v462, %v463
        %v562 = vsel %vm513, %v461, %v462
        %v563 = vsel %vm513, %v460, %v461
        %v564 = vsel %vm513, %v459, %v460
        %v565 = vsel %vm513, %v458, %v459
        %v566 = vsel %vm513, %v457, %v458
        %v567 = vsel %vm513, %v456, %v457
        %v568 = vsel %vm513, %v455, %v456
        %v569 = vsel %vm513, %v454, %v455
        %v570 = vsel %vm513, %v453, %v454
        %v571 = vsel %vm513, %v452, %v453
        %v572 = vsel %vm513, %v451, %v452
        %v573 = vsel %vm513, %v450, %v451
        %v574 = vsel %vm513, %v449, %v450
        %v575 = vsel %vm513, %v448, %v449
        %v576 = vsel %vm513, %v447, %v448
        %v577 = vsel %vm513, %v446, %v447
        %v578 = vsel %vm513, %v445, %v446
        %v579 = vsel %vm513, %v444, %v445
        %v580 = vsel %vm513, %v443, %v444
        %v581 = vsel %vm513, %v442, %v443
        %v582 = vsel %vm513, %v441, %v442
        %v583 = vsel %vm513, %v440, %v441
        %v584 = vsel %vm513, %v439, %v440
        %v585 = vsel %vm513, %v438, %v439
        %v586 = vsel %vm513, %v437, %v438
        %v587 = vsel %vm513, %v436, %v437
        %v588 = vsel %vm513, %v435, %v436
        %v589 = vsel %vm513, %v434, %v435
        %v590 = vsel %vm513, %v433, %v434
        %v591 = vsel %vm513, %v432, %v433
        %v592 = vsel %vm513, %v431, %v432
        %v593 = vsel %vm513, %v510, %v431
        %v594 = vld [vmem:[#allocation4] sm:$0xff]
        %v595 = vld [vmem:[#allocation4 + $0x8] sm:$0xff]
        %v596 = vld [vmem:[#allocation4 + $0x10] sm:$0xff]
        %v597 = vld [vmem:[#allocation4 + $0x18] sm:$0xff]
        %v598 = vld [vmem:[#allocation4 + $0x20] sm:$0xff]
        %v599 = vld [vmem:[#allocation4 + $0x28] sm:$0xff]
        %v600 = vld [vmem:[#allocation4 + $0x30] sm:$0xff]
        %v601 = vld [vmem:[#allocation4 + $0x38] sm:$0xff]
        %v602 = vld [vmem:[#allocation4 + $0x40] sm:$0xff]
        %v603 = vld [vmem:[#allocation4 + $0x48] sm:$0xff]
        %v604 = vld [vmem:[#allocation4 + $0x50] sm:$0xff]
        %v605 = vld [vmem:[#allocation4 + $0x58] sm:$0xff]
        %v606 = vld [vmem:[#allocation4 + $0x60] sm:$0xff]
        %v607 = vld [vmem:[#allocation4 + $0x68] sm:$0xff]
        %v608 = vld [vmem:[#allocation4 + $0x70] sm:$0xff]
        %v609 = vld [vmem:[#allocation4 + $0x78] sm:$0xff]
        %v610 = vld [vmem:[%s2] sm:$0x1]
        %v612 = vlaneseq
        %v613 = vshrl.u32 %v612, 7
        %v614 = vsub.s32 0, %v613
        %v615 = vrot.slane %v610, %v614
        %617 = vmatprep.subr.mxu0 0.0
        %618 = vmatpush1.msra.mxu0 %v594
        %619 = vmatprep.subr.mxu0 0.0
        %620 = vmatpush1.msra.mxu0 %v595
        %621 = vmatprep.subr.mxu0 0.0
        %622 = vmatpush1.msra.mxu0 %v596
        %623 = vmatprep.subr.mxu0 0.0
        %624 = vmatpush1.msra.mxu0 %v597
        %625 = vmatprep.subr.mxu0 0.0
        %626 = vmatpush1.msra.mxu0 %v598
        %627 = vmatprep.subr.mxu0 0.0
        %628 = vmatpush1.msra.mxu0 %v599
        %629 = vmatprep.subr.mxu0 0.0
        %630 = vmatpush1.msra.mxu0 %v600
        %631 = vmatprep.subr.mxu0 0.0
        %632 = vmatpush1.msra.mxu0 %v601
        %633 = vmatprep.subr.mxu0 0.0
        %634 = vmatpush1.msra.mxu0 %v602
        %635 = vmatprep.subr.mxu0 0.0
        %636 = vmatpush1.msra.mxu0 %v603
        %637 = vmatprep.subr.mxu0 0.0
        %638 = vmatpush1.msra.mxu0 %v604
        %639 = vmatprep.subr.mxu0 0.0
        %640 = vmatpush1.msra.mxu0 %v605
        %641 = vmatprep.subr.mxu0 0.0
        %642 = vmatpush1.msra.mxu0 %v606
        %643 = vmatprep.subr.mxu0 0.0
        %644 = vmatpush1.msra.mxu0 %v607
        %645 = vmatprep.subr.mxu0 0.0
        %646 = vmatpush1.msra.mxu0 %v608
        %647 = vmatprep.subr.mxu0 0.0
        %648 = vmatpush1.msra.mxu0 %v609
        %649 = vmatprep.subr.mxu0 0.0
        %650 = vmatpush1.msra.mxu0 0.0
        %651 = vmatprep.subr.mxu0 0.0
        %652 = vmatpush1.msra.mxu0 0.0
        %653 = vmatprep.subr.mxu0 0.0
        %654 = vmatpush1.msra.mxu0 0.0
        %655 = vmatprep.subr.mxu0 0.0
        %656 = vmatpush1.msra.mxu0 0.0
        %657 = vmatprep.subr.mxu0 0.0
        %658 = vmatpush1.msra.mxu0 0.0
        %659 = vmatprep.subr.mxu0 0.0
        %660 = vmatpush1.msra.mxu0 0.0
        %661 = vmatprep.subr.mxu0 0.0
        %662 = vmatpush1.msra.mxu0 0.0
        %663 = vmatprep.subr.mxu0 0.0
        %664 = vmatpush1.msra.mxu0 0.0
        %665 = vmatprep.subr.mxu0 0.0
        %666 = vmatpush1.msra.mxu0 0.0
        %667 = vmatprep.subr.mxu0 0.0
        %668 = vmatpush1.msra.mxu0 0.0
        %669 = vmatprep.subr.mxu0 0.0
        %670 = vmatpush1.msra.mxu0 0.0
        %671 = vmatprep.subr.mxu0 0.0
        %672 = vmatpush1.msra.mxu0 0.0
        %673 = vmatprep.subr.mxu0 0.0
        %674 = vmatpush1.msra.mxu0 0.0
        %675 = vmatprep.subr.mxu0 0.0
        %676 = vmatpush1.msra.mxu0 0.0
        %677 = vmatprep.subr.mxu0 0.0
        %678 = vmatpush1.msra.mxu0 0.0
        %679 = vmatprep.subr.mxu0 0.0
        %680 = vmatpush1.msra.mxu0 0.0
        %681 = vmatprep.mubr.f32.mxu0 0.0
        %682 = vmatmul.mubr.f32.gmra.mrb[0].mxu0 %v568
        %v683 = vpop.f32.mrb[0].mxu0
        %v684 = vadd.f32 %v615, %v683
        %v685 = vpop.f32.mrb[0].mxu0
        %686 = vmatprep.mubr.f32.mxu0 0.0
        %687 = vmatmul.mubr.f32.gmra.mrb[0].mxu0 %v567
        %v688 = vpop.f32.mrb[0].mxu0
        %v689 = vadd.f32 %v615, %v688
        %v690 = vpop.f32.mrb[0].mxu0
        %691 = vmatprep.mubr.f32.mxu0 0.0
        %692 = vmatmul.mubr.f32.gmra.mrb[0].mxu0 %v566
        %v693 = vpop.f32.mrb[0].mxu0
        %v694 = vpop.f32.mrb[0].mxu0
        %695 = vmatprep.mubr.f32.mxu0 0.0
        %696 = vmatmul.mubr.f32.gmra.mrb[0].mxu0 %v565
        %v697 = vpop.f32.mrb[0].mxu0
        %v698 = vpop.f32.mrb[0].mxu0
        %699 = vmatprep.mubr.f32.mxu0 0.0
        %700 = vmatmul.mubr.f32.gmra.mrb[0].mxu0 %v564
        %v701 = vpop.f32.mrb[0].mxu0
        %v702 = vadd.f32 %v615, %v701
        %v703 = vpop.f32.mrb[0].mxu0
        %704 = vmatprep.mubr.f32.mxu0 0.0
        %705 = vmatmul.mubr.f32.gmra.mrb[0].mxu0 %v563
        %v706 = vpop.f32.mrb[0].mxu0
        %v707 = vadd.f32 %v615, %v706
        %v708 = vpop.f32.mrb[0].mxu0
        %709 = vmatprep.mubr.f32.mxu0 0.0
        %710 = vmatmul.mubr.f32.gmra.mrb[0].mxu0 %v562
        %v711 = vpop.f32.mrb[0].mxu0
        %v712 = vpop.f32.mrb[0].mxu0
        %713 = vmatprep.mubr.f32.mxu0 0.0
        %714 = vmatmul.mubr.f32.gmra.mrb[0].mxu0 %v561
        %v715 = vpop.f32.mrb[0].mxu0
        %v716 = vpop.f32.mrb[0].mxu0
        %717 = vmatprep.mubr.f32.mxu0 0.0
        %718 = vmatmul.mubr.f32.gmra.mrb[0].mxu0 %v560
        %v719 = vpop.f32.mrb[0].mxu0
        %v720 = vadd.f32 %v615, %v719
        %v721 = vpop.f32.mrb[0].mxu0
        %722 = vmatprep.mubr.f32.mxu0 0.0
        %723 = vmatmul.mubr.f32.gmra.mrb[0].mxu0 %v559
        %v724 = vpop.f32.mrb[0].mxu0
        %v725 = vadd.f32 %v615, %v724
        %v726 = vpop.f32.mrb[0].mxu0
        %727 = vmatprep.mubr.f32.mxu0 0.0
        %728 = vmatmul.mubr.f32.gmra.mrb[0].mxu0 %v558
        %v729 = vpop.f32.mrb[0].mxu0
        %v730 = vpop.f32.mrb[0].mxu0
        %731 = vmatprep.mubr.f32.mxu0 0.0
        %732 = vmatmul.mubr.f32.gmra.mrb[0].mxu0 %v557
        %v733 = vpop.f32.mrb[0].mxu0
        %v734 = vpop.f32.mrb[0].mxu0
        %735 = vmatprep.mubr.f32.mxu0 0.0
        %736 = vmatmul.mubr.f32.gmra.mrb[0].mxu0 %v556
        %v737 = vpop.f32.mrb[0].mxu0
        %v738 = vadd.f32 %v615, %v737
        %v739 = vpop.f32.mrb[0].mxu0
        %740 = vmatprep.mubr.f32.mxu0 0.0
        %741 = vmatmul.mubr.f32.gmra.mrb[0].mxu0 %v555
        %v742 = vpop.f32.mrb[0].mxu0
        %v743 = vadd.f32 %v615, %v742
        %v744 = vpop.f32.mrb[0].mxu0
        %745 = vmatprep.mubr.f32.mxu0 0.0
        %746 = vmatmul.mubr.f32.gmra.mrb[0].mxu0 %v554
        %v747 = vpop.f32.mrb[0].mxu0
        %v748 = vpop.f32.mrb[0].mxu0
        %749 = vmatprep.mubr.f32.mxu0 0.0
        %750 = vmatmul.mubr.f32.gmra.mrb[0].mxu0 %v553
        %v751 = vpop.f32.mrb[0].mxu0
        %v752 = vpop.f32.mrb[0].mxu0
        %753 = vmatprep.mubr.f32.mxu0 0.0
        %754 = vmatmul.mubr.f32.gmra.mrb[0].mxu0 %v552
        %v755 = vpop.f32.mrb[0].mxu0
        %v756 = vadd.f32 %v615, %v755
        %v757 = vpop.f32.mrb[0].mxu0
        %758 = vmatprep.mubr.f32.mxu0 0.0
        %759 = vmatmul.mubr.f32.gmra.mrb[0].mxu0 %v551
        %v760 = vpop.f32.mrb[0].mxu0
        %v761 = vadd.f32 %v615, %v760
        %v762 = vpop.f32.mrb[0].mxu0
        %763 = vmatprep.mubr.f32.mxu0 0.0
        %764 = vmatmul.mubr.f32.gmra.mrb[0].mxu0 %v550
        %v765 = vpop.f32.mrb[0].mxu0
        %v766 = vpop.f32.mrb[0].mxu0
        %767 = vmatprep.mubr.f32.mxu0 0.0
        %768 = vmatmul.mubr.f32.gmra.mrb[0].mxu0 %v549
        %v769 = vpop.f32.mrb[0].mxu0
        %v770 = vpop.f32.mrb[0].mxu0
        %771 = vmatprep.mubr.f32.mxu0 0.0
        %772 = vmatmul.mubr.f32.gmra.mrb[0].mxu0 %v548
        %v773 = vpop.f32.mrb[0].mxu0
        %v774 = vadd.f32 %v615, %v773
        %v775 = vpop.f32.mrb[0].mxu0
        %776 = vmatprep.mubr.f32.mxu0 0.0
        %777 = vmatmul.mubr.f32.gmra.mrb[0].mxu0 %v547
        %v778 = vpop.f32.mrb[0].mxu0
        %v779 = vadd.f32 %v615, %v778
        %v780 = vpop.f32.mrb[0].mxu0
        %781 = vmatprep.mubr.f32.mxu0 0.0
        %782 = vmatmul.mubr.f32.gmra.mrb[0].mxu0 %v546
        %v783 = vpop.f32.mrb[0].mxu0
        %v784 = vpop.f32.mrb[0].mxu0
        %785 = vmatprep.mubr.f32.mxu0 0.0
        %786 = vmatmul.mubr.f32.gmra.mrb[0].mxu0 %v545
        %v787 = vpop.f32.mrb[0].mxu0
        %v788 = vpop.f32.mrb[0].mxu0
        %789 = vmatprep.mubr.f32.mxu0 0.0
        %790 = vmatmul.mubr.f32.gmra.mrb[0].mxu0 %v544
        %v791 = vpop.f32.mrb[0].mxu0
        %v792 = vadd.f32 %v615, %v791
        %v793 = vpop.f32.mrb[0].mxu0
        %794 = vmatprep.mubr.f32.mxu0 0.0
        %795 = vmatmul.mubr.f32.gmra.mrb[0].mxu0 %v543
        %v796 = vpop.f32.mrb[0].mxu0
        %v797 = vadd.f32 %v615, %v796
        %v798 = vpop.f32.mrb[0].mxu0
        %799 = vmatprep.mubr.f32.mxu0 0.0
        %800 = vmatmul.mubr.f32.gmra.mrb[0].mxu0 %v542
        %v801 = vpop.f32.mrb[0].mxu0
        %v802 = vpop.f32.mrb[0].mxu0
        %803 = vmatprep.mubr.f32.mxu0 0.0
        %804 = vmatmul.mubr.f32.gmra.mrb[0].mxu0 %v541
        %v805 = vpop.f32.mrb[0].mxu0
        %v806 = vpop.f32.mrb[0].mxu0
        %807 = vmatprep.mubr.f32.mxu0 0.0
        %808 = vmatmul.mubr.f32.gmra.mrb[0].mxu0 %v540
        %v809 = vpop.f32.mrb[0].mxu0
        %v810 = vadd.f32 %v615, %v809
        %v811 = vpop.f32.mrb[0].mxu0
        %812 = vmatprep.mubr.f32.mxu0 0.0
        %813 = vmatmul.mubr.f32.gmra.mrb[0].mxu0 %v539
        %v814 = vpop.f32.mrb[0].mxu0
        %v815 = vadd.f32 %v615, %v814
        %v816 = vpop.f32.mrb[0].mxu0
        %817 = vmatprep.mubr.f32.mxu0 0.0
        %818 = vmatmul.mubr.f32.gmra.mrb[0].mxu0 %v538
        %v819 = vpop.f32.mrb[0].mxu0
        %v820 = vpop.f32.mrb[0].mxu0
        %821 = vmatprep.mubr.f32.mxu0 0.0
        %822 = vmatmul.mubr.f32.gmra.mrb[0].mxu0 %v537
        %v823 = vpop.f32.mrb[0].mxu0
        %v824 = vpop.f32.mrb[0].mxu0
        %825 = vdwg.mxu0
        %v826 = vmax.f32 %v684, 0.0
        %v827 = vmax.f32 %v689, 0.0
        %v828 = vmax.f32 %v702, 0.0
        %v829 = vmax.f32 %v707, 0.0
        %v830 = vmax.f32 %v720, 0.0
        %v831 = vmax.f32 %v725, 0.0
        %v832 = vmax.f32 %v738, 0.0
        %v833 = vmax.f32 %v743, 0.0
        %v834 = vmax.f32 %v756, 0.0
        %v835 = vmax.f32 %v761, 0.0
        %v836 = vmax.f32 %v774, 0.0
        %v837 = vmax.f32 %v779, 0.0
        %v838 = vmax.f32 %v792, 0.0
        %v839 = vmax.f32 %v797, 0.0
        %v840 = vmax.f32 %v810, 0.0
        %v841 = vmax.f32 %v815, 0.0
        %842 = vst [vmem:[%s288] sm:$0xff] %v826
        %843 = vst [vmem:[%s288 + $0x18] sm:$0xff] %v827
        %844 = vst [vmem:[%s288 + $0x30] sm:$0xff] %v828
        %845 = vst [vmem:[%s288 + $0x48] sm:$0xff] %v829
        %846 = vst [vmem:[%s288 + $0x60] sm:$0xff] %v830
        %847 = vst [vmem:[%s288 + $0x78] sm:$0xff] %v831
        %848 = vst [vmem:[%s288 + $0x90] sm:$0xff] %v832
        %849 = vst [vmem:[%s288 + $0xa8] sm:$0xff] %v833
        %850 = vst [vmem:[%s288 + $0xc0] sm:$0xff] %v834
        %851 = vst [vmem:[%s288 + $0xd8] sm:$0xff] %v835
        %852 = vst [vmem:[%s288 + $0xf0] sm:$0xff] %v836
        %853 = vst [vmem:[%s288 + $0x108] sm:$0xff] %v837
        %854 = vst [vmem:[%s288 + $0x120] sm:$0xff] %v838
        %855 = vst [vmem:[%s288 + $0x138] sm:$0xff] %v839
        %856 = vst [vmem:[%s288 + $0x150] sm:$0xff] %v840
        %857 = vst [vmem:[%s288 + $0x168] sm:$0xff] %v841
        %v858 = vrot.slane %v363, 3
        %v859 = vrot.slane %v364, 3
        %v860 = vrot.slane %v365, 3
        %v861 = vrot.slane %v366, 3
        %v862 = vrot.slane %v367, 3
        %v863 = vrot.slane %v368, 3
        %v864 = vrot.slane %v369, 3
        %v865 = vrot.slane %v370, 3
        %v866 = vrot.slane %v371, 3
        %v867 = vrot.slane %v372, 3
        %v868 = vrot.slane %v373, 3
        %v869 = vrot.slane %v374, 3
        %v870 = vrot.slane %v375, 3
        %v871 = vrot.slane %v376, 3
        %v872 = vrot.slane %v377, 3
        %v873 = vrot.slane %v378, 3
        %v874 = vrot.slane %v379, 3
        %v875 = vrot.slane %v380, 3
        %v876 = vrot.slane %v381, 3
        %v877 = vrot.slane %v382, 3
        %v878 = vrot.slane %v383, 3
        %v879 = vrot.slane %v384, 3
        %v880 = vrot.slane %v385, 3
        %v881 = vrot.slane %v386, 3
        %v882 = vrot.slane %v387, 3
        %v883 = vrot.slane %v388, 3
        %v884 = vrot.slane %v389, 3
        %v885 = vrot.slane %v390, 3
        %v886 = vrot.slane %v391, 3
        %v887 = vrot.slane %v392, 3
        %v888 = vrot.slane %v393, 3
        %v889 = vrot.slane %v394, 3
        %v890 = vrot.slane %v395, 3
        %v891 = vrot.slane %v396, 3
        %v892 = vrot.slane %v397, 3
        %v893 = vrot.slane %v398, 3
        %v894 = vrot.slane %v399, 3
        %v895 = vrot.slane %v400, 3
        %v896 = vrot.slane %v401, 3
        %v897 = vrot.slane %v402, 3
        %v898 = vrot.slane %v403, 3
        %v899 = vrot.slane %v404, 3
        %v900 = vrot.slane %v405, 3
        %v901 = vrot.slane %v406, 3
        %v902 = vrot.slane %v407, 3
        %v903 = vrot.slane %v408, 3
        %v904 = vrot.slane %v409, 3
        %v905 = vrot.slane %v410, 3
        %v906 = vrot.slane %v411, 3
        %v907 = vrot.slane %v412, 3
        %v908 = vrot.slane %v413, 3
        %v909 = vrot.slane %v414, 3
        %v910 = vrot.slane %v415, 3
        %v911 = vrot.slane %v416, 3
        %v912 = vrot.slane %v417, 3
        %v913 = vrot.slane %v418, 3
        %v914 = vrot.slane %v419, 3
        %vm915 = vcmp.lt.s32.totalorder %v512, 5
        %v916 = vsel %vm915, %v913, %v914
        %v917 = vsel %vm915, %v912, %v913
        %v918 = vsel %vm915, %v911, %v912
        %v919 = vsel %vm915, %v910, %v911
        %v920 = vsel %vm915, %v909, %v910
        %v921 = vsel %vm915, %v908, %v909
        %v922 = vsel %vm915, %v907, %v908
        %v923 = vsel %vm915, %v906, %v907
        %v924 = vsel %vm915, %v905, %v906
        %v925 = vsel %vm915, %v904, %v905
        %v926 = vsel %vm915, %v903, %v904
        %v927 = vsel %vm915, %v902, %v903
        %v928 = vsel %vm915, %v901, %v902
        %v929 = vsel %vm915, %v900, %v901
        %v930 = vsel %vm915, %v899, %v900
        %v931 = vsel %vm915, %v898, %v899
        %v932 = vsel %vm915, %v897, %v898
        %v933 = vsel %vm915, %v896, %v897
        %v934 = vsel %vm915, %v895, %v896
        %v935 = vsel %vm915, %v894, %v895
        %v936 = vsel %vm915, %v893, %v894
        %v937 = vsel %vm915, %v892, %v893
        %v938 = vsel %vm915, %v891, %v892
        %v939 = vsel %vm915, %v890, %v891
        %v940 = vsel %vm915, %v889, %v890
        %v941 = vsel %vm915, %v888, %v889
        %v942 = vsel %vm915, %v887, %v888
        %v943 = vsel %vm915, %v886, %v887
        %v944 = vsel %vm915, %v885, %v886
        %v945 = vsel %vm915, %v884, %v885
        %v946 = vsel %vm915, %v883, %v884
        %v947 = vsel %vm915, %v882, %v883
        %v948 = vsel %vm915, %v881, %v882
        %v949 = vsel %vm915, %v880, %v881
        %v950 = vsel %vm915, %v879, %v880
        %v951 = vsel %vm915, %v878, %v879
        %v952 = vsel %vm915, %v877, %v878
        %v953 = vsel %vm915, %v876, %v877
        %v954 = vsel %vm915, %v875, %v876
        %v955 = vsel %vm915, %v874, %v875
        %v956 = vsel %vm915, %v873, %v874
        %v957 = vsel %vm915, %v872, %v873
        %v958 = vsel %vm915, %v871, %v872
        %v959 = vsel %vm915, %v870, %v871
        %v960 = vsel %vm915, %v869, %v870
        %v961 = vsel %vm915, %v868, %v869
        %v962 = vsel %vm915, %v867, %v868
        %v963 = vsel %vm915, %v866, %v867
        %v964 = vsel %vm915, %v865, %v866
        %v965 = vsel %vm915, %v864, %v865
        %v966 = vsel %vm915, %v863, %v864
        %v967 = vsel %vm915, %v862, %v863
        %v968 = vsel %vm915, %v861, %v862
        %v969 = vsel %vm915, %v860, %v861
        %v970 = vsel %vm915, %v859, %v860
        %v971 = vsel %vm915, %v858, %v859
        %v972 = vrot.slane %v364, 1
        %v973 = vrot.slane %v365, 1
        %v974 = vrot.slane %v366, 1
        %v975 = vrot.slane %v367, 1
        %v976 = vrot.slane %v368, 1
        %v977 = vrot.slane %v369, 1
        %v978 = vrot.slane %v370, 1
        %v979 = vrot.slane %v371, 1
        %v980 = vrot.slane %v372, 1
        %v981 = vrot.slane %v373, 1
        %v982 = vrot.slane %v374, 1
        %v983 = vrot.slane %v375, 1
        %v984 = vrot.slane %v376, 1
        %v985 = vrot.slane %v377, 1
        %v986 = vrot.slane %v378, 1
        %v987 = vrot.slane %v379, 1
        %v988 = vrot.slane %v380, 1
        %v989 = vrot.slane %v381, 1
        %v990 = vrot.slane %v382, 1
        %v991 = vrot.slane %v383, 1
        %v992 = vrot.slane %v384, 1
        %v993 = vrot.slane %v385, 1
        %v994 = vrot.slane %v386, 1
        %v995 = vrot.slane %v387, 1
        %v996 = vrot.slane %v388, 1
        %v997 = vrot.slane %v389, 1
        %v998 = vrot.slane %v390, 1
        %v999 = vrot.slane %v391, 1
        %v1000 = vrot.slane %v392, 1
        %v1001 = vrot.slane %v393, 1
        %v1002 = vrot.slane %v394, 1
        %v1003 = vrot.slane %v395, 1
        %v1004 = vrot.slane %v396, 1
        %v1005 = vrot.slane %v397, 1
        %v1006 = vrot.slane %v398, 1
        %v1007 = vrot.slane %v399, 1
        %v1008 = vrot.slane %v400, 1
        %v1009 = vrot.slane %v401, 1
        %v1010 = vrot.slane %v402, 1
        %v1011 = vrot.slane %v403, 1
        %v1012 = vrot.slane %v404, 1
        %v1013 = vrot.slane %v405, 1
        %v1014 = vrot.slane %v406, 1
        %v1015 = vrot.slane %v407, 1
        %v1016 = vrot.slane %v408, 1
        %v1017 = vrot.slane %v409, 1
        %v1018 = vrot.slane %v410, 1
        %v1019 = vrot.slane %v411, 1
        %v1020 = vrot.slane %v412, 1
        %v1021 = vrot.slane %v413, 1
        %v1022 = vrot.slane %v414, 1
        %v1023 = vrot.slane %v415, 1
        %v1024 = vrot.slane %v416, 1
        %v1025 = vrot.slane %v417, 1
        %v1026 = vrot.slane %v418, 1
        %v1027 = vrot.slane %v419, 1
        %v1028 = vrot.slane %v420, 1
        %vm1029 = vcmp.lt.s32.totalorder %v512, 7
        %v1030 = vsel %vm1029, %v1027, %v1028
        %v1031 = vsel %vm1029, %v1026, %v1027
        %v1032 = vsel %vm1029, %v1025, %v1026
        %v1033 = vsel %vm1029, %v1024, %v1025
        %v1034 = vsel %vm1029, %v1023, %v1024
        %v1035 = vsel %vm1029, %v1022, %v1023
        %v1036 = vsel %vm1029, %v1021, %v1022
        %v1037 = vsel %vm1029, %v1020, %v1021
        %v1038 = vsel %vm1029, %v1019, %v1020
        %v1039 = vsel %vm1029, %v1018, %v1019
        %v1040 = vsel %vm1029, %v1017, %v1018
        %v1041 = vsel %vm1029, %v1016, %v1017
        %v1042 = vsel %vm1029, %v1015, %v1016
        %v1043 = vsel %vm1029, %v1014, %v1015
        %v1044 = vsel %vm1029, %v1013, %v1014
        %v1045 = vsel %vm1029, %v1012, %v1013
        %v1046 = vsel %vm1029, %v1011, %v1012
        %v1047 = vsel %vm1029, %v1010, %v1011
        %v1048 = vsel %vm1029, %v1009, %v1010
        %v1049 = vsel %vm1029, %v1008, %v1009
        %v1050 = vsel %vm1029, %v1007, %v1008
        %v1051 = vsel %vm1029, %v1006, %v1007
        %v1052 = vsel %vm1029, %v1005, %v1006
        %v1053 = vsel %vm1029, %v1004, %v1005
        %v1054 = vsel %vm1029, %v1003, %v1004
        %v1055 = vsel %vm1029, %v1002, %v1003
        %v1056 = vsel %vm1029, %v1001, %v1002
        %v1057 = vsel %vm1029, %v1000, %v1001
        %v1058 = vsel %vm1029, %v999, %v1000
        %v1059 = vsel %vm1029, %v998, %v999
        %v1060 = vsel %vm1029, %v997, %v998
        %v1061 = vsel %vm1029, %v996, %v997
        %v1062 = vsel %vm1029, %v995, %v996
        %v1063 = vsel %vm1029, %v994, %v995
        %v1064 = vsel %vm1029, %v993, %v994
        %v1065 = vsel %vm1029, %v992, %v993
        %v1066 = vsel %vm1029, %v991, %v992
        %v1067 = vsel %vm1029, %v990, %v991
        %v1068 = vsel %vm1029, %v989, %v990
        %v1069 = vsel %vm1029, %v988, %v989
        %v1070 = vsel %vm1029, %v987, %v988
        %v1071 = vsel %vm1029, %v986, %v987
        %v1072 = vsel %vm1029, %v985, %v986
        %v1073 = vsel %vm1029, %v984, %v985
        %v1074 = vsel %vm1029, %v983, %v984
        %v1075 = vsel %vm1029, %v982, %v983
        %v1076 = vsel %vm1029, %v981, %v982
        %v1077 = vsel %vm1029, %v980, %v981
        %v1078 = vsel %vm1029, %v979, %v980
        %v1079 = vsel %vm1029, %v978, %v979
        %v1080 = vsel %vm1029, %v977, %v978
        %v1081 = vsel %vm1029, %v976, %v977
        %v1082 = vsel %vm1029, %v975, %v976
        %v1083 = vsel %vm1029, %v974, %v975
        %v1084 = vsel %vm1029, %v973, %v974
        %v1085 = vsel %vm1029, %v972, %v973
        %v1086 = vld [vmem:[#allocation7] sm:$0xff]
        %v1087 = vld [vmem:[#allocation7 + $0x8] sm:$0xff]
        %v1088 = vld [vmem:[#allocation7 + $0x10] sm:$0xff]
        %v1089 = vld [vmem:[#allocation7 + $0x18] sm:$0xff]
        %v1090 = vld [vmem:[#allocation7 + $0x20] sm:$0xff]
        %v1091 = vld [vmem:[#allocation7 + $0x28] sm:$0xff]
        %v1092 = vld [vmem:[#allocation7 + $0x30] sm:$0xff]
        %v1093 = vld [vmem:[#allocation7 + $0x38] sm:$0xff]
        %v1094 = vld [vmem:[#allocation7 + $0x40] sm:$0xff]
        %v1095 = vld [vmem:[#allocation7 + $0x48] sm:$0xff]
        %v1096 = vld [vmem:[#allocation7 + $0x50] sm:$0xff]
        %v1097 = vld [vmem:[#allocation7 + $0x58] sm:$0xff]
        %v1098 = vld [vmem:[#allocation7 + $0x60] sm:$0xff]
        %v1099 = vld [vmem:[#allocation7 + $0x68] sm:$0xff]
        %v1100 = vld [vmem:[#allocation7 + $0x70] sm:$0xff]
        %v1101 = vld [vmem:[#allocation7 + $0x78] sm:$0xff]
        %v1102 = vld [vmem:[#allocation7 + $0x80] sm:$0xff]
        %v1103 = vld [vmem:[#allocation7 + $0x88] sm:$0xff]
        %v1104 = vld [vmem:[#allocation7 + $0x90] sm:$0xff]
        %v1105 = vld [vmem:[#allocation7 + $0x98] sm:$0xff]
        %v1106 = vld [vmem:[#allocation7 + $0xa0] sm:$0xff]
        %v1107 = vld [vmem:[#allocation7 + $0xa8] sm:$0xff]
        %v1108 = vld [vmem:[#allocation7 + $0xb0] sm:$0xff]
        %v1109 = vld [vmem:[#allocation7 + $0xb8] sm:$0xff]
        %v1110 = vld [vmem:[#allocation7 + $0xc0] sm:$0xff]
        %v1111 = vld [vmem:[#allocation7 + $0xc8] sm:$0xff]
        %v1112 = vld [vmem:[#allocation7 + $0xd0] sm:$0xff]
        %v1113 = vld [vmem:[#allocation7 + $0xd8] sm:$0xff]
        %v1114 = vld [vmem:[#allocation7 + $0xe0] sm:$0xff]
        %v1115 = vld [vmem:[#allocation7 + $0xe8] sm:$0xff]
        %v1116 = vld [vmem:[#allocation7 + $0xf0] sm:$0xff]
        %v1117 = vld [vmem:[#allocation7 + $0xf8] sm:$0xff]
        %v1118 = vld [vmem:[#allocation7 + $0x100] sm:$0xff]
        %v1119 = vld [vmem:[#allocation7 + $0x108] sm:$0xff]
        %v1120 = vld [vmem:[#allocation7 + $0x110] sm:$0xff]
        %v1121 = vld [vmem:[#allocation7 + $0x118] sm:$0xff]
        %v1122 = vld [vmem:[#allocation7 + $0x120] sm:$0xff]
        %v1123 = vld [vmem:[#allocation7 + $0x128] sm:$0xff]
        %v1124 = vld [vmem:[#allocation7 + $0x130] sm:$0xff]
        %v1125 = vld [vmem:[#allocation7 + $0x138] sm:$0xff]
        %v1126 = vld [vmem:[#allocation7 + $0x140] sm:$0xff]
        %v1127 = vld [vmem:[#allocation7 + $0x148] sm:$0xff]
        %v1128 = vld [vmem:[#allocation7 + $0x150] sm:$0xff]
        %v1129 = vld [vmem:[#allocation7 + $0x158] sm:$0xff]
        %v1130 = vld [vmem:[#allocation7 + $0x160] sm:$0xff]
        %v1131 = vld [vmem:[#allocation7 + $0x168] sm:$0xff]
        %v1132 = vld [vmem:[#allocation7 + $0x170] sm:$0xff]
        %v1133 = vld [vmem:[#allocation7 + $0x178] sm:$0xff]
        %s1134 = scalar_lea.vmem [#allocation7], 384
        %v1135 = vld [vmem:[%s1134] sm:$0xff]
        %v1136 = vld [vmem:[%s1134 + $0x8] sm:$0xff]
        %v1137 = vld [vmem:[%s1134 + $0x10] sm:$0xff]
        %v1138 = vld [vmem:[%s1134 + $0x18] sm:$0xff]
        %v1139 = vld [vmem:[%s1134 + $0x20] sm:$0xff]
        %v1140 = vld [vmem:[%s1134 + $0x28] sm:$0xff]
        %v1141 = vld [vmem:[%s1134 + $0x30] sm:$0xff]
        %v1142 = vld [vmem:[%s1134 + $0x38] sm:$0xff]
        %v1143 = vld [vmem:[%s1134 + $0x40] sm:$0xff]
        %v1144 = vld [vmem:[%s1134 + $0x48] sm:$0xff]
        %v1145 = vld [vmem:[%s1134 + $0x50] sm:$0xff]
        %v1146 = vld [vmem:[%s1134 + $0x58] sm:$0xff]
        %v1147 = vld [vmem:[%s1134 + $0x60] sm:$0xff]
        %v1148 = vld [vmem:[%s1134 + $0x68] sm:$0xff]
        %v1149 = vld [vmem:[%s1134 + $0x70] sm:$0xff]
        %v1150 = vld [vmem:[%s1134 + $0x78] sm:$0xff]
        %v1151 = vld [vmem:[%s1134 + $0x80] sm:$0xff]
        %v1152 = vld [vmem:[%s1134 + $0x88] sm:$0xff]
        %v1153 = vld [vmem:[%s1134 + $0x90] sm:$0xff]
        %v1154 = vld [vmem:[%s1134 + $0x98] sm:$0xff]
        %v1155 = vld [vmem:[%s1134 + $0xa0] sm:$0xff]
        %v1156 = vld [vmem:[%s1134 + $0xa8] sm:$0xff]
        %v1157 = vld [vmem:[%s1134 + $0xb0] sm:$0xff]
        %v1158 = vld [vmem:[%s1134 + $0xb8] sm:$0xff]
        %v1159 = vld [vmem:[%s1134 + $0xc0] sm:$0xff]
        %v1160 = vld [vmem:[%s1134 + $0xc8] sm:$0xff]
        %v1161 = vld [vmem:[%s1134 + $0xd0] sm:$0xff]
        %v1162 = vld [vmem:[%s1134 + $0xd8] sm:$0xff]
        %v1163 = vld [vmem:[%s1134 + $0xe0] sm:$0xff]
        %v1164 = vld [vmem:[%s1134 + $0xe8] sm:$0xff]
        %v1165 = vld [vmem:[%s1134 + $0xf0] sm:$0xff]
        %v1166 = vld [vmem:[%s1134 + $0xf8] sm:$0xff]
        %v1167 = vld [vmem:[%s1134 + $0x100] sm:$0xff]
        %v1168 = vld [vmem:[%s1134 + $0x108] sm:$0xff]
        %v1169 = vld [vmem:[%s1134 + $0x110] sm:$0xff]
        %v1170 = vld [vmem:[%s1134 + $0x118] sm:$0xff]
        %v1171 = vld [vmem:[%s1134 + $0x120] sm:$0xff]
        %v1172 = vld [vmem:[%s1134 + $0x128] sm:$0xff]
        %v1173 = vld [vmem:[%s1134 + $0x130] sm:$0xff]
        %v1174 = vld [vmem:[%s1134 + $0x138] sm:$0xff]
        %v1175 = vld [vmem:[%s1134 + $0x140] sm:$0xff]
        %v1176 = vld [vmem:[%s1134 + $0x148] sm:$0xff]
        %v1177 = vld [vmem:[%s1134 + $0x150] sm:$0xff]
        %v1178 = vld [vmem:[%s1134 + $0x158] sm:$0xff]
        %v1179 = vld [vmem:[%s1134 + $0x160] sm:$0xff]
        %v1180 = vld [vmem:[%s1134 + $0x168] sm:$0xff]
        %v1181 = vld [vmem:[%s1134 + $0x170] sm:$0xff]
        %v1182 = vld [vmem:[%s1134 + $0x178] sm:$0xff]
        %1183 = vmatprep.subr.mxu0 0.0
        %1184 = vmatpush1.msra.mxu0 %v1135
        %1185 = vmatprep.subr.mxu0 0.0
        %1186 = vmatpush1.msra.mxu0 %v1136
        %1187 = vmatprep.subr.mxu0 0.0
        %1188 = vmatpush1.msra.mxu0 %v1137
        %1189 = vmatprep.subr.mxu0 0.0
        %1190 = vmatpush1.msra.mxu0 %v1138
        %1191 = vmatprep.subr.mxu0 0.0
        %1192 = vmatpush1.msra.mxu0 %v1139
        %1193 = vmatprep.subr.mxu0 0.0
        %1194 = vmatpush1.msra.mxu0 %v1140
        %1195 = vmatprep.subr.mxu0 0.0
        %1196 = vmatpush1.msra.mxu0 %v1141
        %1197 = vmatprep.subr.mxu0 0.0
        %1198 = vmatpush1.msra.mxu0 %v1142
        %1199 = vmatprep.subr.mxu0 0.0
        %1200 = vmatpush1.msra.mxu0 %v1143
        %1201 = vmatprep.subr.mxu0 0.0
        %1202 = vmatpush1.msra.mxu0 %v1144
        %1203 = vmatprep.subr.mxu0 0.0
        %1204 = vmatpush1.msra.mxu0 %v1145
        %1205 = vmatprep.subr.mxu0 0.0
        %1206 = vmatpush1.msra.mxu0 %v1146
        %1207 = vmatprep.subr.mxu0 0.0
        %1208 = vmatpush1.msra.mxu0 %v1147
        %1209 = vmatprep.subr.mxu0 0.0
        %1210 = vmatpush1.msra.mxu0 %v1148
        %1211 = vmatprep.subr.mxu0 0.0
        %1212 = vmatpush1.msra.mxu0 %v1149
        %1213 = vmatprep.subr.mxu0 0.0
        %1214 = vmatpush1.msra.mxu0 %v1150
        %1215 = vmatprep.subr.mxu0 0.0
        %1216 = vmatpush1.msra.mxu0 %v1151
        %1217 = vmatprep.subr.mxu0 0.0
        %1218 = vmatpush1.msra.mxu0 %v1152
        %1219 = vmatprep.subr.mxu0 0.0
        %1220 = vmatpush1.msra.mxu0 %v1153
        %1221 = vmatprep.subr.mxu0 0.0
        %1222 = vmatpush1.msra.mxu0 %v1154
        %1223 = vmatprep.subr.mxu0 0.0
        %1224 = vmatpush1.msra.mxu0 %v1155
        %1225 = vmatprep.subr.mxu0 0.0
        %1226 = vmatpush1.msra.mxu0 %v1156
        %1227 = vmatprep.subr.mxu0 0.0
        %1228 = vmatpush1.msra.mxu0 %v1157
        %1229 = vmatprep.subr.mxu0 0.0
        %1230 = vmatpush1.msra.mxu0 %v1158
        %1231 = vmatprep.subr.mxu0 0.0
        %1232 = vmatpush1.msra.mxu0 %v1159
        %1233 = vmatprep.subr.mxu0 0.0
        %1234 = vmatpush1.msra.mxu0 %v1160
        %1235 = vmatprep.subr.mxu0 0.0
        %1236 = vmatpush1.msra.mxu0 %v1161
        %1237 = vmatprep.subr.mxu0 0.0
        %1238 = vmatpush1.msra.mxu0 %v1162
        %1239 = vmatprep.subr.mxu0 0.0
        %1240 = vmatpush1.msra.mxu0 %v1163
        %1241 = vmatprep.subr.mxu0 0.0
        %1242 = vmatpush1.msra.mxu0 %v1164
        %1243 = vmatprep.subr.mxu0 0.0
        %1244 = vmatpush1.msra.mxu0 %v1165
        %1245 = vmatprep.subr.mxu0 0.0
        %1246 = vmatpush1.msra.mxu0 %v1166
        %1247 = vmatprep.mubr.f32.mxu0 %v568
        %1248 = vmatmul.mubr.f32.gmra.mrb[0].mxu0 %v959
        %v1249 = vpop.f32.mrb[0].mxu0
        %v1250 = vadd.f32 0.0, %v1249
        %v1251 = vpop.f32.mrb[0].mxu0
        %1252 = vmatprep.mubr.f32.mxu0 %v567
        %1253 = vmatmul.mubr.f32.gmra.mrb[0].mxu0 %v958
        %v1254 = vpop.f32.mrb[0].mxu0
        %v1255 = vadd.f32 0.0, %v1254
        %v1256 = vpop.f32.mrb[0].mxu0
        %1257 = vmatprep.mubr.f32.mxu0 %v566
        %1258 = vmatmul.mubr.f32.gmra.mrb[0].mxu0 %v957
        %v1259 = vpop.f32.mrb[0].mxu0
        %v1260 = vpop.f32.mrb[0].mxu0
        %1261 = vmatprep.mubr.f32.mxu0 %v565
        %1262 = vmatmul.mubr.f32.gmra.mrb[0].mxu0 %v956
        %v1263 = vpop.f32.mrb[0].mxu0
        %v1264 = vpop.f32.mrb[0].mxu0
        %1265 = vmatprep.mubr.f32.mxu0 %v564
        %1266 = vmatmul.mubr.f32.gmra.mrb[0].mxu0 %v955
        %v1267 = vpop.f32.mrb[0].mxu0
        %v1268 = vadd.f32 0.0, %v1267
        %v1269 = vpop.f32.mrb[0].mxu0
        %1270 = vmatprep.mubr.f32.mxu0 %v563
        %1271 = vmatmul.mubr.f32.gmra.mrb[0].mxu0 %v954
        %v1272 = vpop.f32.mrb[0].mxu0
        %v1273 = vadd.f32 0.0, %v1272
        %v1274 = vpop.f32.mrb[0].mxu0
        %1275 = vmatprep.mubr.f32.mxu0 %v562
        %1276 = vmatmul.mubr.f32.gmra.mrb[0].mxu0 %v953
        %v1277 = vpop.f32.mrb[0].mxu0
        %v1278 = vpop.f32.mrb[0].mxu0
        %1279 = vmatprep.mubr.f32.mxu0 %v561
        %1280 = vmatmul.mubr.f32.gmra.mrb[0].mxu0 %v952
        %v1281 = vpop.f32.mrb[0].mxu0
        %v1282 = vpop.f32.mrb[0].mxu0
        %1283 = vmatprep.mubr.f32.mxu0 %v560
        %1284 = vmatmul.mubr.f32.gmra.mrb[0].mxu0 %v951
        %v1285 = vpop.f32.mrb[0].mxu0
        %v1286 = vadd.f32 0.0, %v1285
        %v1287 = vpop.f32.mrb[0].mxu0
        %1288 = vmatprep.mubr.f32.mxu0 %v559
        %1289 = vmatmul.mubr.f32.gmra.mrb[0].mxu0 %v950
        %v1290 = vpop.f32.mrb[0].mxu0
        %v1291 = vadd.f32 0.0, %v1290
        %v1292 = vpop.f32.mrb[0].mxu0
        %1293 = vmatprep.mubr.f32.mxu0 %v558
        %1294 = vmatmul.mubr.f32.gmra.mrb[0].mxu0 %v949
        %v1295 = vpop.f32.mrb[0].mxu0
        %v1296 = vpop.f32.mrb[0].mxu0
        %1297 = vmatprep.mubr.f32.mxu0 %v557
        %1298 = vmatmul.mubr.f32.gmra.mrb[0].mxu0 %v948
        %v1299 = vpop.f32.mrb[0].mxu0
        %v1300 = vpop.f32.mrb[0].mxu0
        %1301 = vmatprep.mubr.f32.mxu0 %v556
        %1302 = vmatmul.mubr.f32.gmra.mrb[0].mxu0 %v947
        %v1303 = vpop.f32.mrb[0].mxu0
        %v1304 = vadd.f32 0.0, %v1303
        %v1305 = vpop.f32.mrb[0].mxu0
        %1306 = vmatprep.mubr.f32.mxu0 %v555
        %1307 = vmatmul.mubr.f32.gmra.mrb[0].mxu0 %v946
        %v1308 = vpop.f32.mrb[0].mxu0
        %v1309 = vadd.f32 0.0, %v1308
        %v1310 = vpop.f32.mrb[0].mxu0
        %1311 = vmatprep.mubr.f32.mxu0 %v554
        %1312 = vmatmul.mubr.f32.gmra.mrb[0].mxu0 %v945
        %v1313 = vpop.f32.mrb[0].mxu0
        %v1314 = vpop.f32.mrb[0].mxu0
        %1315 = vmatprep.mubr.f32.mxu0 %v553
        %1316 = vmatmul.mubr.f32.gmra.mrb[0].mxu0 %v944
        %v1317 = vpop.f32.mrb[0].mxu0
        %v1318 = vpop.f32.mrb[0].mxu0
        %1319 = vmatprep.mubr.f32.mxu0 %v552
        %1320 = vmatmul.mubr.f32.gmra.mrb[0].mxu0 %v943
        %v1321 = vpop.f32.mrb[0].mxu0
        %v1322 = vadd.f32 0.0, %v1321
        %v1323 = vpop.f32.mrb[0].mxu0
        %1324 = vmatprep.mubr.f32.mxu0 %v551
        %1325 = vmatmul.mubr.f32.gmra.mrb[0].mxu0 %v942
        %v1326 = vpop.f32.mrb[0].mxu0
        %v1327 = vadd.f32 0.0, %v1326
        %v1328 = vpop.f32.mrb[0].mxu0
        %1329 = vmatprep.mubr.f32.mxu0 %v550
        %1330 = vmatmul.mubr.f32.gmra.mrb[0].mxu0 %v941
        %v1331 = vpop.f32.mrb[0].mxu0
        %v1332 = vpop.f32.mrb[0].mxu0
        %1333 = vmatprep.mubr.f32.mxu0 %v549
        %1334 = vmatmul.mubr.f32.gmra.mrb[0].mxu0 %v940
        %v1335 = vpop.f32.mrb[0].mxu0
        %v1336 = vpop.f32.mrb[0].mxu0
        %1337 = vmatprep.mubr.f32.mxu0 %v548
        %1338 = vmatmul.mubr.f32.gmra.mrb[0].mxu0 %v939
        %v1339 = vpop.f32.mrb[0].mxu0
        %v1340 = vadd.f32 0.0, %v1339
        %v1341 = vpop.f32.mrb[0].mxu0
        %1342 = vmatprep.mubr.f32.mxu0 %v547
        %1343 = vmatmul.mubr.f32.gmra.mrb[0].mxu0 %v938
        %v1344 = vpop.f32.mrb[0].mxu0
        %v1345 = vadd.f32 0.0, %v1344
        %v1346 = vpop.f32.mrb[0].mxu0
        %1347 = vmatprep.mubr.f32.mxu0 %v546
        %1348 = vmatmul.mubr.f32.gmra.mrb[0].mxu0 %v937
        %v1349 = vpop.f32.mrb[0].mxu0
        %v1350 = vpop.f32.mrb[0].mxu0
        %1351 = vmatprep.mubr.f32.mxu0 %v545
        %1352 = vmatmul.mubr.f32.gmra.mrb[0].mxu0 %v936
        %v1353 = vpop.f32.mrb[0].mxu0
        %v1354 = vpop.f32.mrb[0].mxu0
        %1355 = vmatprep.mubr.f32.mxu0 %v544
        %1356 = vmatmul.mubr.f32.gmra.mrb[0].mxu0 %v935
        %v1357 = vpop.f32.mrb[0].mxu0
        %v1358 = vadd.f32 0.0, %v1357
        %v1359 = vpop.f32.mrb[0].mxu0
        %1360 = vmatprep.mubr.f32.mxu0 %v543
        %1361 = vmatmul.mubr.f32.gmra.mrb[0].mxu0 %v934
        %v1362 = vpop.f32.mrb[0].mxu0
        %v1363 = vadd.f32 0.0, %v1362
        %v1364 = vpop.f32.mrb[0].mxu0
        %1365 = vmatprep.mubr.f32.mxu0 %v542
        %1366 = vmatmul.mubr.f32.gmra.mrb[0].mxu0 %v933
        %v1367 = vpop.f32.mrb[0].mxu0
        %v1368 = vpop.f32.mrb[0].mxu0
        %1369 = vmatprep.mubr.f32.mxu0 %v541
        %1370 = vmatmul.mubr.f32.gmra.mrb[0].mxu0 %v932
        %v1371 = vpop.f32.mrb[0].mxu0
        %v1372 = vpop.f32.mrb[0].mxu0
        %1373 = vmatprep.mubr.f32.mxu0 %v540
        %1374 = vmatmul.mubr.f32.gmra.mrb[0].mxu0 %v931
        %v1375 = vpop.f32.mrb[0].mxu0
        %v1376 = vadd.f32 0.0, %v1375
        %v1377 = vpop.f32.mrb[0].mxu0
        %1378 = vmatprep.mubr.f32.mxu0 %v539
        %1379 = vmatmul.mubr.f32.gmra.mrb[0].mxu0 %v930
        %v1380 = vpop.f32.mrb[0].mxu0
        %v1381 = vadd.f32 0.0, %v1380
        %v1382 = vpop.f32.mrb[0].mxu0
        %1383 = vmatprep.mubr.f32.mxu0 %v538
        %1384 = vmatmul.mubr.f32.gmra.mrb[0].mxu0 %v929
        %v1385 = vpop.f32.mrb[0].mxu0
        %v1386 = vpop.f32.mrb[0].mxu0
        %1387 = vmatprep.mubr.f32.mxu0 %v537
        %1388 = vmatmul.mubr.f32.gmra.mrb[0].mxu0 %v928
        %v1389 = vpop.f32.mrb[0].mxu0
        %v1390 = vpop.f32.mrb[0].mxu0
        %1391 = vdwg.mxu0
        %1392 = vmatprep.subr.mxu0 0.0
        %1393 = vmatpush1.msra.mxu0 %v1167
        %1394 = vmatprep.subr.mxu0 0.0
        %1395 = vmatpush1.msra.mxu0 %v1168
        %1396 = vmatprep.subr.mxu0 0.0
        %1397 = vmatpush1.msra.mxu0 %v1169
        %1398 = vmatprep.subr.mxu0 0.0
        %1399 = vmatpush1.msra.mxu0 %v1170
        %1400 = vmatprep.subr.mxu0 0.0
        %1401 = vmatpush1.msra.mxu0 %v1171
        %1402 = vmatprep.subr.mxu0 0.0
        %1403 = vmatpush1.msra.mxu0 %v1172
        %1404 = vmatprep.subr.mxu0 0.0
        %1405 = vmatpush1.msra.mxu0 %v1173
        %1406 = vmatprep.subr.mxu0 0.0
        %1407 = vmatpush1.msra.mxu0 %v1174
        %1408 = vmatprep.subr.mxu0 0.0
        %1409 = vmatpush1.msra.mxu0 %v1175
        %1410 = vmatprep.subr.mxu0 0.0
        %1411 = vmatpush1.msra.mxu0 %v1176
        %1412 = vmatprep.subr.mxu0 0.0
        %1413 = vmatpush1.msra.mxu0 %v1177
        %1414 = vmatprep.subr.mxu0 0.0
        %1415 = vmatpush1.msra.mxu0 %v1178
        %1416 = vmatprep.subr.mxu0 0.0
        %1417 = vmatpush1.msra.mxu0 %v1179
        %1418 = vmatprep.subr.mxu0 0.0
        %1419 = vmatpush1.msra.mxu0 %v1180
        %1420 = vmatprep.subr.mxu0 0.0
        %1421 = vmatpush1.msra.mxu0 %v1181
        %1422 = vmatprep.subr.mxu0 0.0
        %1423 = vmatpush1.msra.mxu0 %v1182
        %1424 = vmatprep.subr.mxu0 0.0
        %1425 = vmatpush1.msra.mxu0 0.0
        %1426 = vmatprep.subr.mxu0 0.0
        %1427 = vmatpush1.msra.mxu0 0.0
        %1428 = vmatprep.subr.mxu0 0.0
        %1429 = vmatpush1.msra.mxu0 0.0
        %1430 = vmatprep.subr.mxu0 0.0
        %1431 = vmatpush1.msra.mxu0 0.0
        %1432 = vmatprep.subr.mxu0 0.0
        %1433 = vmatpush1.msra.mxu0 0.0
        %1434 = vmatprep.subr.mxu0 0.0
        %1435 = vmatpush1.msra.mxu0 0.0
        %1436 = vmatprep.subr.mxu0 0.0
        %1437 = vmatpush1.msra.mxu0 0.0
        %1438 = vmatprep.subr.mxu0 0.0
        %1439 = vmatpush1.msra.mxu0 0.0
        %1440 = vmatprep.subr.mxu0 0.0
        %1441 = vmatpush1.msra.mxu0 0.0
        %1442 = vmatprep.subr.mxu0 0.0
        %1443 = vmatpush1.msra.mxu0 0.0
        %1444 = vmatprep.subr.mxu0 0.0
        %1445 = vmatpush1.msra.mxu0 0.0
        %1446 = vmatprep.subr.mxu0 0.0
        %1447 = vmatpush1.msra.mxu0 0.0
        %1448 = vmatprep.subr.mxu0 0.0
        %1449 = vmatpush1.msra.mxu0 0.0
        %1450 = vmatprep.subr.mxu0 0.0
        %1451 = vmatpush1.msra.mxu0 0.0
        %1452 = vmatprep.subr.mxu0 0.0
        %1453 = vmatpush1.msra.mxu0 0.0
        %1454 = vmatprep.subr.mxu0 0.0
        %1455 = vmatpush1.msra.mxu0 0.0
        %1456 = vmatprep.mubr.f32.mxu0 0.0
        %1457 = vmatmul.mubr.f32.gmra.mrb[0].mxu0 %v1073
        %v1458 = vpop.f32.mrb[0].mxu0
        %v1459 = vadd.f32 %v1250, %v1458
        %v1460 = vpop.f32.mrb[0].mxu0
        %1461 = vmatprep.mubr.f32.mxu0 0.0
        %1462 = vmatmul.mubr.f32.gmra.mrb[0].mxu0 %v1072
        %v1463 = vpop.f32.mrb[0].mxu0
        %v1464 = vadd.f32 %v1255, %v1463
        %v1465 = vpop.f32.mrb[0].mxu0
        %1466 = vmatprep.mubr.f32.mxu0 0.0
        %1467 = vmatmul.mubr.f32.gmra.mrb[0].mxu0 %v1071
        %v1468 = vpop.f32.mrb[0].mxu0
        %v1469 = vpop.f32.mrb[0].mxu0
        %1470 = vmatprep.mubr.f32.mxu0 0.0
        %1471 = vmatmul.mubr.f32.gmra.mrb[0].mxu0 %v1070
        %v1472 = vpop.f32.mrb[0].mxu0
        %v1473 = vpop.f32.mrb[0].mxu0
        %1474 = vmatprep.mubr.f32.mxu0 0.0
        %1475 = vmatmul.mubr.f32.gmra.mrb[0].mxu0 %v1069
        %v1476 = vpop.f32.mrb[0].mxu0
        %v1477 = vadd.f32 %v1268, %v1476
        %v1478 = vpop.f32.mrb[0].mxu0
        %1479 = vmatprep.mubr.f32.mxu0 0.0
        %1480 = vmatmul.mubr.f32.gmra.mrb[0].mxu0 %v1068
        %v1481 = vpop.f32.mrb[0].mxu0
        %v1482 = vadd.f32 %v1273, %v1481
        %v1483 = vpop.f32.mrb[0].mxu0
        %1484 = vmatprep.mubr.f32.mxu0 0.0
        %1485 = vmatmul.mubr.f32.gmra.mrb[0].mxu0 %v1067
        %v1486 = vpop.f32.mrb[0].mxu0
        %v1487 = vpop.f32.mrb[0].mxu0
        %1488 = vmatprep.mubr.f32.mxu0 0.0
        %1489 = vmatmul.mubr.f32.gmra.mrb[0].mxu0 %v1066
        %v1490 = vpop.f32.mrb[0].mxu0
        %v1491 = vpop.f32.mrb[0].mxu0
        %1492 = vmatprep.mubr.f32.mxu0 0.0
        %1493 = vmatmul.mubr.f32.gmra.mrb[0].mxu0 %v1065
        %v1494 = vpop.f32.mrb[0].mxu0
        %v1495 = vadd.f32 %v1286, %v1494
        %v1496 = vpop.f32.mrb[0].mxu0
        %1497 = vmatprep.mubr.f32.mxu0 0.0
        %1498 = vmatmul.mubr.f32.gmra.mrb[0].mxu0 %v1064
        %v1499 = vpop.f32.mrb[0].mxu0
        %v1500 = vadd.f32 %v1291, %v1499
        %v1501 = vpop.f32.mrb[0].mxu0
        %1502 = vmatprep.mubr.f32.mxu0 0.0
        %1503 = vmatmul.mubr.f32.gmra.mrb[0].mxu0 %v1063
        %v1504 = vpop.f32.mrb[0].mxu0
        %v1505 = vpop.f32.mrb[0].mxu0
        %1506 = vmatprep.mubr.f32.mxu0 0.0
        %1507 = vmatmul.mubr.f32.gmra.mrb[0].mxu0 %v1062
        %v1508 = vpop.f32.mrb[0].mxu0
        %v1509 = vpop.f32.mrb[0].mxu0
        %1510 = vmatprep.mubr.f32.mxu0 0.0
        %1511 = vmatmul.mubr.f32.gmra.mrb[0].mxu0 %v1061
        %v1512 = vpop.f32.mrb[0].mxu0
        %v1513 = vadd.f32 %v1304, %v1512
        %v1514 = vpop.f32.mrb[0].mxu0
        %1515 = vmatprep.mubr.f32.mxu0 0.0
        %1516 = vmatmul.mubr.f32.gmra.mrb[0].mxu0 %v1060
        %v1517 = vpop.f32.mrb[0].mxu0
        %v1518 = vadd.f32 %v1309, %v1517
        %v1519 = vpop.f32.mrb[0].mxu0
        %1520 = vmatprep.mubr.f32.mxu0 0.0
        %1521 = vmatmul.mubr.f32.gmra.mrb[0].mxu0 %v1059
        %v1522 = vpop.f32.mrb[0].mxu0
        %v1523 = vpop.f32.mrb[0].mxu0
        %1524 = vmatprep.mubr.f32.mxu0 0.0
        %1525 = vmatmul.mubr.f32.gmra.mrb[0].mxu0 %v1058
        %v1526 = vpop.f32.mrb[0].mxu0
        %v1527 = vpop.f32.mrb[0].mxu0
        %1528 = vmatprep.mubr.f32.mxu0 0.0
        %1529 = vmatmul.mubr.f32.gmra.mrb[0].mxu0 %v1057
        %v1530 = vpop.f32.mrb[0].mxu0
        %v1531 = vadd.f32 %v1322, %v1530
        %v1532 = vpop.f32.mrb[0].mxu0
        %1533 = vmatprep.mubr.f32.mxu0 0.0
        %1534 = vmatmul.mubr.f32.gmra.mrb[0].mxu0 %v1056
        %v1535 = vpop.f32.mrb[0].mxu0
        %v1536 = vadd.f32 %v1327, %v1535
        %v1537 = vpop.f32.mrb[0].mxu0
        %1538 = vmatprep.mubr.f32.mxu0 0.0
        %1539 = vmatmul.mubr.f32.gmra.mrb[0].mxu0 %v1055
        %v1540 = vpop.f32.mrb[0].mxu0
        %v1541 = vpop.f32.mrb[0].mxu0
        %1542 = vmatprep.mubr.f32.mxu0 0.0
        %1543 = vmatmul.mubr.f32.gmra.mrb[0].mxu0 %v1054
        %v1544 = vpop.f32.mrb[0].mxu0
        %v1545 = vpop.f32.mrb[0].mxu0
        %1546 = vmatprep.mubr.f32.mxu0 0.0
        %1547 = vmatmul.mubr.f32.gmra.mrb[0].mxu0 %v1053
        %v1548 = vpop.f32.mrb[0].mxu0
        %v1549 = vadd.f32 %v1340, %v1548
        %v1550 = vpop.f32.mrb[0].mxu0
        %1551 = vmatprep.mubr.f32.mxu0 0.0
        %1552 = vmatmul.mubr.f32.gmra.mrb[0].mxu0 %v1052
        %v1553 = vpop.f32.mrb[0].mxu0
        %v1554 = vadd.f32 %v1345, %v1553
        %v1555 = vpop.f32.mrb[0].mxu0
        %1556 = vmatprep.mubr.f32.mxu0 0.0
        %1557 = vmatmul.mubr.f32.gmra.mrb[0].mxu0 %v1051
        %v1558 = vpop.f32.mrb[0].mxu0
        %v1559 = vpop.f32.mrb[0].mxu0
        %1560 = vmatprep.mubr.f32.mxu0 0.0
        %1561 = vmatmul.mubr.f32.gmra.mrb[0].mxu0 %v1050
        %v1562 = vpop.f32.mrb[0].mxu0
        %v1563 = vpop.f32.mrb[0].mxu0
        %1564 = vmatprep.mubr.f32.mxu0 0.0
        %1565 = vmatmul.mubr.f32.gmra.mrb[0].mxu0 %v1049
        %v1566 = vpop.f32.mrb[0].mxu0
        %v1567 = vadd.f32 %v1358, %v1566
        %v1568 = vpop.f32.mrb[0].mxu0
        %1569 = vmatprep.mubr.f32.mxu0 0.0
        %1570 = vmatmul.mubr.f32.gmra.mrb[0].mxu0 %v1048
        %v1571 = vpop.f32.mrb[0].mxu0
        %v1572 = vadd.f32 %v1363, %v1571
        %v1573 = vpop.f32.mrb[0].mxu0
        %1574 = vmatprep.mubr.f32.mxu0 0.0
        %1575 = vmatmul.mubr.f32.gmra.mrb[0].mxu0 %v1047
        %v1576 = vpop.f32.mrb[0].mxu0
        %v1577 = vpop.f32.mrb[0].mxu0
        %1578 = vmatprep.mubr.f32.mxu0 0.0
        %1579 = vmatmul.mubr.f32.gmra.mrb[0].mxu0 %v1046
        %v1580 = vpop.f32.mrb[0].mxu0
        %v1581 = vpop.f32.mrb[0].mxu0
        %1582 = vmatprep.mubr.f32.mxu0 0.0
        %1583 = vmatmul.mubr.f32.gmra.mrb[0].mxu0 %v1045
        %v1584 = vpop.f32.mrb[0].mxu0
        %v1585 = vadd.f32 %v1376, %v1584
        %v1586 = vpop.f32.mrb[0].mxu0
        %1587 = vmatprep.mubr.f32.mxu0 0.0
        %1588 = vmatmul.mubr.f32.gmra.mrb[0].mxu0 %v1044
        %v1589 = vpop.f32.mrb[0].mxu0
        %v1590 = vadd.f32 %v1381, %v1589
        %v1591 = vpop.f32.mrb[0].mxu0
        %1592 = vmatprep.mubr.f32.mxu0 0.0
        %1593 = vmatmul.mubr.f32.gmra.mrb[0].mxu0 %v1043
        %v1594 = vpop.f32.mrb[0].mxu0
        %v1595 = vpop.f32.mrb[0].mxu0
        %1596 = vmatprep.mubr.f32.mxu0 0.0
        %1597 = vmatmul.mubr.f32.gmra.mrb[0].mxu0 %v1042
        %v1598 = vpop.f32.mrb[0].mxu0
        %v1599 = vpop.f32.mrb[0].mxu0
        %1600 = vdwg.mxu0
        %1601 = vmatprep.subr.mxu0 0.0
        %1602 = vmatpush1.msra.mxu0 %v1086
        %1603 = vmatprep.subr.mxu0 0.0
        %1604 = vmatpush1.msra.mxu0 %v1087
        %1605 = vmatprep.subr.mxu0 0.0
        %1606 = vmatpush1.msra.mxu0 %v1088
        %1607 = vmatprep.subr.mxu0 0.0
        %1608 = vmatpush1.msra.mxu0 %v1089
        %1609 = vmatprep.subr.mxu0 0.0
        %1610 = vmatpush1.msra.mxu0 %v1090
        %1611 = vmatprep.subr.mxu0 0.0
        %1612 = vmatpush1.msra.mxu0 %v1091
        %1613 = vmatprep.subr.mxu0 0.0
        %1614 = vmatpush1.msra.mxu0 %v1092
        %1615 = vmatprep.subr.mxu0 0.0
        %1616 = vmatpush1.msra.mxu0 %v1093
        %1617 = vmatprep.subr.mxu0 0.0
        %1618 = vmatpush1.msra.mxu0 %v1094
        %1619 = vmatprep.subr.mxu0 0.0
        %1620 = vmatpush1.msra.mxu0 %v1095
        %1621 = vmatprep.subr.mxu0 0.0
        %1622 = vmatpush1.msra.mxu0 %v1096
        %1623 = vmatprep.subr.mxu0 0.0
        %1624 = vmatpush1.msra.mxu0 %v1097
        %1625 = vmatprep.subr.mxu0 0.0
        %1626 = vmatpush1.msra.mxu0 %v1098
        %1627 = vmatprep.subr.mxu0 0.0
        %1628 = vmatpush1.msra.mxu0 %v1099
        %1629 = vmatprep.subr.mxu0 0.0
        %1630 = vmatpush1.msra.mxu0 %v1100
        %1631 = vmatprep.subr.mxu0 0.0
        %1632 = vmatpush1.msra.mxu0 %v1101
        %1633 = vmatprep.subr.mxu0 0.0
        %1634 = vmatpush1.msra.mxu0 %v1102
        %1635 = vmatprep.subr.mxu0 0.0
        %1636 = vmatpush1.msra.mxu0 %v1103
        %1637 = vmatprep.subr.mxu0 0.0
        %1638 = vmatpush1.msra.mxu0 %v1104
        %1639 = vmatprep.subr.mxu0 0.0
        %1640 = vmatpush1.msra.mxu0 %v1105
        %1641 = vmatprep.subr.mxu0 0.0
        %1642 = vmatpush1.msra.mxu0 %v1106
        %1643 = vmatprep.subr.mxu0 0.0
        %1644 = vmatpush1.msra.mxu0 %v1107
        %1645 = vmatprep.subr.mxu0 0.0
        %1646 = vmatpush1.msra.mxu0 %v1108
        %1647 = vmatprep.subr.mxu0 0.0
        %1648 = vmatpush1.msra.mxu0 %v1109
        %1649 = vmatprep.subr.mxu0 0.0
        %1650 = vmatpush1.msra.mxu0 %v1110
        %1651 = vmatprep.subr.mxu0 0.0
        %1652 = vmatpush1.msra.mxu0 %v1111
        %1653 = vmatprep.subr.mxu0 0.0
        %1654 = vmatpush1.msra.mxu0 %v1112
        %1655 = vmatprep.subr.mxu0 0.0
        %1656 = vmatpush1.msra.mxu0 %v1113
        %1657 = vmatprep.subr.mxu0 0.0
        %1658 = vmatpush1.msra.mxu0 %v1114
        %1659 = vmatprep.subr.mxu0 0.0
        %1660 = vmatpush1.msra.mxu0 %v1115
        %1661 = vmatprep.subr.mxu0 0.0
        %1662 = vmatpush1.msra.mxu0 %v1116
        %1663 = vmatprep.subr.mxu0 0.0
        %1664 = vmatpush1.msra.mxu0 %v1117
        %1665 = vmatprep.mubr.f32.mxu0 %v580
        %1666 = vmatmul.mubr.f32.gmra.mrb[0].mxu0 %v971
        %v1667 = vpop.f32.mrb[0].mxu0
        %v1668 = vadd.f32 %v1459, %v1667
        %v1669 = vpop.f32.mrb[0].mxu0
        %1670 = vmatprep.mubr.f32.mxu0 %v579
        %1671 = vmatmul.mubr.f32.gmra.mrb[0].mxu0 %v970
        %v1672 = vpop.f32.mrb[0].mxu0
        %v1673 = vadd.f32 %v1464, %v1672
        %v1674 = vpop.f32.mrb[0].mxu0
        %1675 = vmatprep.mubr.f32.mxu0 %v578
        %1676 = vmatmul.mubr.f32.gmra.mrb[0].mxu0 %v969
        %v1677 = vpop.f32.mrb[0].mxu0
        %v1678 = vpop.f32.mrb[0].mxu0
        %1679 = vmatprep.mubr.f32.mxu0 %v577
        %1680 = vmatmul.mubr.f32.gmra.mrb[0].mxu0 %v968
        %v1681 = vpop.f32.mrb[0].mxu0
        %v1682 = vpop.f32.mrb[0].mxu0
        %1683 = vmatprep.mubr.f32.mxu0 %v576
        %1684 = vmatmul.mubr.f32.gmra.mrb[0].mxu0 %v967
        %v1685 = vpop.f32.mrb[0].mxu0
        %v1686 = vadd.f32 %v1477, %v1685
        %v1687 = vpop.f32.mrb[0].mxu0
        %1688 = vmatprep.mubr.f32.mxu0 %v575
        %1689 = vmatmul.mubr.f32.gmra.mrb[0].mxu0 %v966
        %v1690 = vpop.f32.mrb[0].mxu0
        %v1691 = vadd.f32 %v1482, %v1690
        %v1692 = vpop.f32.mrb[0].mxu0
        %1693 = vmatprep.mubr.f32.mxu0 %v574
        %1694 = vmatmul.mubr.f32.gmra.mrb[0].mxu0 %v965
        %v1695 = vpop.f32.mrb[0].mxu0
        %v1696 = vpop.f32.mrb[0].mxu0
        %1697 = vmatprep.mubr.f32.mxu0 %v573
        %1698 = vmatmul.mubr.f32.gmra.mrb[0].mxu0 %v964
        %v1699 = vpop.f32.mrb[0].mxu0
        %v1700 = vpop.f32.mrb[0].mxu0
        %1701 = vmatprep.mubr.f32.mxu0 %v572
        %1702 = vmatmul.mubr.f32.gmra.mrb[0].mxu0 %v963
        %v1703 = vpop.f32.mrb[0].mxu0
        %v1704 = vadd.f32 %v1495, %v1703
        %v1705 = vpop.f32.mrb[0].mxu0
        %1706 = vmatprep.mubr.f32.mxu0 %v571
        %1707 = vmatmul.mubr.f32.gmra.mrb[0].mxu0 %v962
        %v1708 = vpop.f32.mrb[0].mxu0
        %v1709 = vadd.f32 %v1500, %v1708
        %v1710 = vpop.f32.mrb[0].mxu0
        %1711 = vmatprep.mubr.f32.mxu0 %v570
        %1712 = vmatmul.mubr.f32.gmra.mrb[0].mxu0 %v961
        %v1713 = vpop.f32.mrb[0].mxu0
        %v1714 = vpop.f32.mrb[0].mxu0
        %1715 = vmatprep.mubr.f32.mxu0 %v569
        %1716 = vmatmul.mubr.f32.gmra.mrb[0].mxu0 %v960
        %v1717 = vpop.f32.mrb[0].mxu0
        %v1718 = vpop.f32.mrb[0].mxu0
        %1719 = vmatprep.mubr.f32.mxu0 %v568
        %1720 = vmatmul.mubr.f32.gmra.mrb[0].mxu0 %v959
        %v1721 = vpop.f32.mrb[0].mxu0
        %v1722 = vadd.f32 %v1513, %v1721
        %v1723 = vpop.f32.mrb[0].mxu0
        %1724 = vmatprep.mubr.f32.mxu0 %v567
        %1725 = vmatmul.mubr.f32.gmra.mrb[0].mxu0 %v958
        %v1726 = vpop.f32.mrb[0].mxu0
        %v1727 = vadd.f32 %v1518, %v1726
        %v1728 = vpop.f32.mrb[0].mxu0
        %1729 = vmatprep.mubr.f32.mxu0 %v566
        %1730 = vmatmul.mubr.f32.gmra.mrb[0].mxu0 %v957
        %v1731 = vpop.f32.mrb[0].mxu0
        %v1732 = vpop.f32.mrb[0].mxu0
        %1733 = vmatprep.mubr.f32.mxu0 %v565
        %1734 = vmatmul.mubr.f32.gmra.mrb[0].mxu0 %v956
        %v1735 = vpop.f32.mrb[0].mxu0
        %v1736 = vpop.f32.mrb[0].mxu0
        %1737 = vmatprep.mubr.f32.mxu0 %v564
        %1738 = vmatmul.mubr.f32.gmra.mrb[0].mxu0 %v955
        %v1739 = vpop.f32.mrb[0].mxu0
        %v1740 = vadd.f32 %v1531, %v1739
        %v1741 = vpop.f32.mrb[0].mxu0
        %1742 = vmatprep.mubr.f32.mxu0 %v563
        %1743 = vmatmul.mubr.f32.gmra.mrb[0].mxu0 %v954
        %v1744 = vpop.f32.mrb[0].mxu0
        %v1745 = vadd.f32 %v1536, %v1744
        %v1746 = vpop.f32.mrb[0].mxu0
        %1747 = vmatprep.mubr.f32.mxu0 %v562
        %1748 = vmatmul.mubr.f32.gmra.mrb[0].mxu0 %v953
        %v1749 = vpop.f32.mrb[0].mxu0
        %v1750 = vpop.f32.mrb[0].mxu0
        %1751 = vmatprep.mubr.f32.mxu0 %v561
        %1752 = vmatmul.mubr.f32.gmra.mrb[0].mxu0 %v952
        %v1753 = vpop.f32.mrb[0].mxu0
        %v1754 = vpop.f32.mrb[0].mxu0
        %1755 = vmatprep.mubr.f32.mxu0 %v560
        %1756 = vmatmul.mubr.f32.gmra.mrb[0].mxu0 %v951
        %v1757 = vpop.f32.mrb[0].mxu0
        %v1758 = vadd.f32 %v1549, %v1757
        %v1759 = vpop.f32.mrb[0].mxu0
        %1760 = vmatprep.mubr.f32.mxu0 %v559
        %1761 = vmatmul.mubr.f32.gmra.mrb[0].mxu0 %v950
        %v1762 = vpop.f32.mrb[0].mxu0
        %v1763 = vadd.f32 %v1554, %v1762
        %v1764 = vpop.f32.mrb[0].mxu0
        %1765 = vmatprep.mubr.f32.mxu0 %v558
        %1766 = vmatmul.mubr.f32.gmra.mrb[0].mxu0 %v949
        %v1767 = vpop.f32.mrb[0].mxu0
        %v1768 = vpop.f32.mrb[0].mxu0
        %1769 = vmatprep.mubr.f32.mxu0 %v557
        %1770 = vmatmul.mubr.f32.gmra.mrb[0].mxu0 %v948
        %v1771 = vpop.f32.mrb[0].mxu0
        %v1772 = vpop.f32.mrb[0].mxu0
        %1773 = vmatprep.mubr.f32.mxu0 %v556
        %1774 = vmatmul.mubr.f32.gmra.mrb[0].mxu0 %v947
        %v1775 = vpop.f32.mrb[0].mxu0
        %v1776 = vadd.f32 %v1567, %v1775
        %v1777 = vpop.f32.mrb[0].mxu0
        %1778 = vmatprep.mubr.f32.mxu0 %v555
        %1779 = vmatmul.mubr.f32.gmra.mrb[0].mxu0 %v946
        %v1780 = vpop.f32.mrb[0].mxu0
        %v1781 = vadd.f32 %v1572, %v1780
        %v1782 = vpop.f32.mrb[0].mxu0
        %1783 = vmatprep.mubr.f32.mxu0 %v554
        %1784 = vmatmul.mubr.f32.gmra.mrb[0].mxu0 %v945
        %v1785 = vpop.f32.mrb[0].mxu0
        %v1786 = vpop.f32.mrb[0].mxu0
        %1787 = vmatprep.mubr.f32.mxu0 %v553
        %1788 = vmatmul.mubr.f32.gmra.mrb[0].mxu0 %v944
        %v1789 = vpop.f32.mrb[0].mxu0
        %v1790 = vpop.f32.mrb[0].mxu0
        %1791 = vmatprep.mubr.f32.mxu0 %v552
        %1792 = vmatmul.mubr.f32.gmra.mrb[0].mxu0 %v943
        %v1793 = vpop.f32.mrb[0].mxu0
        %v1794 = vadd.f32 %v1585, %v1793
        %v1795 = vpop.f32.mrb[0].mxu0
        %1796 = vmatprep.mubr.f32.mxu0 %v551
        %1797 = vmatmul.mubr.f32.gmra.mrb[0].mxu0 %v942
        %v1798 = vpop.f32.mrb[0].mxu0
        %v1799 = vadd.f32 %v1590, %v1798
        %v1800 = vpop.f32.mrb[0].mxu0
        %1801 = vmatprep.mubr.f32.mxu0 %v550
        %1802 = vmatmul.mubr.f32.gmra.mrb[0].mxu0 %v941
        %v1803 = vpop.f32.mrb[0].mxu0
        %v1804 = vpop.f32.mrb[0].mxu0
        %1805 = vmatprep.mubr.f32.mxu0 %v549
        %1806 = vmatmul.mubr.f32.gmra.mrb[0].mxu0 %v940
        %v1807 = vpop.f32.mrb[0].mxu0
        %v1808 = vpop.f32.mrb[0].mxu0
        %1809 = vdwg.mxu0
        %1810 = vmatprep.subr.mxu0 0.0
        %1811 = vmatpush1.msra.mxu0 %v1118
        %1812 = vmatprep.subr.mxu0 0.0
        %1813 = vmatpush1.msra.mxu0 %v1119
        %1814 = vmatprep.subr.mxu0 0.0
        %1815 = vmatpush1.msra.mxu0 %v1120
        %1816 = vmatprep.subr.mxu0 0.0
        %1817 = vmatpush1.msra.mxu0 %v1121
        %1818 = vmatprep.subr.mxu0 0.0
        %1819 = vmatpush1.msra.mxu0 %v1122
        %1820 = vmatprep.subr.mxu0 0.0
        %1821 = vmatpush1.msra.mxu0 %v1123
        %1822 = vmatprep.subr.mxu0 0.0
        %1823 = vmatpush1.msra.mxu0 %v1124
        %1824 = vmatprep.subr.mxu0 0.0
        %1825 = vmatpush1.msra.mxu0 %v1125
        %1826 = vmatprep.subr.mxu0 0.0
        %1827 = vmatpush1.msra.mxu0 %v1126
        %1828 = vmatprep.subr.mxu0 0.0
        %1829 = vmatpush1.msra.mxu0 %v1127
        %1830 = vmatprep.subr.mxu0 0.0
        %1831 = vmatpush1.msra.mxu0 %v1128
        %1832 = vmatprep.subr.mxu0 0.0
        %1833 = vmatpush1.msra.mxu0 %v1129
        %1834 = vmatprep.subr.mxu0 0.0
        %1835 = vmatpush1.msra.mxu0 %v1130
        %1836 = vmatprep.subr.mxu0 0.0
        %1837 = vmatpush1.msra.mxu0 %v1131
        %1838 = vmatprep.subr.mxu0 0.0
        %1839 = vmatpush1.msra.mxu0 %v1132
        %1840 = vmatprep.subr.mxu0 0.0
        %1841 = vmatpush1.msra.mxu0 %v1133
        %1842 = vmatprep.subr.mxu0 0.0
        %1843 = vmatpush1.msra.mxu0 0.0
        %1844 = vmatprep.subr.mxu0 0.0
        %1845 = vmatpush1.msra.mxu0 0.0
        %1846 = vmatprep.subr.mxu0 0.0
        %1847 = vmatpush1.msra.mxu0 0.0
        %1848 = vmatprep.subr.mxu0 0.0
        %1849 = vmatpush1.msra.mxu0 0.0
        %1850 = vmatprep.subr.mxu0 0.0
        %1851 = vmatpush1.msra.mxu0 0.0
        %1852 = vmatprep.subr.mxu0 0.0
        %1853 = vmatpush1.msra.mxu0 0.0
        %1854 = vmatprep.subr.mxu0 0.0
        %1855 = vmatpush1.msra.mxu0 0.0
        %1856 = vmatprep.subr.mxu0 0.0
        %1857 = vmatpush1.msra.mxu0 0.0
        %1858 = vmatprep.subr.mxu0 0.0
        %1859 = vmatpush1.msra.mxu0 0.0
        %1860 = vmatprep.subr.mxu0 0.0
        %1861 = vmatpush1.msra.mxu0 0.0
        %1862 = vmatprep.subr.mxu0 0.0
        %1863 = vmatpush1.msra.mxu0 0.0
        %1864 = vmatprep.subr.mxu0 0.0
        %1865 = vmatpush1.msra.mxu0 0.0
        %1866 = vmatprep.subr.mxu0 0.0
        %1867 = vmatpush1.msra.mxu0 0.0
        %1868 = vmatprep.subr.mxu0 0.0
        %1869 = vmatpush1.msra.mxu0 0.0
        %1870 = vmatprep.subr.mxu0 0.0
        %1871 = vmatpush1.msra.mxu0 0.0
        %1872 = vmatprep.subr.mxu0 0.0
        %1873 = vmatpush1.msra.mxu0 0.0
        %1874 = vmatprep.mubr.f32.mxu0 0.0
        %1875 = vmatmul.mubr.f32.gmra.mrb[0].mxu0 %v1085
        %v1876 = vpop.f32.mrb[0].mxu0
        %v1877 = vadd.f32 %v1668, %v1876
        %v1878 = vpop.f32.mrb[0].mxu0
        %1879 = vmatprep.mubr.f32.mxu0 0.0
        %1880 = vmatmul.mubr.f32.gmra.mrb[0].mxu0 %v1084
        %v1881 = vpop.f32.mrb[0].mxu0
        %v1882 = vadd.f32 %v1673, %v1881
        %v1883 = vpop.f32.mrb[0].mxu0
        %1884 = vmatprep.mubr.f32.mxu0 0.0
        %1885 = vmatmul.mubr.f32.gmra.mrb[0].mxu0 %v1083
        %v1886 = vpop.f32.mrb[0].mxu0
        %v1887 = vpop.f32.mrb[0].mxu0
        %1888 = vmatprep.mubr.f32.mxu0 0.0
        %1889 = vmatmul.mubr.f32.gmra.mrb[0].mxu0 %v1082
        %v1890 = vpop.f32.mrb[0].mxu0
        %v1891 = vpop.f32.mrb[0].mxu0
        %1892 = vmatprep.mubr.f32.mxu0 0.0
        %1893 = vmatmul.mubr.f32.gmra.mrb[0].mxu0 %v1081
        %v1894 = vpop.f32.mrb[0].mxu0
        %v1895 = vadd.f32 %v1686, %v1894
        %v1896 = vpop.f32.mrb[0].mxu0
        %1897 = vmatprep.mubr.f32.mxu0 0.0
        %1898 = vmatmul.mubr.f32.gmra.mrb[0].mxu0 %v1080
        %v1899 = vpop.f32.mrb[0].mxu0
        %v1900 = vadd.f32 %v1691, %v1899
        %v1901 = vpop.f32.mrb[0].mxu0
        %1902 = vmatprep.mubr.f32.mxu0 0.0
        %1903 = vmatmul.mubr.f32.gmra.mrb[0].mxu0 %v1079
        %v1904 = vpop.f32.mrb[0].mxu0
        %v1905 = vpop.f32.mrb[0].mxu0
        %1906 = vmatprep.mubr.f32.mxu0 0.0
        %1907 = vmatmul.mubr.f32.gmra.mrb[0].mxu0 %v1078
        %v1908 = vpop.f32.mrb[0].mxu0
        %v1909 = vpop.f32.mrb[0].mxu0
        %1910 = vmatprep.mubr.f32.mxu0 0.0
        %1911 = vmatmul.mubr.f32.gmra.mrb[0].mxu0 %v1077
        %v1912 = vpop.f32.mrb[0].mxu0
        %v1913 = vadd.f32 %v1704, %v1912
        %v1914 = vpop.f32.mrb[0].mxu0
        %1915 = vmatprep.mubr.f32.mxu0 0.0
        %1916 = vmatmul.mubr.f32.gmra.mrb[0].mxu0 %v1076
        %v1917 = vpop.f32.mrb[0].mxu0
        %v1918 = vadd.f32 %v1709, %v1917
        %v1919 = vpop.f32.mrb[0].mxu0
        %1920 = vmatprep.mubr.f32.mxu0 0.0
        %1921 = vmatmul.mubr.f32.gmra.mrb[0].mxu0 %v1075
        %v1922 = vpop.f32.mrb[0].mxu0
        %v1923 = vpop.f32.mrb[0].mxu0
        %1924 = vmatprep.mubr.f32.mxu0 0.0
        %1925 = vmatmul.mubr.f32.gmra.mrb[0].mxu0 %v1074
        %v1926 = vpop.f32.mrb[0].mxu0
        %v1927 = vpop.f32.mrb[0].mxu0
        %1928 = vmatprep.mubr.f32.mxu0 0.0
        %1929 = vmatmul.mubr.f32.gmra.mrb[0].mxu0 %v1073
        %v1930 = vpop.f32.mrb[0].mxu0
        %v1931 = vadd.f32 %v1722, %v1930
        %v1932 = vpop.f32.mrb[0].mxu0
        %1933 = vmatprep.mubr.f32.mxu0 0.0
        %1934 = vmatmul.mubr.f32.gmra.mrb[0].mxu0 %v1072
        %v1935 = vpop.f32.mrb[0].mxu0
        %v1936 = vadd.f32 %v1727, %v1935
        %v1937 = vpop.f32.mrb[0].mxu0
        %1938 = vmatprep.mubr.f32.mxu0 0.0
        %1939 = vmatmul.mubr.f32.gmra.mrb[0].mxu0 %v1071
        %v1940 = vpop.f32.mrb[0].mxu0
        %v1941 = vpop.f32.mrb[0].mxu0
        %1942 = vmatprep.mubr.f32.mxu0 0.0
        %1943 = vmatmul.mubr.f32.gmra.mrb[0].mxu0 %v1070
        %v1944 = vpop.f32.mrb[0].mxu0
        %v1945 = vpop.f32.mrb[0].mxu0
        %1946 = vmatprep.mubr.f32.mxu0 0.0
        %1947 = vmatmul.mubr.f32.gmra.mrb[0].mxu0 %v1069
        %v1948 = vpop.f32.mrb[0].mxu0
        %v1949 = vadd.f32 %v1740, %v1948
        %v1950 = vpop.f32.mrb[0].mxu0
        %1951 = vmatprep.mubr.f32.mxu0 0.0
        %1952 = vmatmul.mubr.f32.gmra.mrb[0].mxu0 %v1068
        %v1953 = vpop.f32.mrb[0].mxu0
        %v1954 = vadd.f32 %v1745, %v1953
        %v1955 = vpop.f32.mrb[0].mxu0
        %1956 = vmatprep.mubr.f32.mxu0 0.0
        %1957 = vmatmul.mubr.f32.gmra.mrb[0].mxu0 %v1067
        %v1958 = vpop.f32.mrb[0].mxu0
        %v1959 = vpop.f32.mrb[0].mxu0
        %1960 = vmatprep.mubr.f32.mxu0 0.0
        %1961 = vmatmul.mubr.f32.gmra.mrb[0].mxu0 %v1066
        %v1962 = vpop.f32.mrb[0].mxu0
        %v1963 = vpop.f32.mrb[0].mxu0
        %1964 = vmatprep.mubr.f32.mxu0 0.0
        %1965 = vmatmul.mubr.f32.gmra.mrb[0].mxu0 %v1065
        %v1966 = vpop.f32.mrb[0].mxu0
        %v1967 = vadd.f32 %v1758, %v1966
        %v1968 = vpop.f32.mrb[0].mxu0
        %1969 = vmatprep.mubr.f32.mxu0 0.0
        %1970 = vmatmul.mubr.f32.gmra.mrb[0].mxu0 %v1064
        %v1971 = vpop.f32.mrb[0].mxu0
        %v1972 = vadd.f32 %v1763, %v1971
        %v1973 = vpop.f32.mrb[0].mxu0
        %1974 = vmatprep.mubr.f32.mxu0 0.0
        %1975 = vmatmul.mubr.f32.gmra.mrb[0].mxu0 %v1063
        %v1976 = vpop.f32.mrb[0].mxu0
        %v1977 = vpop.f32.mrb[0].mxu0
        %1978 = vmatprep.mubr.f32.mxu0 0.0
        %1979 = vmatmul.mubr.f32.gmra.mrb[0].mxu0 %v1062
        %v1980 = vpop.f32.mrb[0].mxu0
        %v1981 = vpop.f32.mrb[0].mxu0
        %1982 = vmatprep.mubr.f32.mxu0 0.0
        %1983 = vmatmul.mubr.f32.gmra.mrb[0].mxu0 %v1061
        %v1984 = vpop.f32.mrb[0].mxu0
        %v1985 = vadd.f32 %v1776, %v1984
        %v1986 = vpop.f32.mrb[0].mxu0
        %1987 = vmatprep.mubr.f32.mxu0 0.0
        %1988 = vmatmul.mubr.f32.gmra.mrb[0].mxu0 %v1060
        %v1989 = vpop.f32.mrb[0].mxu0
        %v1990 = vadd.f32 %v1781, %v1989
        %v1991 = vpop.f32.mrb[0].mxu0
        %1992 = vmatprep.mubr.f32.mxu0 0.0
        %1993 = vmatmul.mubr.f32.gmra.mrb[0].mxu0 %v1059
        %v1994 = vpop.f32.mrb[0].mxu0
        %v1995 = vpop.f32.mrb[0].mxu0
        %1996 = vmatprep.mubr.f32.mxu0 0.0
        %1997 = vmatmul.mubr.f32.gmra.mrb[0].mxu0 %v1058
        %v1998 = vpop.f32.mrb[0].mxu0
        %v1999 = vpop.f32.mrb[0].mxu0
        %2000 = vmatprep.mubr.f32.mxu0 0.0
        %2001 = vmatmul.mubr.f32.gmra.mrb[0].mxu0 %v1057
        %v2002 = vpop.f32.mrb[0].mxu0
        %v2003 = vadd.f32 %v1794, %v2002
        %v2004 = vpop.f32.mrb[0].mxu0
        %2005 = vmatprep.mubr.f32.mxu0 0.0
        %2006 = vmatmul.mubr.f32.gmra.mrb[0].mxu0 %v1056
        %v2007 = vpop.f32.mrb[0].mxu0
        %v2008 = vadd.f32 %v1799, %v2007
        %v2009 = vpop.f32.mrb[0].mxu0
        %2010 = vmatprep.mubr.f32.mxu0 0.0
        %2011 = vmatmul.mubr.f32.gmra.mrb[0].mxu0 %v1055
        %v2012 = vpop.f32.mrb[0].mxu0
        %v2013 = vpop.f32.mrb[0].mxu0
        %2014 = vmatprep.mubr.f32.mxu0 0.0
        %2015 = vmatmul.mubr.f32.gmra.mrb[0].mxu0 %v1054
        %v2016 = vpop.f32.mrb[0].mxu0
        %v2017 = vpop.f32.mrb[0].mxu0
        %2018 = vdwg.mxu0
        %s2019 = scalar_lea.vmem [#allocation7], 768
        %v2020 = vld [vmem:[%s2019] sm:$0xff]
        %v2021 = vld [vmem:[%s2019 + $0x8] sm:$0xff]
        %v2022 = vld [vmem:[%s2019 + $0x10] sm:$0xff]
        %v2023 = vld [vmem:[%s2019 + $0x18] sm:$0xff]
        %v2024 = vld [vmem:[%s2019 + $0x20] sm:$0xff]
        %v2025 = vld [vmem:[%s2019 + $0x28] sm:$0xff]
        %v2026 = vld [vmem:[%s2019 + $0x30] sm:$0xff]
        %v2027 = vld [vmem:[%s2019 + $0x38] sm:$0xff]
        %v2028 = vld [vmem:[%s2019 + $0x40] sm:$0xff]
        %v2029 = vld [vmem:[%s2019 + $0x48] sm:$0xff]
        %v2030 = vld [vmem:[%s2019 + $0x50] sm:$0xff]
        %v2031 = vld [vmem:[%s2019 + $0x58] sm:$0xff]
        %v2032 = vld [vmem:[%s2019 + $0x60] sm:$0xff]
        %v2033 = vld [vmem:[%s2019 + $0x68] sm:$0xff]
        %v2034 = vld [vmem:[%s2019 + $0x70] sm:$0xff]
        %v2035 = vld [vmem:[%s2019 + $0x78] sm:$0xff]
        %v2036 = vld [vmem:[%s2019 + $0x80] sm:$0xff]
        %v2037 = vld [vmem:[%s2019 + $0x88] sm:$0xff]
        %v2038 = vld [vmem:[%s2019 + $0x90] sm:$0xff]
        %v2039 = vld [vmem:[%s2019 + $0x98] sm:$0xff]
        %v2040 = vld [vmem:[%s2019 + $0xa0] sm:$0xff]
        %v2041 = vld [vmem:[%s2019 + $0xa8] sm:$0xff]
        %v2042 = vld [vmem:[%s2019 + $0xb0] sm:$0xff]
        %v2043 = vld [vmem:[%s2019 + $0xb8] sm:$0xff]
        %v2044 = vld [vmem:[%s2019 + $0xc0] sm:$0xff]
        %v2045 = vld [vmem:[%s2019 + $0xc8] sm:$0xff]
        %v2046 = vld [vmem:[%s2019 + $0xd0] sm:$0xff]
        %v2047 = vld [vmem:[%s2019 + $0xd8] sm:$0xff]
        %v2048 = vld [vmem:[%s2019 + $0xe0] sm:$0xff]
        %v2049 = vld [vmem:[%s2019 + $0xe8] sm:$0xff]
        %v2050 = vld [vmem:[%s2019 + $0xf0] sm:$0xff]
        %v2051 = vld [vmem:[%s2019 + $0xf8] sm:$0xff]
        %v2052 = vld [vmem:[%s2019 + $0x100] sm:$0xff]
        %v2053 = vld [vmem:[%s2019 + $0x108] sm:$0xff]
        %v2054 = vld [vmem:[%s2019 + $0x110] sm:$0xff]
        %v2055 = vld [vmem:[%s2019 + $0x118] sm:$0xff]
        %v2056 = vld [vmem:[%s2019 + $0x120] sm:$0xff]
        %v2057 = vld [vmem:[%s2019 + $0x128] sm:$0xff]
        %v2058 = vld [vmem:[%s2019 + $0x130] sm:$0xff]
        %v2059 = vld [vmem:[%s2019 + $0x138] sm:$0xff]
        %v2060 = vld [vmem:[%s2019 + $0x140] sm:$0xff]
        %v2061 = vld [vmem:[%s2019 + $0x148] sm:$0xff]
        %v2062 = vld [vmem:[%s2019 + $0x150] sm:$0xff]
        %v2063 = vld [vmem:[%s2019 + $0x158] sm:$0xff]
        %v2064 = vld [vmem:[%s2019 + $0x160] sm:$0xff]
        %v2065 = vld [vmem:[%s2019 + $0x168] sm:$0xff]
        %v2066 = vld [vmem:[%s2019 + $0x170] sm:$0xff]
        %v2067 = vld [vmem:[%s2019 + $0x178] sm:$0xff]
        %2068 = vmatprep.subr.mxu0 0.0
        %2069 = vmatpush1.msra.mxu0 %v2020
        %2070 = vmatprep.subr.mxu0 0.0
        %2071 = vmatpush1.msra.mxu0 %v2021
        %2072 = vmatprep.subr.mxu0 0.0
        %2073 = vmatpush1.msra.mxu0 %v2022
        %2074 = vmatprep.subr.mxu0 0.0
        %2075 = vmatpush1.msra.mxu0 %v2023
        %2076 = vmatprep.subr.mxu0 0.0
        %2077 = vmatpush1.msra.mxu0 %v2024
        %2078 = vmatprep.subr.mxu0 0.0
        %2079 = vmatpush1.msra.mxu0 %v2025
        %2080 = vmatprep.subr.mxu0 0.0
        %2081 = vmatpush1.msra.mxu0 %v2026
        %2082 = vmatprep.subr.mxu0 0.0
        %2083 = vmatpush1.msra.mxu0 %v2027
        %2084 = vmatprep.subr.mxu0 0.0
        %2085 = vmatpush1.msra.mxu0 %v2028
        %2086 = vmatprep.subr.mxu0 0.0
        %2087 = vmatpush1.msra.mxu0 %v2029
        %2088 = vmatprep.subr.mxu0 0.0
        %2089 = vmatpush1.msra.mxu0 %v2030
        %2090 = vmatprep.subr.mxu0 0.0
        %2091 = vmatpush1.msra.mxu0 %v2031
        %2092 = vmatprep.subr.mxu0 0.0
        %2093 = vmatpush1.msra.mxu0 %v2032
        %2094 = vmatprep.subr.mxu0 0.0
        %2095 = vmatpush1.msra.mxu0 %v2033
        %2096 = vmatprep.subr.mxu0 0.0
        %2097 = vmatpush1.msra.mxu0 %v2034
        %2098 = vmatprep.subr.mxu0 0.0
        %2099 = vmatpush1.msra.mxu0 %v2035
        %2100 = vmatprep.subr.mxu0 0.0
        %2101 = vmatpush1.msra.mxu0 %v2036
        %2102 = vmatprep.subr.mxu0 0.0
        %2103 = vmatpush1.msra.mxu0 %v2037
        %2104 = vmatprep.subr.mxu0 0.0
        %2105 = vmatpush1.msra.mxu0 %v2038
        %2106 = vmatprep.subr.mxu0 0.0
        %2107 = vmatpush1.msra.mxu0 %v2039
        %2108 = vmatprep.subr.mxu0 0.0
        %2109 = vmatpush1.msra.mxu0 %v2040
        %2110 = vmatprep.subr.mxu0 0.0
        %2111 = vmatpush1.msra.mxu0 %v2041
        %2112 = vmatprep.subr.mxu0 0.0
        %2113 = vmatpush1.msra.mxu0 %v2042
        %2114 = vmatprep.subr.mxu0 0.0
        %2115 = vmatpush1.msra.mxu0 %v2043
        %2116 = vmatprep.subr.mxu0 0.0
        %2117 = vmatpush1.msra.mxu0 %v2044
        %2118 = vmatprep.subr.mxu0 0.0
        %2119 = vmatpush1.msra.mxu0 %v2045
        %2120 = vmatprep.subr.mxu0 0.0
        %2121 = vmatpush1.msra.mxu0 %v2046
        %2122 = vmatprep.subr.mxu0 0.0
        %2123 = vmatpush1.msra.mxu0 %v2047
        %2124 = vmatprep.subr.mxu0 0.0
        %2125 = vmatpush1.msra.mxu0 %v2048
        %2126 = vmatprep.subr.mxu0 0.0
        %2127 = vmatpush1.msra.mxu0 %v2049
        %2128 = vmatprep.subr.mxu0 0.0
        %2129 = vmatpush1.msra.mxu0 %v2050
        %2130 = vmatprep.subr.mxu0 0.0
        %2131 = vmatpush1.msra.mxu0 %v2051
        %2132 = vmatprep.mubr.f32.mxu0 %v556
        %2133 = vmatmul.mubr.f32.gmra.mrb[0].mxu0 %v947
        %v2134 = vpop.f32.mrb[0].mxu0
        %v2135 = vadd.f32 0.0, %v2134
        %v2136 = vpop.f32.mrb[0].mxu0
        %2137 = vmatprep.mubr.f32.mxu0 %v555
        %2138 = vmatmul.mubr.f32.gmra.mrb[0].mxu0 %v946
        %v2139 = vpop.f32.mrb[0].mxu0
        %v2140 = vadd.f32 0.0, %v2139
        %v2141 = vpop.f32.mrb[0].mxu0
        %2142 = vmatprep.mubr.f32.mxu0 %v554
        %2143 = vmatmul.mubr.f32.gmra.mrb[0].mxu0 %v945
        %v2144 = vpop.f32.mrb[0].mxu0
        %v2145 = vpop.f32.mrb[0].mxu0
        %2146 = vmatprep.mubr.f32.mxu0 %v553
        %2147 = vmatmul.mubr.f32.gmra.mrb[0].mxu0 %v944
        %v2148 = vpop.f32.mrb[0].mxu0
        %v2149 = vpop.f32.mrb[0].mxu0
        %2150 = vmatprep.mubr.f32.mxu0 %v552
        %2151 = vmatmul.mubr.f32.gmra.mrb[0].mxu0 %v943
        %v2152 = vpop.f32.mrb[0].mxu0
        %v2153 = vadd.f32 0.0, %v2152
        %v2154 = vpop.f32.mrb[0].mxu0
        %2155 = vmatprep.mubr.f32.mxu0 %v551
        %2156 = vmatmul.mubr.f32.gmra.mrb[0].mxu0 %v942
        %v2157 = vpop.f32.mrb[0].mxu0
        %v2158 = vadd.f32 0.0, %v2157
        %v2159 = vpop.f32.mrb[0].mxu0
        %2160 = vmatprep.mubr.f32.mxu0 %v550
        %2161 = vmatmul.mubr.f32.gmra.mrb[0].mxu0 %v941
        %v2162 = vpop.f32.mrb[0].mxu0
        %v2163 = vpop.f32.mrb[0].mxu0
        %2164 = vmatprep.mubr.f32.mxu0 %v549
        %2165 = vmatmul.mubr.f32.gmra.mrb[0].mxu0 %v940
        %v2166 = vpop.f32.mrb[0].mxu0
        %v2167 = vpop.f32.mrb[0].mxu0
        %2168 = vmatprep.mubr.f32.mxu0 %v548
        %2169 = vmatmul.mubr.f32.gmra.mrb[0].mxu0 %v939
        %v2170 = vpop.f32.mrb[0].mxu0
        %v2171 = vadd.f32 0.0, %v2170
        %v2172 = vpop.f32.mrb[0].mxu0
        %2173 = vmatprep.mubr.f32.mxu0 %v547
        %2174 = vmatmul.mubr.f32.gmra.mrb[0].mxu0 %v938
        %v2175 = vpop.f32.mrb[0].mxu0
        %v2176 = vadd.f32 0.0, %v2175
        %v2177 = vpop.f32.mrb[0].mxu0
        %2178 = vmatprep.mubr.f32.mxu0 %v546
        %2179 = vmatmul.mubr.f32.gmra.mrb[0].mxu0 %v937
        %v2180 = vpop.f32.mrb[0].mxu0
        %v2181 = vpop.f32.mrb[0].mxu0
        %2182 = vmatprep.mubr.f32.mxu0 %v545
        %2183 = vmatmul.mubr.f32.gmra.mrb[0].mxu0 %v936
        %v2184 = vpop.f32.mrb[0].mxu0
        %v2185 = vpop.f32.mrb[0].mxu0
        %2186 = vmatprep.mubr.f32.mxu0 %v544
        %2187 = vmatmul.mubr.f32.gmra.mrb[0].mxu0 %v935
        %v2188 = vpop.f32.mrb[0].mxu0
        %v2189 = vadd.f32 0.0, %v2188
        %v2190 = vpop.f32.mrb[0].mxu0
        %2191 = vmatprep.mubr.f32.mxu0 %v543
        %2192 = vmatmul.mubr.f32.gmra.mrb[0].mxu0 %v934
        %v2193 = vpop.f32.mrb[0].mxu0
        %v2194 = vadd.f32 0.0, %v2193
        %v2195 = vpop.f32.mrb[0].mxu0
        %2196 = vmatprep.mubr.f32.mxu0 %v542
        %2197 = vmatmul.mubr.f32.gmra.mrb[0].mxu0 %v933
        %v2198 = vpop.f32.mrb[0].mxu0
        %v2199 = vpop.f32.mrb[0].mxu0
        %2200 = vmatprep.mubr.f32.mxu0 %v541
        %2201 = vmatmul.mubr.f32.gmra.mrb[0].mxu0 %v932
        %v2202 = vpop.f32.mrb[0].mxu0
        %v2203 = vpop.f32.mrb[0].mxu0
        %2204 = vmatprep.mubr.f32.mxu0 %v540
        %2205 = vmatmul.mubr.f32.gmra.mrb[0].mxu0 %v931
        %v2206 = vpop.f32.mrb[0].mxu0
        %v2207 = vadd.f32 0.0, %v2206
        %v2208 = vpop.f32.mrb[0].mxu0
        %2209 = vmatprep.mubr.f32.mxu0 %v539
        %2210 = vmatmul.mubr.f32.gmra.mrb[0].mxu0 %v930
        %v2211 = vpop.f32.mrb[0].mxu0
        %v2212 = vadd.f32 0.0, %v2211
        %v2213 = vpop.f32.mrb[0].mxu0
        %2214 = vmatprep.mubr.f32.mxu0 %v538
        %2215 = vmatmul.mubr.f32.gmra.mrb[0].mxu0 %v929
        %v2216 = vpop.f32.mrb[0].mxu0
        %v2217 = vpop.f32.mrb[0].mxu0
        %2218 = vmatprep.mubr.f32.mxu0 %v537
        %2219 = vmatmul.mubr.f32.gmra.mrb[0].mxu0 %v928
        %v2220 = vpop.f32.mrb[0].mxu0
        %v2221 = vpop.f32.mrb[0].mxu0
        %2222 = vmatprep.mubr.f32.mxu0 %v536
        %2223 = vmatmul.mubr.f32.gmra.mrb[0].mxu0 %v927
        %v2224 = vpop.f32.mrb[0].mxu0
        %v2225 = vadd.f32 0.0, %v2224
        %v2226 = vpop.f32.mrb[0].mxu0
        %2227 = vmatprep.mubr.f32.mxu0 %v535
        %2228 = vmatmul.mubr.f32.gmra.mrb[0].mxu0 %v926
        %v2229 = vpop.f32.mrb[0].mxu0
        %v2230 = vadd.f32 0.0, %v2229
        %v2231 = vpop.f32.mrb[0].mxu0
        %2232 = vmatprep.mubr.f32.mxu0 %v534
        %2233 = vmatmul.mubr.f32.gmra.mrb[0].mxu0 %v925
        %v2234 = vpop.f32.mrb[0].mxu0
        %v2235 = vpop.f32.mrb[0].mxu0
        %2236 = vmatprep.mubr.f32.mxu0 %v533
        %2237 = vmatmul.mubr.f32.gmra.mrb[0].mxu0 %v924
        %v2238 = vpop.f32.mrb[0].mxu0
        %v2239 = vpop.f32.mrb[0].mxu0
        %2240 = vmatprep.mubr.f32.mxu0 %v532
        %2241 = vmatmul.mubr.f32.gmra.mrb[0].mxu0 %v923
        %v2242 = vpop.f32.mrb[0].mxu0
        %v2243 = vadd.f32 0.0, %v2242
        %v2244 = vpop.f32.mrb[0].mxu0
        %2245 = vmatprep.mubr.f32.mxu0 %v531
        %2246 = vmatmul.mubr.f32.gmra.mrb[0].mxu0 %v922
        %v2247 = vpop.f32.mrb[0].mxu0
        %v2248 = vadd.f32 0.0, %v2247
        %v2249 = vpop.f32.mrb[0].mxu0
        %2250 = vmatprep.mubr.f32.mxu0 %v530
        %2251 = vmatmul.mubr.f32.gmra.mrb[0].mxu0 %v921
        %v2252 = vpop.f32.mrb[0].mxu0
        %v2253 = vpop.f32.mrb[0].mxu0
        %2254 = vmatprep.mubr.f32.mxu0 %v529
        %2255 = vmatmul.mubr.f32.gmra.mrb[0].mxu0 %v920
        %v2256 = vpop.f32.mrb[0].mxu0
        %v2257 = vpop.f32.mrb[0].mxu0
        %2258 = vmatprep.mubr.f32.mxu0 %v528
        %2259 = vmatmul.mubr.f32.gmra.mrb[0].mxu0 %v919
        %v2260 = vpop.f32.mrb[0].mxu0
        %v2261 = vadd.f32 0.0, %v2260
        %v2262 = vpop.f32.mrb[0].mxu0
        %2263 = vmatprep.mubr.f32.mxu0 %v527
        %2264 = vmatmul.mubr.f32.gmra.mrb[0].mxu0 %v918
        %v2265 = vpop.f32.mrb[0].mxu0
        %v2266 = vadd.f32 0.0, %v2265
        %v2267 = vpop.f32.mrb[0].mxu0
        %2268 = vmatprep.mubr.f32.mxu0 %v526
        %2269 = vmatmul.mubr.f32.gmra.mrb[0].mxu0 %v917
        %v2270 = vpop.f32.mrb[0].mxu0
        %v2271 = vpop.f32.mrb[0].mxu0
        %2272 = vmatprep.mubr.f32.mxu0 %v525
        %2273 = vmatmul.mubr.f32.gmra.mrb[0].mxu0 %v916
        %v2274 = vpop.f32.mrb[0].mxu0
        %v2275 = vpop.f32.mrb[0].mxu0
        %2276 = vdwg.mxu0
        %2277 = vmatprep.subr.mxu0 0.0
        %2278 = vmatpush1.msra.mxu0 %v2052
        %2279 = vmatprep.subr.mxu0 0.0
        %2280 = vmatpush1.msra.mxu0 %v2053
        %2281 = vmatprep.subr.mxu0 0.0
        %2282 = vmatpush1.msra.mxu0 %v2054
        %2283 = vmatprep.subr.mxu0 0.0
        %2284 = vmatpush1.msra.mxu0 %v2055
        %2285 = vmatprep.subr.mxu0 0.0
        %2286 = vmatpush1.msra.mxu0 %v2056
        %2287 = vmatprep.subr.mxu0 0.0
        %2288 = vmatpush1.msra.mxu0 %v2057
        %2289 = vmatprep.subr.mxu0 0.0
        %2290 = vmatpush1.msra.mxu0 %v2058
        %2291 = vmatprep.subr.mxu0 0.0
        %2292 = vmatpush1.msra.mxu0 %v2059
        %2293 = vmatprep.subr.mxu0 0.0
        %2294 = vmatpush1.msra.mxu0 %v2060
        %2295 = vmatprep.subr.mxu0 0.0
        %2296 = vmatpush1.msra.mxu0 %v2061
        %2297 = vmatprep.subr.mxu0 0.0
        %2298 = vmatpush1.msra.mxu0 %v2062
        %2299 = vmatprep.subr.mxu0 0.0
        %2300 = vmatpush1.msra.mxu0 %v2063
        %2301 = vmatprep.subr.mxu0 0.0
        %2302 = vmatpush1.msra.mxu0 %v2064
        %2303 = vmatprep.subr.mxu0 0.0
        %2304 = vmatpush1.msra.mxu0 %v2065
        %2305 = vmatprep.subr.mxu0 0.0
        %2306 = vmatpush1.msra.mxu0 %v2066
        %2307 = vmatprep.subr.mxu0 0.0
        %2308 = vmatpush1.msra.mxu0 %v2067
        %2309 = vmatprep.subr.mxu0 0.0
        %2310 = vmatpush1.msra.mxu0 0.0
        %2311 = vmatprep.subr.mxu0 0.0
        %2312 = vmatpush1.msra.mxu0 0.0
        %2313 = vmatprep.subr.mxu0 0.0
        %2314 = vmatpush1.msra.mxu0 0.0
        %2315 = vmatprep.subr.mxu0 0.0
        %2316 = vmatpush1.msra.mxu0 0.0
        %2317 = vmatprep.subr.mxu0 0.0
        %2318 = vmatpush1.msra.mxu0 0.0
        %2319 = vmatprep.subr.mxu0 0.0
        %2320 = vmatpush1.msra.mxu0 0.0
        %2321 = vmatprep.subr.mxu0 0.0
        %2322 = vmatpush1.msra.mxu0 0.0
        %2323 = vmatprep.subr.mxu0 0.0
        %2324 = vmatpush1.msra.mxu0 0.0
        %2325 = vmatprep.subr.mxu0 0.0
        %2326 = vmatpush1.msra.mxu0 0.0
        %2327 = vmatprep.subr.mxu0 0.0
        %2328 = vmatpush1.msra.mxu0 0.0
        %2329 = vmatprep.subr.mxu0 0.0
        %2330 = vmatpush1.msra.mxu0 0.0
        %2331 = vmatprep.subr.mxu0 0.0
        %2332 = vmatpush1.msra.mxu0 0.0
        %2333 = vmatprep.subr.mxu0 0.0
        %2334 = vmatpush1.msra.mxu0 0.0
        %2335 = vmatprep.subr.mxu0 0.0
        %2336 = vmatpush1.msra.mxu0 0.0
        %2337 = vmatprep.subr.mxu0 0.0
        %2338 = vmatpush1.msra.mxu0 0.0
        %2339 = vmatprep.subr.mxu0 0.0
        %2340 = vmatpush1.msra.mxu0 0.0
        %2341 = vmatprep.mubr.f32.mxu0 0.0
        %2342 = vmatmul.mubr.f32.gmra.mrb[0].mxu0 %v1061
        %v2343 = vpop.f32.mrb[0].mxu0
        %v2344 = vadd.f32 %v2135, %v2343
        %v2345 = vpop.f32.mrb[0].mxu0
        %2346 = vmatprep.mubr.f32.mxu0 0.0
        %2347 = vmatmul.mubr.f32.gmra.mrb[0].mxu0 %v1060
        %v2348 = vpop.f32.mrb[0].mxu0
        %v2349 = vadd.f32 %v2140, %v2348
        %v2350 = vpop.f32.mrb[0].mxu0
        %2351 = vmatprep.mubr.f32.mxu0 0.0
        %2352 = vmatmul.mubr.f32.gmra.mrb[0].mxu0 %v1059
        %v2353 = vpop.f32.mrb[0].mxu0
        %v2354 = vpop.f32.mrb[0].mxu0
        %2355 = vmatprep.mubr.f32.mxu0 0.0
        %2356 = vmatmul.mubr.f32.gmra.mrb[0].mxu0 %v1058
        %v2357 = vpop.f32.mrb[0].mxu0
        %v2358 = vpop.f32.mrb[0].mxu0
        %2359 = vmatprep.mubr.f32.mxu0 0.0
        %2360 = vmatmul.mubr.f32.gmra.mrb[0].mxu0 %v1057
        %v2361 = vpop.f32.mrb[0].mxu0
        %v2362 = vadd.f32 %v2153, %v2361
        %v2363 = vpop.f32.mrb[0].mxu0
        %2364 = vmatprep.mubr.f32.mxu0 0.0
        %2365 = vmatmul.mubr.f32.gmra.mrb[0].mxu0 %v1056
        %v2366 = vpop.f32.mrb[0].mxu0
        %v2367 = vadd.f32 %v2158, %v2366
        %v2368 = vpop.f32.mrb[0].mxu0
        %2369 = vmatprep.mubr.f32.mxu0 0.0
        %2370 = vmatmul.mubr.f32.gmra.mrb[0].mxu0 %v1055
        %v2371 = vpop.f32.mrb[0].mxu0
        %v2372 = vpop.f32.mrb[0].mxu0
        %2373 = vmatprep.mubr.f32.mxu0 0.0
        %2374 = vmatmul.mubr.f32.gmra.mrb[0].mxu0 %v1054
        %v2375 = vpop.f32.mrb[0].mxu0
        %v2376 = vpop.f32.mrb[0].mxu0
        %2377 = vmatprep.mubr.f32.mxu0 0.0
        %2378 = vmatmul.mubr.f32.gmra.mrb[0].mxu0 %v1053
        %v2379 = vpop.f32.mrb[0].mxu0
        %v2380 = vadd.f32 %v2171, %v2379
        %v2381 = vpop.f32.mrb[0].mxu0
        %2382 = vmatprep.mubr.f32.mxu0 0.0
        %2383 = vmatmul.mubr.f32.gmra.mrb[0].mxu0 %v1052
        %v2384 = vpop.f32.mrb[0].mxu0
        %v2385 = vadd.f32 %v2176, %v2384
        %v2386 = vpop.f32.mrb[0].mxu0
        %2387 = vmatprep.mubr.f32.mxu0 0.0
        %2388 = vmatmul.mubr.f32.gmra.mrb[0].mxu0 %v1051
        %v2389 = vpop.f32.mrb[0].mxu0
        %v2390 = vpop.f32.mrb[0].mxu0
        %2391 = vmatprep.mubr.f32.mxu0 0.0
        %2392 = vmatmul.mubr.f32.gmra.mrb[0].mxu0 %v1050
        %v2393 = vpop.f32.mrb[0].mxu0
        %v2394 = vpop.f32.mrb[0].mxu0
        %2395 = vmatprep.mubr.f32.mxu0 0.0
        %2396 = vmatmul.mubr.f32.gmra.mrb[0].mxu0 %v1049
        %v2397 = vpop.f32.mrb[0].mxu0
        %v2398 = vadd.f32 %v2189, %v2397
        %v2399 = vpop.f32.mrb[0].mxu0
        %2400 = vmatprep.mubr.f32.mxu0 0.0
        %2401 = vmatmul.mubr.f32.gmra.mrb[0].mxu0 %v1048
        %v2402 = vpop.f32.mrb[0].mxu0
        %v2403 = vadd.f32 %v2194, %v2402
        %v2404 = vpop.f32.mrb[0].mxu0
        %2405 = vmatprep.mubr.f32.mxu0 0.0
        %2406 = vmatmul.mubr.f32.gmra.mrb[0].mxu0 %v1047
        %v2407 = vpop.f32.mrb[0].mxu0
        %v2408 = vpop.f32.mrb[0].mxu0
        %2409 = vmatprep.mubr.f32.mxu0 0.0
        %2410 = vmatmul.mubr.f32.gmra.mrb[0].mxu0 %v1046
        %v2411 = vpop.f32.mrb[0].mxu0
        %v2412 = vpop.f32.mrb[0].mxu0
        %2413 = vmatprep.mubr.f32.mxu0 0.0
        %2414 = vmatmul.mubr.f32.gmra.mrb[0].mxu0 %v1045
        %v2415 = vpop.f32.mrb[0].mxu0
        %v2416 = vadd.f32 %v2207, %v2415
        %v2417 = vpop.f32.mrb[0].mxu0
        %2418 = vmatprep.mubr.f32.mxu0 0.0
        %2419 = vmatmul.mubr.f32.gmra.mrb[0].mxu0 %v1044
        %v2420 = vpop.f32.mrb[0].mxu0
        %v2421 = vadd.f32 %v2212, %v2420
        %v2422 = vpop.f32.mrb[0].mxu0
        %2423 = vmatprep.mubr.f32.mxu0 0.0
        %2424 = vmatmul.mubr.f32.gmra.mrb[0].mxu0 %v1043
        %v2425 = vpop.f32.mrb[0].mxu0
        %v2426 = vpop.f32.mrb[0].mxu0
        %2427 = vmatprep.mubr.f32.mxu0 0.0
        %2428 = vmatmul.mubr.f32.gmra.mrb[0].mxu0 %v1042
        %v2429 = vpop.f32.mrb[0].mxu0
        %v2430 = vpop.f32.mrb[0].mxu0
        %2431 = vmatprep.mubr.f32.mxu0 0.0
        %2432 = vmatmul.mubr.f32.gmra.mrb[0].mxu0 %v1041
        %v2433 = vpop.f32.mrb[0].mxu0
        %v2434 = vadd.f32 %v2225, %v2433
        %v2435 = vpop.f32.mrb[0].mxu0
        %2436 = vmatprep.mubr.f32.mxu0 0.0
        %2437 = vmatmul.mubr.f32.gmra.mrb[0].mxu0 %v1040
        %v2438 = vpop.f32.mrb[0].mxu0
        %v2439 = vadd.f32 %v2230, %v2438
        %v2440 = vpop.f32.mrb[0].mxu0
        %2441 = vmatprep.mubr.f32.mxu0 0.0
        %2442 = vmatmul.mubr.f32.gmra.mrb[0].mxu0 %v1039
        %v2443 = vpop.f32.mrb[0].mxu0
        %v2444 = vpop.f32.mrb[0].mxu0
        %2445 = vmatprep.mubr.f32.mxu0 0.0
        %2446 = vmatmul.mubr.f32.gmra.mrb[0].mxu0 %v1038
        %v2447 = vpop.f32.mrb[0].mxu0
        %v2448 = vpop.f32.mrb[0].mxu0
        %2449 = vmatprep.mubr.f32.mxu0 0.0
        %2450 = vmatmul.mubr.f32.gmra.mrb[0].mxu0 %v1037
        %v2451 = vpop.f32.mrb[0].mxu0
        %v2452 = vadd.f32 %v2243, %v2451
        %v2453 = vpop.f32.mrb[0].mxu0
        %2454 = vmatprep.mubr.f32.mxu0 0.0
        %2455 = vmatmul.mubr.f32.gmra.mrb[0].mxu0 %v1036
        %v2456 = vpop.f32.mrb[0].mxu0
        %v2457 = vadd.f32 %v2248, %v2456
        %v2458 = vpop.f32.mrb[0].mxu0
        %2459 = vmatprep.mubr.f32.mxu0 0.0
        %2460 = vmatmul.mubr.f32.gmra.mrb[0].mxu0 %v1035
        %v2461 = vpop.f32.mrb[0].mxu0
        %v2462 = vpop.f32.mrb[0].mxu0
        %2463 = vmatprep.mubr.f32.mxu0 0.0
        %2464 = vmatmul.mubr.f32.gmra.mrb[0].mxu0 %v1034
        %v2465 = vpop.f32.mrb[0].mxu0
        %v2466 = vpop.f32.mrb[0].mxu0
        %2467 = vmatprep.mubr.f32.mxu0 0.0
        %2468 = vmatmul.mubr.f32.gmra.mrb[0].mxu0 %v1033
        %v2469 = vpop.f32.mrb[0].mxu0
        %v2470 = vadd.f32 %v2261, %v2469
        %v2471 = vpop.f32.mrb[0].mxu0
        %2472 = vmatprep.mubr.f32.mxu0 0.0
        %2473 = vmatmul.mubr.f32.gmra.mrb[0].mxu0 %v1032
        %v2474 = vpop.f32.mrb[0].mxu0
        %v2475 = vadd.f32 %v2266, %v2474
        %v2476 = vpop.f32.mrb[0].mxu0
        %2477 = vmatprep.mubr.f32.mxu0 0.0
        %2478 = vmatmul.mubr.f32.gmra.mrb[0].mxu0 %v1031
        %v2479 = vpop.f32.mrb[0].mxu0
        %v2480 = vpop.f32.mrb[0].mxu0
        %2481 = vmatprep.mubr.f32.mxu0 0.0
        %2482 = vmatmul.mubr.f32.gmra.mrb[0].mxu0 %v1030
        %v2483 = vpop.f32.mrb[0].mxu0
        %v2484 = vpop.f32.mrb[0].mxu0
        %2485 = vdwg.mxu0
        %v2486 = vadd.f32 %v1877, %v2344
        %v2487 = vadd.f32 %v1882, %v2349
        %v2488 = vadd.f32 %v1895, %v2362
        %v2489 = vadd.f32 %v1900, %v2367
        %v2490 = vadd.f32 %v1913, %v2380
        %v2491 = vadd.f32 %v1918, %v2385
        %v2492 = vadd.f32 %v1931, %v2398
        %v2493 = vadd.f32 %v1936, %v2403
        %v2494 = vadd.f32 %v1949, %v2416
        %v2495 = vadd.f32 %v1954, %v2421
        %v2496 = vadd.f32 %v1967, %v2434
        %v2497 = vadd.f32 %v1972, %v2439
        %v2498 = vadd.f32 %v1985, %v2452
        %v2499 = vadd.f32 %v1990, %v2457
        %v2500 = vadd.f32 %v2003, %v2470
        %v2501 = vadd.f32 %v2008, %v2475
        %v2502 = vld [vmem:[%s4] sm:$0x1]
        %v2504 = vlaneseq
        %v2505 = vshrl.u32 %v2504, 7
        %v2506 = vsub.s32 0, %v2505
        %v2507 = vrot.slane %v2502, %v2506
        %v2509 = vadd.f32 %v2486, %v2507
        %v2510 = vadd.f32 %v2487, %v2507
        %v2511 = vadd.f32 %v2488, %v2507
        %v2512 = vadd.f32 %v2489, %v2507
        %v2513 = vadd.f32 %v2490, %v2507
        %v2514 = vadd.f32 %v2491, %v2507
        %v2515 = vadd.f32 %v2492, %v2507
        %v2516 = vadd.f32 %v2493, %v2507
        %v2517 = vadd.f32 %v2494, %v2507
        %v2518 = vadd.f32 %v2495, %v2507
        %v2519 = vadd.f32 %v2496, %v2507
        %v2520 = vadd.f32 %v2497, %v2507
        %v2521 = vadd.f32 %v2498, %v2507
        %v2522 = vadd.f32 %v2499, %v2507
        %v2523 = vadd.f32 %v2500, %v2507
        %v2524 = vadd.f32 %v2501, %v2507
        %v2525 = vmax.f32 %v2509, 0.0
        %v2526 = vmax.f32 %v2510, 0.0
        %v2527 = vmax.f32 %v2511, 0.0
        %v2528 = vmax.f32 %v2512, 0.0
        %v2529 = vmax.f32 %v2513, 0.0
        %v2530 = vmax.f32 %v2514, 0.0
        %v2531 = vmax.f32 %v2515, 0.0
        %v2532 = vmax.f32 %v2516, 0.0
        %v2533 = vmax.f32 %v2517, 0.0
        %v2534 = vmax.f32 %v2518, 0.0
        %v2535 = vmax.f32 %v2519, 0.0
        %v2536 = vmax.f32 %v2520, 0.0
        %v2537 = vmax.f32 %v2521, 0.0
        %v2538 = vmax.f32 %v2522, 0.0
        %v2539 = vmax.f32 %v2523, 0.0
        %v2540 = vmax.f32 %v2524, 0.0
        %2541 = vst [vmem:[%s288 + $0x8] sm:$0xff] %v2525
        %2542 = vst [vmem:[%s288 + $0x20] sm:$0xff] %v2526
        %2543 = vst [vmem:[%s288 + $0x38] sm:$0xff] %v2527
        %2544 = vst [vmem:[%s288 + $0x50] sm:$0xff] %v2528
        %2545 = vst [vmem:[%s288 + $0x68] sm:$0xff] %v2529
        %2546 = vst [vmem:[%s288 + $0x80] sm:$0xff] %v2530
        %2547 = vst [vmem:[%s288 + $0x98] sm:$0xff] %v2531
        %2548 = vst [vmem:[%s288 + $0xb0] sm:$0xff] %v2532
        %2549 = vst [vmem:[%s288 + $0xc8] sm:$0xff] %v2533
        %2550 = vst [vmem:[%s288 + $0xe0] sm:$0xff] %v2534
        %2551 = vst [vmem:[%s288 + $0xf8] sm:$0xff] %v2535
        %2552 = vst [vmem:[%s288 + $0x110] sm:$0xff] %v2536
        %2553 = vst [vmem:[%s288 + $0x128] sm:$0xff] %v2537
        %2554 = vst [vmem:[%s288 + $0x140] sm:$0xff] %v2538
        %2555 = vst [vmem:[%s288 + $0x158] sm:$0xff] %v2539
        %2556 = vst [vmem:[%s288 + $0x170] sm:$0xff] %v2540
        %v2557 = vrot.slane %v351, 4
        %v2558 = vrot.slane %v352, 4
        %v2559 = vrot.slane %v353, 4
        %v2560 = vrot.slane %v354, 4
        %v2561 = vrot.slane %v355, 4
        %v2562 = vrot.slane %v356, 4
        %v2563 = vrot.slane %v357, 4
        %v2564 = vrot.slane %v358, 4
        %v2565 = vrot.slane %v359, 4
        %v2566 = vrot.slane %v360, 4
        %v2567 = vrot.slane %v361, 4
        %v2568 = vrot.slane %v362, 4
        %v2569 = vrot.slane %v363, 4
        %v2570 = vrot.slane %v364, 4
        %v2571 = vrot.slane %v365, 4
        %v2572 = vrot.slane %v366, 4
        %v2573 = vrot.slane %v367, 4
        %v2574 = vrot.slane %v368, 4
        %v2575 = vrot.slane %v369, 4
        %v2576 = vrot.slane %v370, 4
        %v2577 = vrot.slane %v371, 4
        %v2578 = vrot.slane %v372, 4
        %v2579 = vrot.slane %v373, 4
        %v2580 = vrot.slane %v374, 4
        %v2581 = vrot.slane %v375, 4
        %v2582 = vrot.slane %v376, 4
        %v2583 = vrot.slane %v377, 4
        %v2584 = vrot.slane %v378, 4
        %v2585 = vrot.slane %v379, 4
        %v2586 = vrot.slane %v380, 4
        %v2587 = vrot.slane %v381, 4
        %v2588 = vrot.slane %v382, 4
        %v2589 = vrot.slane %v383, 4
        %v2590 = vrot.slane %v384, 4
        %v2591 = vrot.slane %v385, 4
        %v2592 = vrot.slane %v386, 4
        %v2593 = vrot.slane %v387, 4
        %v2594 = vrot.slane %v388, 4
        %v2595 = vrot.slane %v389, 4
        %v2596 = vrot.slane %v390, 4
        %v2597 = vrot.slane %v391, 4
        %v2598 = vrot.slane %v392, 4
        %v2599 = vrot.slane %v393, 4
        %v2600 = vrot.slane %v394, 4
        %v2601 = vrot.slane %v395, 4
        %v2602 = vrot.slane %v396, 4
        %v2603 = vrot.slane %v397, 4
        %v2604 = vrot.slane %v398, 4
        %v2605 = vrot.slane %v399, 4
        %v2606 = vrot.slane %v400, 4
        %v2607 = vrot.slane %v401, 4
        %v2608 = vrot.slane %v402, 4
        %v2609 = vrot.slane %v403, 4
        %v2610 = vrot.slane %v404, 4
        %v2611 = vrot.slane %v405, 4
        %v2612 = vrot.slane %v406, 4
        %v2613 = vrot.slane %v407, 4
        %v2614 = vrot.slane %v408, 4
        %v2615 = vrot.slane %v409, 4
        %v2616 = vrot.slane %v410, 4
        %v2617 = vrot.slane %v411, 4
        %v2618 = vrot.slane %v412, 4
        %v2619 = vrot.slane %v413, 4
        %v2620 = vrot.slane %v414, 4
        %v2621 = vrot.slane %v415, 4
        %v2622 = vrot.slane %v416, 4
        %v2623 = vrot.slane %v417, 4
        %v2624 = vrot.slane %v418, 4
        %v2625 = vrot.slane %v419, 4
        %v2626 = vrot.slane %v420, 4
        %v2627 = vrot.slane %v421, 4
        %v2628 = vrot.slane %v422, 4
        %v2629 = vrot.slane %v423, 4
        %v2630 = vrot.slane %v424, 4
        %v2631 = vrot.slane %v425, 4
        %v2632 = vrot.slane %v426, 4
        %v2633 = vrot.slane %v427, 4
        %v2634 = vrot.slane %v428, 4
        %v2635 = vrot.slane %v429, 4
        %v2636 = vrot.slane %v430, 4
        %vm2637 = vcmp.lt.s32.totalorder %v512, 4
        %v2638 = vsel %vm2637, %v2635, %v2636
        %v2639 = vsel %vm2637, %v2634, %v2635
        %v2640 = vsel %vm2637, %v2633, %v2634
        %v2641 = vsel %vm2637, %v2632, %v2633
        %v2642 = vsel %vm2637, %v2631, %v2632
        %v2643 = vsel %vm2637, %v2630, %v2631
        %v2644 = vsel %vm2637, %v2629, %v2630
        %v2645 = vsel %vm2637, %v2628, %v2629
        %v2646 = vsel %vm2637, %v2627, %v2628
        %v2647 = vsel %vm2637, %v2626, %v2627
        %v2648 = vsel %vm2637, %v2625, %v2626
        %v2649 = vsel %vm2637, %v2624, %v2625
        %v2650 = vsel %vm2637, %v2623, %v2624
        %v2651 = vsel %vm2637, %v2622, %v2623
        %v2652 = vsel %vm2637, %v2621, %v2622
        %v2653 = vsel %vm2637, %v2620, %v2621
        %v2654 = vsel %vm2637, %v2619, %v2620
        %v2655 = vsel %vm2637, %v2618, %v2619
        %v2656 = vsel %vm2637, %v2617, %v2618
        %v2657 = vsel %vm2637, %v2616, %v2617
        %v2658 = vsel %vm2637, %v2615, %v2616
        %v2659 = vsel %vm2637, %v2614, %v2615
        %v2660 = vsel %vm2637, %v2613, %v2614
        %v2661 = vsel %vm2637, %v2612, %v2613
        %v2662 = vsel %vm2637, %v2611, %v2612
        %v2663 = vsel %vm2637, %v2610, %v2611
        %v2664 = vsel %vm2637, %v2609, %v2610
        %v2665 = vsel %vm2637, %v2608, %v2609
        %v2666 = vsel %vm2637, %v2607, %v2608
        %v2667 = vsel %vm2637, %v2606, %v2607
        %v2668 = vsel %vm2637, %v2605, %v2606
        %v2669 = vsel %vm2637, %v2604, %v2605
        %v2670 = vsel %vm2637, %v2603, %v2604
        %v2671 = vsel %vm2637, %v2602, %v2603
        %v2672 = vsel %vm2637, %v2601, %v2602
        %v2673 = vsel %vm2637, %v2600, %v2601
        %v2674 = vsel %vm2637, %v2599, %v2600
        %v2675 = vsel %vm2637, %v2598, %v2599
        %v2676 = vsel %vm2637, %v2597, %v2598
        %v2677 = vsel %vm2637, %v2596, %v2597
        %v2678 = vsel %vm2637, %v2595, %v2596
        %v2679 = vsel %vm2637, %v2594, %v2595
        %v2680 = vsel %vm2637, %v2593, %v2594
        %v2681 = vsel %vm2637, %v2592, %v2593
        %v2682 = vsel %vm2637, %v2591, %v2592
        %v2683 = vsel %vm2637, %v2590, %v2591
        %v2684 = vsel %vm2637, %v2589, %v2590
        %v2685 = vsel %vm2637, %v2588, %v2589
        %v2686 = vsel %vm2637, %v2587, %v2588
        %v2687 = vsel %vm2637, %v2586, %v2587
        %v2688 = vsel %vm2637, %v2585, %v2586
        %v2689 = vsel %vm2637, %v2584, %v2585
        %v2690 = vsel %vm2637, %v2583, %v2584
        %v2691 = vsel %vm2637, %v2582, %v2583
        %v2692 = vsel %vm2637, %v2581, %v2582
        %v2693 = vsel %vm2637, %v2580, %v2581
        %v2694 = vsel %vm2637, %v2579, %v2580
        %v2695 = vsel %vm2637, %v2578, %v2579
        %v2696 = vsel %vm2637, %v2577, %v2578
        %v2697 = vsel %vm2637, %v2576, %v2577
        %v2698 = vsel %vm2637, %v2575, %v2576
        %v2699 = vsel %vm2637, %v2574, %v2575
        %v2700 = vsel %vm2637, %v2573, %v2574
        %v2701 = vsel %vm2637, %v2572, %v2573
        %v2702 = vsel %vm2637, %v2571, %v2572
        %v2703 = vsel %vm2637, %v2570, %v2571
        %v2704 = vsel %vm2637, %v2569, %v2570
        %v2705 = vsel %vm2637, %v2568, %v2569
        %v2706 = vsel %vm2637, %v2567, %v2568
        %v2707 = vsel %vm2637, %v2566, %v2567
        %v2708 = vsel %vm2637, %v2565, %v2566
        %v2709 = vsel %vm2637, %v2564, %v2565
        %v2710 = vsel %vm2637, %v2563, %v2564
        %v2711 = vsel %vm2637, %v2562, %v2563
        %v2712 = vsel %vm2637, %v2561, %v2562
        %v2713 = vsel %vm2637, %v2560, %v2561
        %v2714 = vsel %vm2637, %v2559, %v2560
        %v2715 = vsel %vm2637, %v2558, %v2559
        %v2716 = vsel %vm2637, %v2557, %v2558
        %v2717 = vsel %vm2637, %v2636, %v2557
        %v2718 = vld [vmem:[#allocation9] sm:$0xff]
        %v2719 = vld [vmem:[#allocation9 + $0x8] sm:$0xff]
        %v2720 = vld [vmem:[#allocation9 + $0x10] sm:$0xff]
        %v2721 = vld [vmem:[#allocation9 + $0x18] sm:$0xff]
        %v2722 = vld [vmem:[#allocation9 + $0x20] sm:$0xff]
        %v2723 = vld [vmem:[#allocation9 + $0x28] sm:$0xff]
        %v2724 = vld [vmem:[#allocation9 + $0x30] sm:$0xff]
        %v2725 = vld [vmem:[#allocation9 + $0x38] sm:$0xff]
        %v2726 = vld [vmem:[#allocation9 + $0x40] sm:$0xff]
        %v2727 = vld [vmem:[#allocation9 + $0x48] sm:$0xff]
        %v2728 = vld [vmem:[#allocation9 + $0x50] sm:$0xff]
        %v2729 = vld [vmem:[#allocation9 + $0x58] sm:$0xff]
        %v2730 = vld [vmem:[#allocation9 + $0x60] sm:$0xff]
        %v2731 = vld [vmem:[#allocation9 + $0x68] sm:$0xff]
        %v2732 = vld [vmem:[#allocation9 + $0x70] sm:$0xff]
        %v2733 = vld [vmem:[#allocation9 + $0x78] sm:$0xff]
        %v2734 = vld [vmem:[#allocation9 + $0x80] sm:$0xff]
        %v2735 = vld [vmem:[#allocation9 + $0x88] sm:$0xff]
        %v2736 = vld [vmem:[#allocation9 + $0x90] sm:$0xff]
        %v2737 = vld [vmem:[#allocation9 + $0x98] sm:$0xff]
        %v2738 = vld [vmem:[#allocation9 + $0xa0] sm:$0xff]
        %v2739 = vld [vmem:[#allocation9 + $0xa8] sm:$0xff]
        %v2740 = vld [vmem:[#allocation9 + $0xb0] sm:$0xff]
        %v2741 = vld [vmem:[#allocation9 + $0xb8] sm:$0xff]
        %v2742 = vld [vmem:[#allocation9 + $0xc0] sm:$0xff]
        %v2743 = vld [vmem:[#allocation9 + $0xc8] sm:$0xff]
        %v2744 = vld [vmem:[#allocation9 + $0xd0] sm:$0xff]
        %v2745 = vld [vmem:[#allocation9 + $0xd8] sm:$0xff]
        %v2746 = vld [vmem:[#allocation9 + $0xe0] sm:$0xff]
        %v2747 = vld [vmem:[#allocation9 + $0xe8] sm:$0xff]
        %v2748 = vld [vmem:[#allocation9 + $0xf0] sm:$0xff]
        %v2749 = vld [vmem:[#allocation9 + $0xf8] sm:$0xff]
        %v2750 = vld [vmem:[#allocation9 + $0x100] sm:$0xff]
        %v2751 = vld [vmem:[#allocation9 + $0x108] sm:$0xff]
        %v2752 = vld [vmem:[#allocation9 + $0x110] sm:$0xff]
        %v2753 = vld [vmem:[#allocation9 + $0x118] sm:$0xff]
        %v2754 = vld [vmem:[#allocation9 + $0x120] sm:$0xff]
        %v2755 = vld [vmem:[#allocation9 + $0x128] sm:$0xff]
        %v2756 = vld [vmem:[#allocation9 + $0x130] sm:$0xff]
        %v2757 = vld [vmem:[#allocation9 + $0x138] sm:$0xff]
        %v2758 = vld [vmem:[#allocation9 + $0x140] sm:$0xff]
        %v2759 = vld [vmem:[#allocation9 + $0x148] sm:$0xff]
        %v2760 = vld [vmem:[#allocation9 + $0x150] sm:$0xff]
        %v2761 = vld [vmem:[#allocation9 + $0x158] sm:$0xff]
        %v2762 = vld [vmem:[#allocation9 + $0x160] sm:$0xff]
        %v2763 = vld [vmem:[#allocation9 + $0x168] sm:$0xff]
        %v2764 = vld [vmem:[#allocation9 + $0x170] sm:$0xff]
        %v2765 = vld [vmem:[#allocation9 + $0x178] sm:$0xff]
        %s2766 = scalar_lea.vmem [#allocation9], 384
        %v2767 = vld [vmem:[%s2766] sm:$0xff]
        %v2768 = vld [vmem:[%s2766 + $0x8] sm:$0xff]
        %v2769 = vld [vmem:[%s2766 + $0x10] sm:$0xff]
        %v2770 = vld [vmem:[%s2766 + $0x18] sm:$0xff]
        %v2771 = vld [vmem:[%s2766 + $0x20] sm:$0xff]
        %v2772 = vld [vmem:[%s2766 + $0x28] sm:$0xff]
        %v2773 = vld [vmem:[%s2766 + $0x30] sm:$0xff]
        %v2774 = vld [vmem:[%s2766 + $0x38] sm:$0xff]
        %v2775 = vld [vmem:[%s2766 + $0x40] sm:$0xff]
        %v2776 = vld [vmem:[%s2766 + $0x48] sm:$0xff]
        %v2777 = vld [vmem:[%s2766 + $0x50] sm:$0xff]
        %v2778 = vld [vmem:[%s2766 + $0x58] sm:$0xff]
        %v2779 = vld [vmem:[%s2766 + $0x60] sm:$0xff]
        %v2780 = vld [vmem:[%s2766 + $0x68] sm:$0xff]
        %v2781 = vld [vmem:[%s2766 + $0x70] sm:$0xff]
        %v2782 = vld [vmem:[%s2766 + $0x78] sm:$0xff]
        %v2783 = vld [vmem:[%s2766 + $0x80] sm:$0xff]
        %v2784 = vld [vmem:[%s2766 + $0x88] sm:$0xff]
        %v2785 = vld [vmem:[%s2766 + $0x90] sm:$0xff]
        %v2786 = vld [vmem:[%s2766 + $0x98] sm:$0xff]
        %v2787 = vld [vmem:[%s2766 + $0xa0] sm:$0xff]
        %v2788 = vld [vmem:[%s2766 + $0xa8] sm:$0xff]
        %v2789 = vld [vmem:[%s2766 + $0xb0] sm:$0xff]
        %v2790 = vld [vmem:[%s2766 + $0xb8] sm:$0xff]
        %v2791 = vld [vmem:[%s2766 + $0xc0] sm:$0xff]
        %v2792 = vld [vmem:[%s2766 + $0xc8] sm:$0xff]
        %v2793 = vld [vmem:[%s2766 + $0xd0] sm:$0xff]
        %v2794 = vld [vmem:[%s2766 + $0xd8] sm:$0xff]
        %v2795 = vld [vmem:[%s2766 + $0xe0] sm:$0xff]
        %v2796 = vld [vmem:[%s2766 + $0xe8] sm:$0xff]
        %v2797 = vld [vmem:[%s2766 + $0xf0] sm:$0xff]
        %v2798 = vld [vmem:[%s2766 + $0xf8] sm:$0xff]
        %v2799 = vld [vmem:[%s2766 + $0x100] sm:$0xff]
        %v2800 = vld [vmem:[%s2766 + $0x108] sm:$0xff]
        %v2801 = vld [vmem:[%s2766 + $0x110] sm:$0xff]
        %v2802 = vld [vmem:[%s2766 + $0x118] sm:$0xff]
        %v2803 = vld [vmem:[%s2766 + $0x120] sm:$0xff]
        %v2804 = vld [vmem:[%s2766 + $0x128] sm:$0xff]
        %v2805 = vld [vmem:[%s2766 + $0x130] sm:$0xff]
        %v2806 = vld [vmem:[%s2766 + $0x138] sm:$0xff]
        %v2807 = vld [vmem:[%s2766 + $0x140] sm:$0xff]
        %v2808 = vld [vmem:[%s2766 + $0x148] sm:$0xff]
        %v2809 = vld [vmem:[%s2766 + $0x150] sm:$0xff]
        %v2810 = vld [vmem:[%s2766 + $0x158] sm:$0xff]
        %v2811 = vld [vmem:[%s2766 + $0x160] sm:$0xff]
        %v2812 = vld [vmem:[%s2766 + $0x168] sm:$0xff]
        %v2813 = vld [vmem:[%s2766 + $0x170] sm:$0xff]
        %v2814 = vld [vmem:[%s2766 + $0x178] sm:$0xff]
        %2815 = vmatprep.subr.mxu0 0.0
        %2816 = vmatpush1.msra.mxu0 %v2767
        %2817 = vmatprep.subr.mxu0 0.0
        %2818 = vmatpush1.msra.mxu0 %v2768
        %2819 = vmatprep.subr.mxu0 0.0
        %2820 = vmatpush1.msra.mxu0 %v2769
        %2821 = vmatprep.subr.mxu0 0.0
        %2822 = vmatpush1.msra.mxu0 %v2770
        %2823 = vmatprep.subr.mxu0 0.0
        %2824 = vmatpush1.msra.mxu0 %v2771
        %2825 = vmatprep.subr.mxu0 0.0
        %2826 = vmatpush1.msra.mxu0 %v2772
        %2827 = vmatprep.subr.mxu0 0.0
        %2828 = vmatpush1.msra.mxu0 %v2773
        %2829 = vmatprep.subr.mxu0 0.0
        %2830 = vmatpush1.msra.mxu0 %v2774
        %2831 = vmatprep.subr.mxu0 0.0
        %2832 = vmatpush1.msra.mxu0 %v2775
        %2833 = vmatprep.subr.mxu0 0.0
        %2834 = vmatpush1.msra.mxu0 %v2776
        %2835 = vmatprep.subr.mxu0 0.0
        %2836 = vmatpush1.msra.mxu0 %v2777
        %2837 = vmatprep.subr.mxu0 0.0
        %2838 = vmatpush1.msra.mxu0 %v2778
        %2839 = vmatprep.subr.mxu0 0.0
        %2840 = vmatpush1.msra.mxu0 %v2779
        %2841 = vmatprep.subr.mxu0 0.0
        %2842 = vmatpush1.msra.mxu0 %v2780
        %2843 = vmatprep.subr.mxu0 0.0
        %2844 = vmatpush1.msra.mxu0 %v2781
        %2845 = vmatprep.subr.mxu0 0.0
        %2846 = vmatpush1.msra.mxu0 %v2782
        %2847 = vmatprep.subr.mxu0 0.0
        %2848 = vmatpush1.msra.mxu0 %v2783
        %2849 = vmatprep.subr.mxu0 0.0
        %2850 = vmatpush1.msra.mxu0 %v2784
        %2851 = vmatprep.subr.mxu0 0.0
        %2852 = vmatpush1.msra.mxu0 %v2785
        %2853 = vmatprep.subr.mxu0 0.0
        %2854 = vmatpush1.msra.mxu0 %v2786
        %2855 = vmatprep.subr.mxu0 0.0
        %2856 = vmatpush1.msra.mxu0 %v2787
        %2857 = vmatprep.subr.mxu0 0.0
        %2858 = vmatpush1.msra.mxu0 %v2788
        %2859 = vmatprep.subr.mxu0 0.0
        %2860 = vmatpush1.msra.mxu0 %v2789
        %2861 = vmatprep.subr.mxu0 0.0
        %2862 = vmatpush1.msra.mxu0 %v2790
        %2863 = vmatprep.subr.mxu0 0.0
        %2864 = vmatpush1.msra.mxu0 %v2791
        %2865 = vmatprep.subr.mxu0 0.0
        %2866 = vmatpush1.msra.mxu0 %v2792
        %2867 = vmatprep.subr.mxu0 0.0
        %2868 = vmatpush1.msra.mxu0 %v2793
        %2869 = vmatprep.subr.mxu0 0.0
        %2870 = vmatpush1.msra.mxu0 %v2794
        %2871 = vmatprep.subr.mxu0 0.0
        %2872 = vmatpush1.msra.mxu0 %v2795
        %2873 = vmatprep.subr.mxu0 0.0
        %2874 = vmatpush1.msra.mxu0 %v2796
        %2875 = vmatprep.subr.mxu0 0.0
        %2876 = vmatpush1.msra.mxu0 %v2797
        %2877 = vmatprep.subr.mxu0 0.0
        %2878 = vmatpush1.msra.mxu0 %v2798
        %2879 = vmatprep.mubr.f32.mxu0 %v568
        %2880 = vmatmul.mubr.f32.gmra.mrb[0].mxu0 %v375
        %v2881 = vpop.f32.mrb[0].mxu0
        %v2882 = vadd.f32 0.0, %v2881
        %v2883 = vpop.f32.mrb[0].mxu0
        %2884 = vmatprep.mubr.f32.mxu0 %v567
        %2885 = vmatmul.mubr.f32.gmra.mrb[0].mxu0 %v376
        %v2886 = vpop.f32.mrb[0].mxu0
        %v2887 = vadd.f32 0.0, %v2886
        %v2888 = vpop.f32.mrb[0].mxu0
        %2889 = vmatprep.mubr.f32.mxu0 %v566
        %2890 = vmatmul.mubr.f32.gmra.mrb[0].mxu0 %v377
        %v2891 = vpop.f32.mrb[0].mxu0
        %v2892 = vpop.f32.mrb[0].mxu0
        %2893 = vmatprep.mubr.f32.mxu0 %v565
        %2894 = vmatmul.mubr.f32.gmra.mrb[0].mxu0 %v378
        %v2895 = vpop.f32.mrb[0].mxu0
        %v2896 = vpop.f32.mrb[0].mxu0
        %2897 = vmatprep.mubr.f32.mxu0 %v564
        %2898 = vmatmul.mubr.f32.gmra.mrb[0].mxu0 %v379
        %v2899 = vpop.f32.mrb[0].mxu0
        %v2900 = vadd.f32 0.0, %v2899
        %v2901 = vpop.f32.mrb[0].mxu0
        %2902 = vmatprep.mubr.f32.mxu0 %v563
        %2903 = vmatmul.mubr.f32.gmra.mrb[0].mxu0 %v380
        %v2904 = vpop.f32.mrb[0].mxu0
        %v2905 = vadd.f32 0.0, %v2904
        %v2906 = vpop.f32.mrb[0].mxu0
        %2907 = vmatprep.mubr.f32.mxu0 %v562
        %2908 = vmatmul.mubr.f32.gmra.mrb[0].mxu0 %v381
        %v2909 = vpop.f32.mrb[0].mxu0
        %v2910 = vpop.f32.mrb[0].mxu0
        %2911 = vmatprep.mubr.f32.mxu0 %v561
        %2912 = vmatmul.mubr.f32.gmra.mrb[0].mxu0 %v382
        %v2913 = vpop.f32.mrb[0].mxu0
        %v2914 = vpop.f32.mrb[0].mxu0
        %2915 = vmatprep.mubr.f32.mxu0 %v560
        %2916 = vmatmul.mubr.f32.gmra.mrb[0].mxu0 %v383
        %v2917 = vpop.f32.mrb[0].mxu0
        %v2918 = vadd.f32 0.0, %v2917
        %v2919 = vpop.f32.mrb[0].mxu0
        %2920 = vmatprep.mubr.f32.mxu0 %v559
        %2921 = vmatmul.mubr.f32.gmra.mrb[0].mxu0 %v384
        %v2922 = vpop.f32.mrb[0].mxu0
        %v2923 = vadd.f32 0.0, %v2922
        %v2924 = vpop.f32.mrb[0].mxu0
        %2925 = vmatprep.mubr.f32.mxu0 %v558
        %2926 = vmatmul.mubr.f32.gmra.mrb[0].mxu0 %v385
        %v2927 = vpop.f32.mrb[0].mxu0
        %v2928 = vpop.f32.mrb[0].mxu0
        %2929 = vmatprep.mubr.f32.mxu0 %v557
        %2930 = vmatmul.mubr.f32.gmra.mrb[0].mxu0 %v386
        %v2931 = vpop.f32.mrb[0].mxu0
        %v2932 = vpop.f32.mrb[0].mxu0
        %2933 = vmatprep.mubr.f32.mxu0 %v556
        %2934 = vmatmul.mubr.f32.gmra.mrb[0].mxu0 %v387
        %v2935 = vpop.f32.mrb[0].mxu0
        %v2936 = vadd.f32 0.0, %v2935
        %v2937 = vpop.f32.mrb[0].mxu0
        %2938 = vmatprep.mubr.f32.mxu0 %v555
        %2939 = vmatmul.mubr.f32.gmra.mrb[0].mxu0 %v388
        %v2940 = vpop.f32.mrb[0].mxu0
        %v2941 = vadd.f32 0.0, %v2940
        %v2942 = vpop.f32.mrb[0].mxu0
        %2943 = vmatprep.mubr.f32.mxu0 %v554
        %2944 = vmatmul.mubr.f32.gmra.mrb[0].mxu0 %v389
        %v2945 = vpop.f32.mrb[0].mxu0
        %v2946 = vpop.f32.mrb[0].mxu0
        %2947 = vmatprep.mubr.f32.mxu0 %v553
        %2948 = vmatmul.mubr.f32.gmra.mrb[0].mxu0 %v390
        %v2949 = vpop.f32.mrb[0].mxu0
        %v2950 = vpop.f32.mrb[0].mxu0
        %2951 = vmatprep.mubr.f32.mxu0 %v552
        %2952 = vmatmul.mubr.f32.gmra.mrb[0].mxu0 %v391
        %v2953 = vpop.f32.mrb[0].mxu0
        %v2954 = vadd.f32 0.0, %v2953
        %v2955 = vpop.f32.mrb[0].mxu0
        %2956 = vmatprep.mubr.f32.mxu0 %v551
        %2957 = vmatmul.mubr.f32.gmra.mrb[0].mxu0 %v392
        %v2958 = vpop.f32.mrb[0].mxu0
        %v2959 = vadd.f32 0.0, %v2958
        %v2960 = vpop.f32.mrb[0].mxu0
        %2961 = vmatprep.mubr.f32.mxu0 %v550
        %2962 = vmatmul.mubr.f32.gmra.mrb[0].mxu0 %v393
        %v2963 = vpop.f32.mrb[0].mxu0
        %v2964 = vpop.f32.mrb[0].mxu0
        %2965 = vmatprep.mubr.f32.mxu0 %v549
        %2966 = vmatmul.mubr.f32.gmra.mrb[0].mxu0 %v394
        %v2967 = vpop.f32.mrb[0].mxu0
        %v2968 = vpop.f32.mrb[0].mxu0
        %2969 = vmatprep.mubr.f32.mxu0 %v548
        %2970 = vmatmul.mubr.f32.gmra.mrb[0].mxu0 %v395
        %v2971 = vpop.f32.mrb[0].mxu0
        %v2972 = vadd.f32 0.0, %v2971
        %v2973 = vpop.f32.mrb[0].mxu0
        %2974 = vmatprep.mubr.f32.mxu0 %v547
        %2975 = vmatmul.mubr.f32.gmra.mrb[0].mxu0 %v396
        %v2976 = vpop.f32.mrb[0].mxu0
        %v2977 = vadd.f32 0.0, %v2976
        %v2978 = vpop.f32.mrb[0].mxu0
        %2979 = vmatprep.mubr.f32.mxu0 %v546
        %2980 = vmatmul.mubr.f32.gmra.mrb[0].mxu0 %v397
        %v2981 = vpop.f32.mrb[0].mxu0
        %v2982 = vpop.f32.mrb[0].mxu0
        %2983 = vmatprep.mubr.f32.mxu0 %v545
        %2984 = vmatmul.mubr.f32.gmra.mrb[0].mxu0 %v398
        %v2985 = vpop.f32.mrb[0].mxu0
        %v2986 = vpop.f32.mrb[0].mxu0
        %2987 = vmatprep.mubr.f32.mxu0 %v544
        %2988 = vmatmul.mubr.f32.gmra.mrb[0].mxu0 %v399
        %v2989 = vpop.f32.mrb[0].mxu0
        %v2990 = vadd.f32 0.0, %v2989
        %v2991 = vpop.f32.mrb[0].mxu0
        %2992 = vmatprep.mubr.f32.mxu0 %v543
        %2993 = vmatmul.mubr.f32.gmra.mrb[0].mxu0 %v400
        %v2994 = vpop.f32.mrb[0].mxu0
        %v2995 = vadd.f32 0.0, %v2994
        %v2996 = vpop.f32.mrb[0].mxu0
        %2997 = vmatprep.mubr.f32.mxu0 %v542
        %2998 = vmatmul.mubr.f32.gmra.mrb[0].mxu0 %v401
        %v2999 = vpop.f32.mrb[0].mxu0
        %v3000 = vpop.f32.mrb[0].mxu0
        %3001 = vmatprep.mubr.f32.mxu0 %v541
        %3002 = vmatmul.mubr.f32.gmra.mrb[0].mxu0 %v402
        %v3003 = vpop.f32.mrb[0].mxu0
        %v3004 = vpop.f32.mrb[0].mxu0
        %3005 = vmatprep.mubr.f32.mxu0 %v540
        %3006 = vmatmul.mubr.f32.gmra.mrb[0].mxu0 %v403
        %v3007 = vpop.f32.mrb[0].mxu0
        %v3008 = vadd.f32 0.0, %v3007
        %v3009 = vpop.f32.mrb[0].mxu0
        %3010 = vmatprep.mubr.f32.mxu0 %v539
        %3011 = vmatmul.mubr.f32.gmra.mrb[0].mxu0 %v404
        %v3012 = vpop.f32.mrb[0].mxu0
        %v3013 = vadd.f32 0.0, %v3012
        %v3014 = vpop.f32.mrb[0].mxu0
        %3015 = vmatprep.mubr.f32.mxu0 %v538
        %3016 = vmatmul.mubr.f32.gmra.mrb[0].mxu0 %v405
        %v3017 = vpop.f32.mrb[0].mxu0
        %v3018 = vpop.f32.mrb[0].mxu0
        %3019 = vmatprep.mubr.f32.mxu0 %v537
        %3020 = vmatmul.mubr.f32.gmra.mrb[0].mxu0 %v406
        %v3021 = vpop.f32.mrb[0].mxu0
        %v3022 = vpop.f32.mrb[0].mxu0
        %3023 = vdwg.mxu0
        %3024 = vmatprep.subr.mxu0 0.0
        %3025 = vmatpush1.msra.mxu0 %v2799
        %3026 = vmatprep.subr.mxu0 0.0
        %3027 = vmatpush1.msra.mxu0 %v2800
        %3028 = vmatprep.subr.mxu0 0.0
        %3029 = vmatpush1.msra.mxu0 %v2801
        %3030 = vmatprep.subr.mxu0 0.0
        %3031 = vmatpush1.msra.mxu0 %v2802
        %3032 = vmatprep.subr.mxu0 0.0
        %3033 = vmatpush1.msra.mxu0 %v2803
        %3034 = vmatprep.subr.mxu0 0.0
        %3035 = vmatpush1.msra.mxu0 %v2804
        %3036 = vmatprep.subr.mxu0 0.0
        %3037 = vmatpush1.msra.mxu0 %v2805
        %3038 = vmatprep.subr.mxu0 0.0
        %3039 = vmatpush1.msra.mxu0 %v2806
        %3040 = vmatprep.subr.mxu0 0.0
        %3041 = vmatpush1.msra.mxu0 %v2807
        %3042 = vmatprep.subr.mxu0 0.0
        %3043 = vmatpush1.msra.mxu0 %v2808
        %3044 = vmatprep.subr.mxu0 0.0
        %3045 = vmatpush1.msra.mxu0 %v2809
        %3046 = vmatprep.subr.mxu0 0.0
        %3047 = vmatpush1.msra.mxu0 %v2810
        %3048 = vmatprep.subr.mxu0 0.0
        %3049 = vmatpush1.msra.mxu0 %v2811
        %3050 = vmatprep.subr.mxu0 0.0
        %3051 = vmatpush1.msra.mxu0 %v2812
        %3052 = vmatprep.subr.mxu0 0.0
        %3053 = vmatpush1.msra.mxu0 %v2813
        %3054 = vmatprep.subr.mxu0 0.0
        %3055 = vmatpush1.msra.mxu0 %v2814
        %3056 = vmatprep.subr.mxu0 0.0
        %3057 = vmatpush1.msra.mxu0 0.0
        %3058 = vmatprep.subr.mxu0 0.0
        %3059 = vmatpush1.msra.mxu0 0.0
        %3060 = vmatprep.subr.mxu0 0.0
        %3061 = vmatpush1.msra.mxu0 0.0
        %3062 = vmatprep.subr.mxu0 0.0
        %3063 = vmatpush1.msra.mxu0 0.0
        %3064 = vmatprep.subr.mxu0 0.0
        %3065 = vmatpush1.msra.mxu0 0.0
        %3066 = vmatprep.subr.mxu0 0.0
        %3067 = vmatpush1.msra.mxu0 0.0
        %3068 = vmatprep.subr.mxu0 0.0
        %3069 = vmatpush1.msra.mxu0 0.0
        %3070 = vmatprep.subr.mxu0 0.0
        %3071 = vmatpush1.msra.mxu0 0.0
        %3072 = vmatprep.subr.mxu0 0.0
        %3073 = vmatpush1.msra.mxu0 0.0
        %3074 = vmatprep.subr.mxu0 0.0
        %3075 = vmatpush1.msra.mxu0 0.0
        %3076 = vmatprep.subr.mxu0 0.0
        %3077 = vmatpush1.msra.mxu0 0.0
        %3078 = vmatprep.subr.mxu0 0.0
        %3079 = vmatpush1.msra.mxu0 0.0
        %3080 = vmatprep.subr.mxu0 0.0
        %3081 = vmatpush1.msra.mxu0 0.0
        %3082 = vmatprep.subr.mxu0 0.0
        %3083 = vmatpush1.msra.mxu0 0.0
        %3084 = vmatprep.subr.mxu0 0.0
        %3085 = vmatpush1.msra.mxu0 0.0
        %3086 = vmatprep.subr.mxu0 0.0
        %3087 = vmatpush1.msra.mxu0 0.0
        %3088 = vmatprep.mubr.f32.mxu0 0.0
        %3089 = vmatmul.mubr.f32.gmra.mrb[0].mxu0 %v2691
        %v3090 = vpop.f32.mrb[0].mxu0
        %v3091 = vadd.f32 %v2882, %v3090
        %v3092 = vpop.f32.mrb[0].mxu0
        %3093 = vmatprep.mubr.f32.mxu0 0.0
        %3094 = vmatmul.mubr.f32.gmra.mrb[0].mxu0 %v2690
        %v3095 = vpop.f32.mrb[0].mxu0
        %v3096 = vadd.f32 %v2887, %v3095
        %v3097 = vpop.f32.mrb[0].mxu0
        %3098 = vmatprep.mubr.f32.mxu0 0.0
        %3099 = vmatmul.mubr.f32.gmra.mrb[0].mxu0 %v2689
        %v3100 = vpop.f32.mrb[0].mxu0
        %v3101 = vpop.f32.mrb[0].mxu0
        %3102 = vmatprep.mubr.f32.mxu0 0.0
        %3103 = vmatmul.mubr.f32.gmra.mrb[0].mxu0 %v2688
        %v3104 = vpop.f32.mrb[0].mxu0
        %v3105 = vpop.f32.mrb[0].mxu0
        %3106 = vmatprep.mubr.f32.mxu0 0.0
        %3107 = vmatmul.mubr.f32.gmra.mrb[0].mxu0 %v2687
        %v3108 = vpop.f32.mrb[0].mxu0
        %v3109 = vadd.f32 %v2900, %v3108
        %v3110 = vpop.f32.mrb[0].mxu0
        %3111 = vmatprep.mubr.f32.mxu0 0.0
        %3112 = vmatmul.mubr.f32.gmra.mrb[0].mxu0 %v2686
        %v3113 = vpop.f32.mrb[0].mxu0
        %v3114 = vadd.f32 %v2905, %v3113
        %v3115 = vpop.f32.mrb[0].mxu0
        %3116 = vmatprep.mubr.f32.mxu0 0.0
        %3117 = vmatmul.mubr.f32.gmra.mrb[0].mxu0 %v2685
        %v3118 = vpop.f32.mrb[0].mxu0
        %v3119 = vpop.f32.mrb[0].mxu0
        %3120 = vmatprep.mubr.f32.mxu0 0.0
        %3121 = vmatmul.mubr.f32.gmra.mrb[0].mxu0 %v2684
        %v3122 = vpop.f32.mrb[0].mxu0
        %v3123 = vpop.f32.mrb[0].mxu0
        %3124 = vmatprep.mubr.f32.mxu0 0.0
        %3125 = vmatmul.mubr.f32.gmra.mrb[0].mxu0 %v2683
        %v3126 = vpop.f32.mrb[0].mxu0
        %v3127 = vadd.f32 %v2918, %v3126
        %v3128 = vpop.f32.mrb[0].mxu0
        %3129 = vmatprep.mubr.f32.mxu0 0.0
        %3130 = vmatmul.mubr.f32.gmra.mrb[0].mxu0 %v2682
        %v3131 = vpop.f32.mrb[0].mxu0
        %v3132 = vadd.f32 %v2923, %v3131
        %v3133 = vpop.f32.mrb[0].mxu0
        %3134 = vmatprep.mubr.f32.mxu0 0.0
        %3135 = vmatmul.mubr.f32.gmra.mrb[0].mxu0 %v2681
        %v3136 = vpop.f32.mrb[0].mxu0
        %v3137 = vpop.f32.mrb[0].mxu0
        %3138 = vmatprep.mubr.f32.mxu0 0.0
        %3139 = vmatmul.mubr.f32.gmra.mrb[0].mxu0 %v2680
        %v3140 = vpop.f32.mrb[0].mxu0
        %v3141 = vpop.f32.mrb[0].mxu0
        %3142 = vmatprep.mubr.f32.mxu0 0.0
        %3143 = vmatmul.mubr.f32.gmra.mrb[0].mxu0 %v2679
        %v3144 = vpop.f32.mrb[0].mxu0
        %v3145 = vadd.f32 %v2936, %v3144
        %v3146 = vpop.f32.mrb[0].mxu0
        %3147 = vmatprep.mubr.f32.mxu0 0.0
        %3148 = vmatmul.mubr.f32.gmra.mrb[0].mxu0 %v2678
        %v3149 = vpop.f32.mrb[0].mxu0
        %v3150 = vadd.f32 %v2941, %v3149
        %v3151 = vpop.f32.mrb[0].mxu0
        %3152 = vmatprep.mubr.f32.mxu0 0.0
        %3153 = vmatmul.mubr.f32.gmra.mrb[0].mxu0 %v2677
        %v3154 = vpop.f32.mrb[0].mxu0
        %v3155 = vpop.f32.mrb[0].mxu0
        %3156 = vmatprep.mubr.f32.mxu0 0.0
        %3157 = vmatmul.mubr.f32.gmra.mrb[0].mxu0 %v2676
        %v3158 = vpop.f32.mrb[0].mxu0
        %v3159 = vpop.f32.mrb[0].mxu0
        %3160 = vmatprep.mubr.f32.mxu0 0.0
        %3161 = vmatmul.mubr.f32.gmra.mrb[0].mxu0 %v2675
        %v3162 = vpop.f32.mrb[0].mxu0
        %v3163 = vadd.f32 %v2954, %v3162
        %v3164 = vpop.f32.mrb[0].mxu0
        %3165 = vmatprep.mubr.f32.mxu0 0.0
        %3166 = vmatmul.mubr.f32.gmra.mrb[0].mxu0 %v2674
        %v3167 = vpop.f32.mrb[0].mxu0
        %v3168 = vadd.f32 %v2959, %v3167
        %v3169 = vpop.f32.mrb[0].mxu0
        %3170 = vmatprep.mubr.f32.mxu0 0.0
        %3171 = vmatmul.mubr.f32.gmra.mrb[0].mxu0 %v2673
        %v3172 = vpop.f32.mrb[0].mxu0
        %v3173 = vpop.f32.mrb[0].mxu0
        %3174 = vmatprep.mubr.f32.mxu0 0.0
        %3175 = vmatmul.mubr.f32.gmra.mrb[0].mxu0 %v2672
        %v3176 = vpop.f32.mrb[0].mxu0
        %v3177 = vpop.f32.mrb[0].mxu0
        %3178 = vmatprep.mubr.f32.mxu0 0.0
        %3179 = vmatmul.mubr.f32.gmra.mrb[0].mxu0 %v2671
        %v3180 = vpop.f32.mrb[0].mxu0
        %v3181 = vadd.f32 %v2972, %v3180
        %v3182 = vpop.f32.mrb[0].mxu0
        %3183 = vmatprep.mubr.f32.mxu0 0.0
        %3184 = vmatmul.mubr.f32.gmra.mrb[0].mxu0 %v2670
        %v3185 = vpop.f32.mrb[0].mxu0
        %v3186 = vadd.f32 %v2977, %v3185
        %v3187 = vpop.f32.mrb[0].mxu0
        %3188 = vmatprep.mubr.f32.mxu0 0.0
        %3189 = vmatmul.mubr.f32.gmra.mrb[0].mxu0 %v2669
        %v3190 = vpop.f32.mrb[0].mxu0
        %v3191 = vpop.f32.mrb[0].mxu0
        %3192 = vmatprep.mubr.f32.mxu0 0.0
        %3193 = vmatmul.mubr.f32.gmra.mrb[0].mxu0 %v2668
        %v3194 = vpop.f32.mrb[0].mxu0
        %v3195 = vpop.f32.mrb[0].mxu0
        %3196 = vmatprep.mubr.f32.mxu0 0.0
        %3197 = vmatmul.mubr.f32.gmra.mrb[0].mxu0 %v2667
        %v3198 = vpop.f32.mrb[0].mxu0
        %v3199 = vadd.f32 %v2990, %v3198
        %v3200 = vpop.f32.mrb[0].mxu0
        %3201 = vmatprep.mubr.f32.mxu0 0.0
        %3202 = vmatmul.mubr.f32.gmra.mrb[0].mxu0 %v2666
        %v3203 = vpop.f32.mrb[0].mxu0
        %v3204 = vadd.f32 %v2995, %v3203
        %v3205 = vpop.f32.mrb[0].mxu0
        %3206 = vmatprep.mubr.f32.mxu0 0.0
        %3207 = vmatmul.mubr.f32.gmra.mrb[0].mxu0 %v2665
        %v3208 = vpop.f32.mrb[0].mxu0
        %v3209 = vpop.f32.mrb[0].mxu0
        %3210 = vmatprep.mubr.f32.mxu0 0.0
        %3211 = vmatmul.mubr.f32.gmra.mrb[0].mxu0 %v2664
        %v3212 = vpop.f32.mrb[0].mxu0
        %v3213 = vpop.f32.mrb[0].mxu0
        %3214 = vmatprep.mubr.f32.mxu0 0.0
        %3215 = vmatmul.mubr.f32.gmra.mrb[0].mxu0 %v2663
        %v3216 = vpop.f32.mrb[0].mxu0
        %v3217 = vadd.f32 %v3008, %v3216
        %v3218 = vpop.f32.mrb[0].mxu0
        %3219 = vmatprep.mubr.f32.mxu0 0.0
        %3220 = vmatmul.mubr.f32.gmra.mrb[0].mxu0 %v2662
        %v3221 = vpop.f32.mrb[0].mxu0
        %v3222 = vadd.f32 %v3013, %v3221
        %v3223 = vpop.f32.mrb[0].mxu0
        %3224 = vmatprep.mubr.f32.mxu0 0.0
        %3225 = vmatmul.mubr.f32.gmra.mrb[0].mxu0 %v2661
        %v3226 = vpop.f32.mrb[0].mxu0
        %v3227 = vpop.f32.mrb[0].mxu0
        %3228 = vmatprep.mubr.f32.mxu0 0.0
        %3229 = vmatmul.mubr.f32.gmra.mrb[0].mxu0 %v2660
        %v3230 = vpop.f32.mrb[0].mxu0
        %v3231 = vpop.f32.mrb[0].mxu0
        %3232 = vdwg.mxu0
        %3233 = vmatprep.subr.mxu0 0.0
        %3234 = vmatpush1.msra.mxu0 %v2718
        %3235 = vmatprep.subr.mxu0 0.0
        %3236 = vmatpush1.msra.mxu0 %v2719
        %3237 = vmatprep.subr.mxu0 0.0
        %3238 = vmatpush1.msra.mxu0 %v2720
        %3239 = vmatprep.subr.mxu0 0.0
        %3240 = vmatpush1.msra.mxu0 %v2721
        %3241 = vmatprep.subr.mxu0 0.0
        %3242 = vmatpush1.msra.mxu0 %v2722
        %3243 = vmatprep.subr.mxu0 0.0
        %3244 = vmatpush1.msra.mxu0 %v2723
        %3245 = vmatprep.subr.mxu0 0.0
        %3246 = vmatpush1.msra.mxu0 %v2724
        %3247 = vmatprep.subr.mxu0 0.0
        %3248 = vmatpush1.msra.mxu0 %v2725
        %3249 = vmatprep.subr.mxu0 0.0
        %3250 = vmatpush1.msra.mxu0 %v2726
        %3251 = vmatprep.subr.mxu0 0.0
        %3252 = vmatpush1.msra.mxu0 %v2727
        %3253 = vmatprep.subr.mxu0 0.0
        %3254 = vmatpush1.msra.mxu0 %v2728
        %3255 = vmatprep.subr.mxu0 0.0
        %3256 = vmatpush1.msra.mxu0 %v2729
        %3257 = vmatprep.subr.mxu0 0.0
        %3258 = vmatpush1.msra.mxu0 %v2730
        %3259 = vmatprep.subr.mxu0 0.0
        %3260 = vmatpush1.msra.mxu0 %v2731
        %3261 = vmatprep.subr.mxu0 0.0
        %3262 = vmatpush1.msra.mxu0 %v2732
        %3263 = vmatprep.subr.mxu0 0.0
        %3264 = vmatpush1.msra.mxu0 %v2733
        %3265 = vmatprep.subr.mxu0 0.0
        %3266 = vmatpush1.msra.mxu0 %v2734
        %3267 = vmatprep.subr.mxu0 0.0
        %3268 = vmatpush1.msra.mxu0 %v2735
        %3269 = vmatprep.subr.mxu0 0.0
        %3270 = vmatpush1.msra.mxu0 %v2736
        %3271 = vmatprep.subr.mxu0 0.0
        %3272 = vmatpush1.msra.mxu0 %v2737
        %3273 = vmatprep.subr.mxu0 0.0
        %3274 = vmatpush1.msra.mxu0 %v2738
        %3275 = vmatprep.subr.mxu0 0.0
        %3276 = vmatpush1.msra.mxu0 %v2739
        %3277 = vmatprep.subr.mxu0 0.0
        %3278 = vmatpush1.msra.mxu0 %v2740
        %3279 = vmatprep.subr.mxu0 0.0
        %3280 = vmatpush1.msra.mxu0 %v2741
        %3281 = vmatprep.subr.mxu0 0.0
        %3282 = vmatpush1.msra.mxu0 %v2742
        %3283 = vmatprep.subr.mxu0 0.0
        %3284 = vmatpush1.msra.mxu0 %v2743
        %3285 = vmatprep.subr.mxu0 0.0
        %3286 = vmatpush1.msra.mxu0 %v2744
        %3287 = vmatprep.subr.mxu0 0.0
        %3288 = vmatpush1.msra.mxu0 %v2745
        %3289 = vmatprep.subr.mxu0 0.0
        %3290 = vmatpush1.msra.mxu0 %v2746
        %3291 = vmatprep.subr.mxu0 0.0
        %3292 = vmatpush1.msra.mxu0 %v2747
        %3293 = vmatprep.subr.mxu0 0.0
        %3294 = vmatpush1.msra.mxu0 %v2748
        %3295 = vmatprep.subr.mxu0 0.0
        %3296 = vmatpush1.msra.mxu0 %v2749
        %3297 = vmatprep.mubr.f32.mxu0 %v592
        %3298 = vmatmul.mubr.f32.gmra.mrb[0].mxu0 %v351
        %v3299 = vpop.f32.mrb[0].mxu0
        %v3300 = vadd.f32 %v3091, %v3299
        %v3301 = vpop.f32.mrb[0].mxu0
        %3302 = vmatprep.mubr.f32.mxu0 %v591
        %3303 = vmatmul.mubr.f32.gmra.mrb[0].mxu0 %v352
        %v3304 = vpop.f32.mrb[0].mxu0
        %v3305 = vadd.f32 %v3096, %v3304
        %v3306 = vpop.f32.mrb[0].mxu0
        %3307 = vmatprep.mubr.f32.mxu0 %v590
        %3308 = vmatmul.mubr.f32.gmra.mrb[0].mxu0 %v353
        %v3309 = vpop.f32.mrb[0].mxu0
        %v3310 = vpop.f32.mrb[0].mxu0
        %3311 = vmatprep.mubr.f32.mxu0 %v589
        %3312 = vmatmul.mubr.f32.gmra.mrb[0].mxu0 %v354
        %v3313 = vpop.f32.mrb[0].mxu0
        %v3314 = vpop.f32.mrb[0].mxu0
        %3315 = vmatprep.mubr.f32.mxu0 %v588
        %3316 = vmatmul.mubr.f32.gmra.mrb[0].mxu0 %v355
        %v3317 = vpop.f32.mrb[0].mxu0
        %v3318 = vadd.f32 %v3109, %v3317
        %v3319 = vpop.f32.mrb[0].mxu0
        %3320 = vmatprep.mubr.f32.mxu0 %v587
        %3321 = vmatmul.mubr.f32.gmra.mrb[0].mxu0 %v356
        %v3322 = vpop.f32.mrb[0].mxu0
        %v3323 = vadd.f32 %v3114, %v3322
        %v3324 = vpop.f32.mrb[0].mxu0
        %3325 = vmatprep.mubr.f32.mxu0 %v586
        %3326 = vmatmul.mubr.f32.gmra.mrb[0].mxu0 %v357
        %v3327 = vpop.f32.mrb[0].mxu0
        %v3328 = vpop.f32.mrb[0].mxu0
        %3329 = vmatprep.mubr.f32.mxu0 %v585
        %3330 = vmatmul.mubr.f32.gmra.mrb[0].mxu0 %v358
        %v3331 = vpop.f32.mrb[0].mxu0
        %v3332 = vpop.f32.mrb[0].mxu0
        %3333 = vmatprep.mubr.f32.mxu0 %v584
        %3334 = vmatmul.mubr.f32.gmra.mrb[0].mxu0 %v359
        %v3335 = vpop.f32.mrb[0].mxu0
        %v3336 = vadd.f32 %v3127, %v3335
        %v3337 = vpop.f32.mrb[0].mxu0
        %3338 = vmatprep.mubr.f32.mxu0 %v583
        %3339 = vmatmul.mubr.f32.gmra.mrb[0].mxu0 %v360
        %v3340 = vpop.f32.mrb[0].mxu0
        %v3341 = vadd.f32 %v3132, %v3340
        %v3342 = vpop.f32.mrb[0].mxu0
        %3343 = vmatprep.mubr.f32.mxu0 %v582
        %3344 = vmatmul.mubr.f32.gmra.mrb[0].mxu0 %v361
        %v3345 = vpop.f32.mrb[0].mxu0
        %v3346 = vpop.f32.mrb[0].mxu0
        %3347 = vmatprep.mubr.f32.mxu0 %v581
        %3348 = vmatmul.mubr.f32.gmra.mrb[0].mxu0 %v362
        %v3349 = vpop.f32.mrb[0].mxu0
        %v3350 = vpop.f32.mrb[0].mxu0
        %3351 = vmatprep.mubr.f32.mxu0 %v580
        %3352 = vmatmul.mubr.f32.gmra.mrb[0].mxu0 %v363
        %v3353 = vpop.f32.mrb[0].mxu0
        %v3354 = vadd.f32 %v3145, %v3353
        %v3355 = vpop.f32.mrb[0].mxu0
        %3356 = vmatprep.mubr.f32.mxu0 %v579
        %3357 = vmatmul.mubr.f32.gmra.mrb[0].mxu0 %v364
        %v3358 = vpop.f32.mrb[0].mxu0
        %v3359 = vadd.f32 %v3150, %v3358
        %v3360 = vpop.f32.mrb[0].mxu0
        %3361 = vmatprep.mubr.f32.mxu0 %v578
        %3362 = vmatmul.mubr.f32.gmra.mrb[0].mxu0 %v365
        %v3363 = vpop.f32.mrb[0].mxu0
        %v3364 = vpop.f32.mrb[0].mxu0
        %3365 = vmatprep.mubr.f32.mxu0 %v577
        %3366 = vmatmul.mubr.f32.gmra.mrb[0].mxu0 %v366
        %v3367 = vpop.f32.mrb[0].mxu0
        %v3368 = vpop.f32.mrb[0].mxu0
        %3369 = vmatprep.mubr.f32.mxu0 %v576
        %3370 = vmatmul.mubr.f32.gmra.mrb[0].mxu0 %v367
        %v3371 = vpop.f32.mrb[0].mxu0
        %v3372 = vadd.f32 %v3163, %v3371
        %v3373 = vpop.f32.mrb[0].mxu0
        %3374 = vmatprep.mubr.f32.mxu0 %v575
        %3375 = vmatmul.mubr.f32.gmra.mrb[0].mxu0 %v368
        %v3376 = vpop.f32.mrb[0].mxu0
        %v3377 = vadd.f32 %v3168, %v3376
        %v3378 = vpop.f32.mrb[0].mxu0
        %3379 = vmatprep.mubr.f32.mxu0 %v574
        %3380 = vmatmul.mubr.f32.gmra.mrb[0].mxu0 %v369
        %v3381 = vpop.f32.mrb[0].mxu0
        %v3382 = vpop.f32.mrb[0].mxu0
        %3383 = vmatprep.mubr.f32.mxu0 %v573
        %3384 = vmatmul.mubr.f32.gmra.mrb[0].mxu0 %v370
        %v3385 = vpop.f32.mrb[0].mxu0
        %v3386 = vpop.f32.mrb[0].mxu0
        %3387 = vmatprep.mubr.f32.mxu0 %v572
        %3388 = vmatmul.mubr.f32.gmra.mrb[0].mxu0 %v371
        %v3389 = vpop.f32.mrb[0].mxu0
        %v3390 = vadd.f32 %v3181, %v3389
        %v3391 = vpop.f32.mrb[0].mxu0
        %3392 = vmatprep.mubr.f32.mxu0 %v571
        %3393 = vmatmul.mubr.f32.gmra.mrb[0].mxu0 %v372
        %v3394 = vpop.f32.mrb[0].mxu0
        %v3395 = vadd.f32 %v3186, %v3394
        %v3396 = vpop.f32.mrb[0].mxu0
        %3397 = vmatprep.mubr.f32.mxu0 %v570
        %3398 = vmatmul.mubr.f32.gmra.mrb[0].mxu0 %v373
        %v3399 = vpop.f32.mrb[0].mxu0
        %v3400 = vpop.f32.mrb[0].mxu0
        %3401 = vmatprep.mubr.f32.mxu0 %v569
        %3402 = vmatmul.mubr.f32.gmra.mrb[0].mxu0 %v374
        %v3403 = vpop.f32.mrb[0].mxu0
        %v3404 = vpop.f32.mrb[0].mxu0
        %3405 = vmatprep.mubr.f32.mxu0 %v568
        %3406 = vmatmul.mubr.f32.gmra.mrb[0].mxu0 %v375
        %v3407 = vpop.f32.mrb[0].mxu0
        %v3408 = vadd.f32 %v3199, %v3407
        %v3409 = vpop.f32.mrb[0].mxu0
        %3410 = vmatprep.mubr.f32.mxu0 %v567
        %3411 = vmatmul.mubr.f32.gmra.mrb[0].mxu0 %v376
        %v3412 = vpop.f32.mrb[0].mxu0
        %v3413 = vadd.f32 %v3204, %v3412
        %v3414 = vpop.f32.mrb[0].mxu0
        %3415 = vmatprep.mubr.f32.mxu0 %v566
        %3416 = vmatmul.mubr.f32.gmra.mrb[0].mxu0 %v377
        %v3417 = vpop.f32.mrb[0].mxu0
        %v3418 = vpop.f32.mrb[0].mxu0
        %3419 = vmatprep.mubr.f32.mxu0 %v565
        %3420 = vmatmul.mubr.f32.gmra.mrb[0].mxu0 %v378
        %v3421 = vpop.f32.mrb[0].mxu0
        %v3422 = vpop.f32.mrb[0].mxu0
        %3423 = vmatprep.mubr.f32.mxu0 %v564
        %3424 = vmatmul.mubr.f32.gmra.mrb[0].mxu0 %v379
        %v3425 = vpop.f32.mrb[0].mxu0
        %v3426 = vadd.f32 %v3217, %v3425
        %v3427 = vpop.f32.mrb[0].mxu0
        %3428 = vmatprep.mubr.f32.mxu0 %v563
        %3429 = vmatmul.mubr.f32.gmra.mrb[0].mxu0 %v380
        %v3430 = vpop.f32.mrb[0].mxu0
        %v3431 = vadd.f32 %v3222, %v3430
        %v3432 = vpop.f32.mrb[0].mxu0
        %3433 = vmatprep.mubr.f32.mxu0 %v562
        %3434 = vmatmul.mubr.f32.gmra.mrb[0].mxu0 %v381
        %v3435 = vpop.f32.mrb[0].mxu0
        %v3436 = vpop.f32.mrb[0].mxu0
        %3437 = vmatprep.mubr.f32.mxu0 %v561
        %3438 = vmatmul.mubr.f32.gmra.mrb[0].mxu0 %v382
        %v3439 = vpop.f32.mrb[0].mxu0
        %v3440 = vpop.f32.mrb[0].mxu0
        %3441 = vdwg.mxu0
        %3442 = vmatprep.subr.mxu0 0.0
        %3443 = vmatpush1.msra.mxu0 %v2750
        %3444 = vmatprep.subr.mxu0 0.0
        %3445 = vmatpush1.msra.mxu0 %v2751
        %3446 = vmatprep.subr.mxu0 0.0
        %3447 = vmatpush1.msra.mxu0 %v2752
        %3448 = vmatprep.subr.mxu0 0.0
        %3449 = vmatpush1.msra.mxu0 %v2753
        %3450 = vmatprep.subr.mxu0 0.0
        %3451 = vmatpush1.msra.mxu0 %v2754
        %3452 = vmatprep.subr.mxu0 0.0
        %3453 = vmatpush1.msra.mxu0 %v2755
        %3454 = vmatprep.subr.mxu0 0.0
        %3455 = vmatpush1.msra.mxu0 %v2756
        %3456 = vmatprep.subr.mxu0 0.0
        %3457 = vmatpush1.msra.mxu0 %v2757
        %3458 = vmatprep.subr.mxu0 0.0
        %3459 = vmatpush1.msra.mxu0 %v2758
        %3460 = vmatprep.subr.mxu0 0.0
        %3461 = vmatpush1.msra.mxu0 %v2759
        %3462 = vmatprep.subr.mxu0 0.0
        %3463 = vmatpush1.msra.mxu0 %v2760
        %3464 = vmatprep.subr.mxu0 0.0
        %3465 = vmatpush1.msra.mxu0 %v2761
        %3466 = vmatprep.subr.mxu0 0.0
        %3467 = vmatpush1.msra.mxu0 %v2762
        %3468 = vmatprep.subr.mxu0 0.0
        %3469 = vmatpush1.msra.mxu0 %v2763
        %3470 = vmatprep.subr.mxu0 0.0
        %3471 = vmatpush1.msra.mxu0 %v2764
        %3472 = vmatprep.subr.mxu0 0.0
        %3473 = vmatpush1.msra.mxu0 %v2765
        %3474 = vmatprep.subr.mxu0 0.0
        %3475 = vmatpush1.msra.mxu0 0.0
        %3476 = vmatprep.subr.mxu0 0.0
        %3477 = vmatpush1.msra.mxu0 0.0
        %3478 = vmatprep.subr.mxu0 0.0
        %3479 = vmatpush1.msra.mxu0 0.0
        %3480 = vmatprep.subr.mxu0 0.0
        %3481 = vmatpush1.msra.mxu0 0.0
        %3482 = vmatprep.subr.mxu0 0.0
        %3483 = vmatpush1.msra.mxu0 0.0
        %3484 = vmatprep.subr.mxu0 0.0
        %3485 = vmatpush1.msra.mxu0 0.0
        %3486 = vmatprep.subr.mxu0 0.0
        %3487 = vmatpush1.msra.mxu0 0.0
        %3488 = vmatprep.subr.mxu0 0.0
        %3489 = vmatpush1.msra.mxu0 0.0
        %3490 = vmatprep.subr.mxu0 0.0
        %3491 = vmatpush1.msra.mxu0 0.0
        %3492 = vmatprep.subr.mxu0 0.0
        %3493 = vmatpush1.msra.mxu0 0.0
        %3494 = vmatprep.subr.mxu0 0.0
        %3495 = vmatpush1.msra.mxu0 0.0
        %3496 = vmatprep.subr.mxu0 0.0
        %3497 = vmatpush1.msra.mxu0 0.0
        %3498 = vmatprep.subr.mxu0 0.0
        %3499 = vmatpush1.msra.mxu0 0.0
        %3500 = vmatprep.subr.mxu0 0.0
        %3501 = vmatpush1.msra.mxu0 0.0
        %3502 = vmatprep.subr.mxu0 0.0
        %3503 = vmatpush1.msra.mxu0 0.0
        %3504 = vmatprep.subr.mxu0 0.0
        %3505 = vmatpush1.msra.mxu0 0.0
        %3506 = vmatprep.mubr.f32.mxu0 0.0
        %3507 = vmatmul.mubr.f32.gmra.mrb[0].mxu0 %v2715
        %v3508 = vpop.f32.mrb[0].mxu0
        %v3509 = vadd.f32 %v3300, %v3508
        %v3510 = vpop.f32.mrb[0].mxu0
        %3511 = vmatprep.mubr.f32.mxu0 0.0
        %3512 = vmatmul.mubr.f32.gmra.mrb[0].mxu0 %v2714
        %v3513 = vpop.f32.mrb[0].mxu0
        %v3514 = vadd.f32 %v3305, %v3513
        %v3515 = vpop.f32.mrb[0].mxu0
        %3516 = vmatprep.mubr.f32.mxu0 0.0
        %3517 = vmatmul.mubr.f32.gmra.mrb[0].mxu0 %v2713
        %v3518 = vpop.f32.mrb[0].mxu0
        %v3519 = vpop.f32.mrb[0].mxu0
        %3520 = vmatprep.mubr.f32.mxu0 0.0
        %3521 = vmatmul.mubr.f32.gmra.mrb[0].mxu0 %v2712
        %v3522 = vpop.f32.mrb[0].mxu0
        %v3523 = vpop.f32.mrb[0].mxu0
        %3524 = vmatprep.mubr.f32.mxu0 0.0
        %3525 = vmatmul.mubr.f32.gmra.mrb[0].mxu0 %v2711
        %v3526 = vpop.f32.mrb[0].mxu0
        %v3527 = vadd.f32 %v3318, %v3526
        %v3528 = vpop.f32.mrb[0].mxu0
        %3529 = vmatprep.mubr.f32.mxu0 0.0
        %3530 = vmatmul.mubr.f32.gmra.mrb[0].mxu0 %v2710
        %v3531 = vpop.f32.mrb[0].mxu0
        %v3532 = vadd.f32 %v3323, %v3531
        %v3533 = vpop.f32.mrb[0].mxu0
        %3534 = vmatprep.mubr.f32.mxu0 0.0
        %3535 = vmatmul.mubr.f32.gmra.mrb[0].mxu0 %v2709
        %v3536 = vpop.f32.mrb[0].mxu0
        %v3537 = vpop.f32.mrb[0].mxu0
        %3538 = vmatprep.mubr.f32.mxu0 0.0
        %3539 = vmatmul.mubr.f32.gmra.mrb[0].mxu0 %v2708
        %v3540 = vpop.f32.mrb[0].mxu0
        %v3541 = vpop.f32.mrb[0].mxu0
        %3542 = vmatprep.mubr.f32.mxu0 0.0
        %3543 = vmatmul.mubr.f32.gmra.mrb[0].mxu0 %v2707
        %v3544 = vpop.f32.mrb[0].mxu0
        %v3545 = vadd.f32 %v3336, %v3544
        %v3546 = vpop.f32.mrb[0].mxu0
        %3547 = vmatprep.mubr.f32.mxu0 0.0
        %3548 = vmatmul.mubr.f32.gmra.mrb[0].mxu0 %v2706
        %v3549 = vpop.f32.mrb[0].mxu0
        %v3550 = vadd.f32 %v3341, %v3549
        %v3551 = vpop.f32.mrb[0].mxu0
        %3552 = vmatprep.mubr.f32.mxu0 0.0
        %3553 = vmatmul.mubr.f32.gmra.mrb[0].mxu0 %v2705
        %v3554 = vpop.f32.mrb[0].mxu0
        %v3555 = vpop.f32.mrb[0].mxu0
        %3556 = vmatprep.mubr.f32.mxu0 0.0
        %3557 = vmatmul.mubr.f32.gmra.mrb[0].mxu0 %v2704
        %v3558 = vpop.f32.mrb[0].mxu0
        %v3559 = vpop.f32.mrb[0].mxu0
        %3560 = vmatprep.mubr.f32.mxu0 0.0
        %3561 = vmatmul.mubr.f32.gmra.mrb[0].mxu0 %v2703
        %v3562 = vpop.f32.mrb[0].mxu0
        %v3563 = vadd.f32 %v3354, %v3562
        %v3564 = vpop.f32.mrb[0].mxu0
        %3565 = vmatprep.mubr.f32.mxu0 0.0
        %3566 = vmatmul.mubr.f32.gmra.mrb[0].mxu0 %v2702
        %v3567 = vpop.f32.mrb[0].mxu0
        %v3568 = vadd.f32 %v3359, %v3567
        %v3569 = vpop.f32.mrb[0].mxu0
        %3570 = vmatprep.mubr.f32.mxu0 0.0
        %3571 = vmatmul.mubr.f32.gmra.mrb[0].mxu0 %v2701
        %v3572 = vpop.f32.mrb[0].mxu0
        %v3573 = vpop.f32.mrb[0].mxu0
        %3574 = vmatprep.mubr.f32.mxu0 0.0
        %3575 = vmatmul.mubr.f32.gmra.mrb[0].mxu0 %v2700
        %v3576 = vpop.f32.mrb[0].mxu0
        %v3577 = vpop.f32.mrb[0].mxu0
        %3578 = vmatprep.mubr.f32.mxu0 0.0
        %3579 = vmatmul.mubr.f32.gmra.mrb[0].mxu0 %v2699
        %v3580 = vpop.f32.mrb[0].mxu0
        %v3581 = vadd.f32 %v3372, %v3580
        %v3582 = vpop.f32.mrb[0].mxu0
        %3583 = vmatprep.mubr.f32.mxu0 0.0
        %3584 = vmatmul.mubr.f32.gmra.mrb[0].mxu0 %v2698
        %v3585 = vpop.f32.mrb[0].mxu0
        %v3586 = vadd.f32 %v3377, %v3585
        %v3587 = vpop.f32.mrb[0].mxu0
        %3588 = vmatprep.mubr.f32.mxu0 0.0
        %3589 = vmatmul.mubr.f32.gmra.mrb[0].mxu0 %v2697
        %v3590 = vpop.f32.mrb[0].mxu0
        %v3591 = vpop.f32.mrb[0].mxu0
        %3592 = vmatprep.mubr.f32.mxu0 0.0
        %3593 = vmatmul.mubr.f32.gmra.mrb[0].mxu0 %v2696
        %v3594 = vpop.f32.mrb[0].mxu0
        %v3595 = vpop.f32.mrb[0].mxu0
        %3596 = vmatprep.mubr.f32.mxu0 0.0
        %3597 = vmatmul.mubr.f32.gmra.mrb[0].mxu0 %v2695
        %v3598 = vpop.f32.mrb[0].mxu0
        %v3599 = vadd.f32 %v3390, %v3598
        %v3600 = vpop.f32.mrb[0].mxu0
        %3601 = vmatprep.mubr.f32.mxu0 0.0
        %3602 = vmatmul.mubr.f32.gmra.mrb[0].mxu0 %v2694
        %v3603 = vpop.f32.mrb[0].mxu0
        %v3604 = vadd.f32 %v3395, %v3603
        %v3605 = vpop.f32.mrb[0].mxu0
        %3606 = vmatprep.mubr.f32.mxu0 0.0
        %3607 = vmatmul.mubr.f32.gmra.mrb[0].mxu0 %v2693
        %v3608 = vpop.f32.mrb[0].mxu0
        %v3609 = vpop.f32.mrb[0].mxu0
        %3610 = vmatprep.mubr.f32.mxu0 0.0
        %3611 = vmatmul.mubr.f32.gmra.mrb[0].mxu0 %v2692
        %v3612 = vpop.f32.mrb[0].mxu0
        %v3613 = vpop.f32.mrb[0].mxu0
        %3614 = vmatprep.mubr.f32.mxu0 0.0
        %3615 = vmatmul.mubr.f32.gmra.mrb[0].mxu0 %v2691
        %v3616 = vpop.f32.mrb[0].mxu0
        %v3617 = vadd.f32 %v3408, %v3616
        %v3618 = vpop.f32.mrb[0].mxu0
        %3619 = vmatprep.mubr.f32.mxu0 0.0
        %3620 = vmatmul.mubr.f32.gmra.mrb[0].mxu0 %v2690
        %v3621 = vpop.f32.mrb[0].mxu0
        %v3622 = vadd.f32 %v3413, %v3621
        %v3623 = vpop.f32.mrb[0].mxu0
        %3624 = vmatprep.mubr.f32.mxu0 0.0
        %3625 = vmatmul.mubr.f32.gmra.mrb[0].mxu0 %v2689
        %v3626 = vpop.f32.mrb[0].mxu0
        %v3627 = vpop.f32.mrb[0].mxu0
        %3628 = vmatprep.mubr.f32.mxu0 0.0
        %3629 = vmatmul.mubr.f32.gmra.mrb[0].mxu0 %v2688
        %v3630 = vpop.f32.mrb[0].mxu0
        %v3631 = vpop.f32.mrb[0].mxu0
        %3632 = vmatprep.mubr.f32.mxu0 0.0
        %3633 = vmatmul.mubr.f32.gmra.mrb[0].mxu0 %v2687
        %v3634 = vpop.f32.mrb[0].mxu0
        %v3635 = vadd.f32 %v3426, %v3634
        %v3636 = vpop.f32.mrb[0].mxu0
        %3637 = vmatprep.mubr.f32.mxu0 0.0
        %3638 = vmatmul.mubr.f32.gmra.mrb[0].mxu0 %v2686
        %v3639 = vpop.f32.mrb[0].mxu0
        %v3640 = vadd.f32 %v3431, %v3639
        %v3641 = vpop.f32.mrb[0].mxu0
        %3642 = vmatprep.mubr.f32.mxu0 0.0
        %3643 = vmatmul.mubr.f32.gmra.mrb[0].mxu0 %v2685
        %v3644 = vpop.f32.mrb[0].mxu0
        %v3645 = vpop.f32.mrb[0].mxu0
        %3646 = vmatprep.mubr.f32.mxu0 0.0
        %3647 = vmatmul.mubr.f32.gmra.mrb[0].mxu0 %v2684
        %v3648 = vpop.f32.mrb[0].mxu0
        %v3649 = vpop.f32.mrb[0].mxu0
        %3650 = vdwg.mxu0
        %s3651 = scalar_lea.vmem [#allocation9], 768
        %v3652 = vld [vmem:[%s3651] sm:$0xff]
        %v3653 = vld [vmem:[%s3651 + $0x8] sm:$0xff]
        %v3654 = vld [vmem:[%s3651 + $0x10] sm:$0xff]
        %v3655 = vld [vmem:[%s3651 + $0x18] sm:$0xff]
        %v3656 = vld [vmem:[%s3651 + $0x20] sm:$0xff]
        %v3657 = vld [vmem:[%s3651 + $0x28] sm:$0xff]
        %v3658 = vld [vmem:[%s3651 + $0x30] sm:$0xff]
        %v3659 = vld [vmem:[%s3651 + $0x38] sm:$0xff]
        %v3660 = vld [vmem:[%s3651 + $0x40] sm:$0xff]
        %v3661 = vld [vmem:[%s3651 + $0x48] sm:$0xff]
        %v3662 = vld [vmem:[%s3651 + $0x50] sm:$0xff]
        %v3663 = vld [vmem:[%s3651 + $0x58] sm:$0xff]
        %v3664 = vld [vmem:[%s3651 + $0x60] sm:$0xff]
        %v3665 = vld [vmem:[%s3651 + $0x68] sm:$0xff]
        %v3666 = vld [vmem:[%s3651 + $0x70] sm:$0xff]
        %v3667 = vld [vmem:[%s3651 + $0x78] sm:$0xff]
        %v3668 = vld [vmem:[%s3651 + $0x80] sm:$0xff]
        %v3669 = vld [vmem:[%s3651 + $0x88] sm:$0xff]
        %v3670 = vld [vmem:[%s3651 + $0x90] sm:$0xff]
        %v3671 = vld [vmem:[%s3651 + $0x98] sm:$0xff]
        %v3672 = vld [vmem:[%s3651 + $0xa0] sm:$0xff]
        %v3673 = vld [vmem:[%s3651 + $0xa8] sm:$0xff]
        %v3674 = vld [vmem:[%s3651 + $0xb0] sm:$0xff]
        %v3675 = vld [vmem:[%s3651 + $0xb8] sm:$0xff]
        %v3676 = vld [vmem:[%s3651 + $0xc0] sm:$0xff]
        %v3677 = vld [vmem:[%s3651 + $0xc8] sm:$0xff]
        %v3678 = vld [vmem:[%s3651 + $0xd0] sm:$0xff]
        %v3679 = vld [vmem:[%s3651 + $0xd8] sm:$0xff]
        %v3680 = vld [vmem:[%s3651 + $0xe0] sm:$0xff]
        %v3681 = vld [vmem:[%s3651 + $0xe8] sm:$0xff]
        %v3682 = vld [vmem:[%s3651 + $0xf0] sm:$0xff]
        %v3683 = vld [vmem:[%s3651 + $0xf8] sm:$0xff]
        %v3684 = vld [vmem:[%s3651 + $0x100] sm:$0xff]
        %v3685 = vld [vmem:[%s3651 + $0x108] sm:$0xff]
        %v3686 = vld [vmem:[%s3651 + $0x110] sm:$0xff]
        %v3687 = vld [vmem:[%s3651 + $0x118] sm:$0xff]
        %v3688 = vld [vmem:[%s3651 + $0x120] sm:$0xff]
        %v3689 = vld [vmem:[%s3651 + $0x128] sm:$0xff]
        %v3690 = vld [vmem:[%s3651 + $0x130] sm:$0xff]
        %v3691 = vld [vmem:[%s3651 + $0x138] sm:$0xff]
        %v3692 = vld [vmem:[%s3651 + $0x140] sm:$0xff]
        %v3693 = vld [vmem:[%s3651 + $0x148] sm:$0xff]
        %v3694 = vld [vmem:[%s3651 + $0x150] sm:$0xff]
        %v3695 = vld [vmem:[%s3651 + $0x158] sm:$0xff]
        %v3696 = vld [vmem:[%s3651 + $0x160] sm:$0xff]
        %v3697 = vld [vmem:[%s3651 + $0x168] sm:$0xff]
        %v3698 = vld [vmem:[%s3651 + $0x170] sm:$0xff]
        %v3699 = vld [vmem:[%s3651 + $0x178] sm:$0xff]
        %3700 = vmatprep.subr.mxu0 0.0
        %3701 = vmatpush1.msra.mxu0 %v3652
        %3702 = vmatprep.subr.mxu0 0.0
        %3703 = vmatpush1.msra.mxu0 %v3653
        %3704 = vmatprep.subr.mxu0 0.0
        %3705 = vmatpush1.msra.mxu0 %v3654
        %3706 = vmatprep.subr.mxu0 0.0
        %3707 = vmatpush1.msra.mxu0 %v3655
        %3708 = vmatprep.subr.mxu0 0.0
        %3709 = vmatpush1.msra.mxu0 %v3656
        %3710 = vmatprep.subr.mxu0 0.0
        %3711 = vmatpush1.msra.mxu0 %v3657
        %3712 = vmatprep.subr.mxu0 0.0
        %3713 = vmatpush1.msra.mxu0 %v3658
        %3714 = vmatprep.subr.mxu0 0.0
        %3715 = vmatpush1.msra.mxu0 %v3659
        %3716 = vmatprep.subr.mxu0 0.0
        %3717 = vmatpush1.msra.mxu0 %v3660
        %3718 = vmatprep.subr.mxu0 0.0
        %3719 = vmatpush1.msra.mxu0 %v3661
        %3720 = vmatprep.subr.mxu0 0.0
        %3721 = vmatpush1.msra.mxu0 %v3662
        %3722 = vmatprep.subr.mxu0 0.0
        %3723 = vmatpush1.msra.mxu0 %v3663
        %3724 = vmatprep.subr.mxu0 0.0
        %3725 = vmatpush1.msra.mxu0 %v3664
        %3726 = vmatprep.subr.mxu0 0.0
        %3727 = vmatpush1.msra.mxu0 %v3665
        %3728 = vmatprep.subr.mxu0 0.0
        %3729 = vmatpush1.msra.mxu0 %v3666
        %3730 = vmatprep.subr.mxu0 0.0
        %3731 = vmatpush1.msra.mxu0 %v3667
        %3732 = vmatprep.subr.mxu0 0.0
        %3733 = vmatpush1.msra.mxu0 %v3668
        %3734 = vmatprep.subr.mxu0 0.0
        %3735 = vmatpush1.msra.mxu0 %v3669
        %3736 = vmatprep.subr.mxu0 0.0
        %3737 = vmatpush1.msra.mxu0 %v3670
        %3738 = vmatprep.subr.mxu0 0.0
        %3739 = vmatpush1.msra.mxu0 %v3671
        %3740 = vmatprep.subr.mxu0 0.0
        %3741 = vmatpush1.msra.mxu0 %v3672
        %3742 = vmatprep.subr.mxu0 0.0
        %3743 = vmatpush1.msra.mxu0 %v3673
        %3744 = vmatprep.subr.mxu0 0.0
        %3745 = vmatpush1.msra.mxu0 %v3674
        %3746 = vmatprep.subr.mxu0 0.0
        %3747 = vmatpush1.msra.mxu0 %v3675
        %3748 = vmatprep.subr.mxu0 0.0
        %3749 = vmatpush1.msra.mxu0 %v3676
        %3750 = vmatprep.subr.mxu0 0.0
        %3751 = vmatpush1.msra.mxu0 %v3677
        %3752 = vmatprep.subr.mxu0 0.0
        %3753 = vmatpush1.msra.mxu0 %v3678
        %3754 = vmatprep.subr.mxu0 0.0
        %3755 = vmatpush1.msra.mxu0 %v3679
        %3756 = vmatprep.subr.mxu0 0.0
        %3757 = vmatpush1.msra.mxu0 %v3680
        %3758 = vmatprep.subr.mxu0 0.0
        %3759 = vmatpush1.msra.mxu0 %v3681
        %3760 = vmatprep.subr.mxu0 0.0
        %3761 = vmatpush1.msra.mxu0 %v3682
        %3762 = vmatprep.subr.mxu0 0.0
        %3763 = vmatpush1.msra.mxu0 %v3683
        %3764 = vmatprep.mubr.f32.mxu0 %v544
        %3765 = vmatmul.mubr.f32.gmra.mrb[0].mxu0 %v399
        %v3766 = vpop.f32.mrb[0].mxu0
        %v3767 = vadd.f32 0.0, %v3766
        %v3768 = vpop.f32.mrb[0].mxu0
        %3769 = vmatprep.mubr.f32.mxu0 %v543
        %3770 = vmatmul.mubr.f32.gmra.mrb[0].mxu0 %v400
        %v3771 = vpop.f32.mrb[0].mxu0
        %v3772 = vadd.f32 0.0, %v3771
        %v3773 = vpop.f32.mrb[0].mxu0
        %3774 = vmatprep.mubr.f32.mxu0 %v542
        %3775 = vmatmul.mubr.f32.gmra.mrb[0].mxu0 %v401
        %v3776 = vpop.f32.mrb[0].mxu0
        %v3777 = vpop.f32.mrb[0].mxu0
        %3778 = vmatprep.mubr.f32.mxu0 %v541
        %3779 = vmatmul.mubr.f32.gmra.mrb[0].mxu0 %v402
        %v3780 = vpop.f32.mrb[0].mxu0
        %v3781 = vpop.f32.mrb[0].mxu0
        %3782 = vmatprep.mubr.f32.mxu0 %v540
        %3783 = vmatmul.mubr.f32.gmra.mrb[0].mxu0 %v403
        %v3784 = vpop.f32.mrb[0].mxu0
        %v3785 = vadd.f32 0.0, %v3784
        %v3786 = vpop.f32.mrb[0].mxu0
        %3787 = vmatprep.mubr.f32.mxu0 %v539
        %3788 = vmatmul.mubr.f32.gmra.mrb[0].mxu0 %v404
        %v3789 = vpop.f32.mrb[0].mxu0
        %v3790 = vadd.f32 0.0, %v3789
        %v3791 = vpop.f32.mrb[0].mxu0
        %3792 = vmatprep.mubr.f32.mxu0 %v538
        %3793 = vmatmul.mubr.f32.gmra.mrb[0].mxu0 %v405
        %v3794 = vpop.f32.mrb[0].mxu0
        %v3795 = vpop.f32.mrb[0].mxu0
        %3796 = vmatprep.mubr.f32.mxu0 %v537
        %3797 = vmatmul.mubr.f32.gmra.mrb[0].mxu0 %v406
        %v3798 = vpop.f32.mrb[0].mxu0
        %v3799 = vpop.f32.mrb[0].mxu0
        %3800 = vmatprep.mubr.f32.mxu0 %v536
        %3801 = vmatmul.mubr.f32.gmra.mrb[0].mxu0 %v407
        %v3802 = vpop.f32.mrb[0].mxu0
        %v3803 = vadd.f32 0.0, %v3802
        %v3804 = vpop.f32.mrb[0].mxu0
        %3805 = vmatprep.mubr.f32.mxu0 %v535
        %3806 = vmatmul.mubr.f32.gmra.mrb[0].mxu0 %v408
        %v3807 = vpop.f32.mrb[0].mxu0
        %v3808 = vadd.f32 0.0, %v3807
        %v3809 = vpop.f32.mrb[0].mxu0
        %3810 = vmatprep.mubr.f32.mxu0 %v534
        %3811 = vmatmul.mubr.f32.gmra.mrb[0].mxu0 %v409
        %v3812 = vpop.f32.mrb[0].mxu0
        %v3813 = vpop.f32.mrb[0].mxu0
        %3814 = vmatprep.mubr.f32.mxu0 %v533
        %3815 = vmatmul.mubr.f32.gmra.mrb[0].mxu0 %v410
        %v3816 = vpop.f32.mrb[0].mxu0
        %v3817 = vpop.f32.mrb[0].mxu0
        %3818 = vmatprep.mubr.f32.mxu0 %v532
        %3819 = vmatmul.mubr.f32.gmra.mrb[0].mxu0 %v411
        %v3820 = vpop.f32.mrb[0].mxu0
        %v3821 = vadd.f32 0.0, %v3820
        %v3822 = vpop.f32.mrb[0].mxu0
        %3823 = vmatprep.mubr.f32.mxu0 %v531
        %3824 = vmatmul.mubr.f32.gmra.mrb[0].mxu0 %v412
        %v3825 = vpop.f32.mrb[0].mxu0
        %v3826 = vadd.f32 0.0, %v3825
        %v3827 = vpop.f32.mrb[0].mxu0
        %3828 = vmatprep.mubr.f32.mxu0 %v530
        %3829 = vmatmul.mubr.f32.gmra.mrb[0].mxu0 %v413
        %v3830 = vpop.f32.mrb[0].mxu0
        %v3831 = vpop.f32.mrb[0].mxu0
        %3832 = vmatprep.mubr.f32.mxu0 %v529
        %3833 = vmatmul.mubr.f32.gmra.mrb[0].mxu0 %v414
        %v3834 = vpop.f32.mrb[0].mxu0
        %v3835 = vpop.f32.mrb[0].mxu0
        %3836 = vmatprep.mubr.f32.mxu0 %v528
        %3837 = vmatmul.mubr.f32.gmra.mrb[0].mxu0 %v415
        %v3838 = vpop.f32.mrb[0].mxu0
        %v3839 = vadd.f32 0.0, %v3838
        %v3840 = vpop.f32.mrb[0].mxu0
        %3841 = vmatprep.mubr.f32.mxu0 %v527
        %3842 = vmatmul.mubr.f32.gmra.mrb[0].mxu0 %v416
        %v3843 = vpop.f32.mrb[0].mxu0
        %v3844 = vadd.f32 0.0, %v3843
        %v3845 = vpop.f32.mrb[0].mxu0
        %3846 = vmatprep.mubr.f32.mxu0 %v526
        %3847 = vmatmul.mubr.f32.gmra.mrb[0].mxu0 %v417
        %v3848 = vpop.f32.mrb[0].mxu0
        %v3849 = vpop.f32.mrb[0].mxu0
        %3850 = vmatprep.mubr.f32.mxu0 %v525
        %3851 = vmatmul.mubr.f32.gmra.mrb[0].mxu0 %v418
        %v3852 = vpop.f32.mrb[0].mxu0
        %v3853 = vpop.f32.mrb[0].mxu0
        %3854 = vmatprep.mubr.f32.mxu0 %v524
        %3855 = vmatmul.mubr.f32.gmra.mrb[0].mxu0 %v419
        %v3856 = vpop.f32.mrb[0].mxu0
        %v3857 = vadd.f32 0.0, %v3856
        %v3858 = vpop.f32.mrb[0].mxu0
        %3859 = vmatprep.mubr.f32.mxu0 %v523
        %3860 = vmatmul.mubr.f32.gmra.mrb[0].mxu0 %v420
        %v3861 = vpop.f32.mrb[0].mxu0
        %v3862 = vadd.f32 0.0, %v3861
        %v3863 = vpop.f32.mrb[0].mxu0
        %3864 = vmatprep.mubr.f32.mxu0 %v522
        %3865 = vmatmul.mubr.f32.gmra.mrb[0].mxu0 %v421
        %v3866 = vpop.f32.mrb[0].mxu0
        %v3867 = vpop.f32.mrb[0].mxu0
        %3868 = vmatprep.mubr.f32.mxu0 %v521
        %3869 = vmatmul.mubr.f32.gmra.mrb[0].mxu0 %v422
        %v3870 = vpop.f32.mrb[0].mxu0
        %v3871 = vpop.f32.mrb[0].mxu0
        %3872 = vmatprep.mubr.f32.mxu0 %v520
        %3873 = vmatmul.mubr.f32.gmra.mrb[0].mxu0 %v423
        %v3874 = vpop.f32.mrb[0].mxu0
        %v3875 = vadd.f32 0.0, %v3874
        %v3876 = vpop.f32.mrb[0].mxu0
        %3877 = vmatprep.mubr.f32.mxu0 %v519
        %3878 = vmatmul.mubr.f32.gmra.mrb[0].mxu0 %v424
        %v3879 = vpop.f32.mrb[0].mxu0
        %v3880 = vadd.f32 0.0, %v3879
        %v3881 = vpop.f32.mrb[0].mxu0
        %3882 = vmatprep.mubr.f32.mxu0 %v518
        %3883 = vmatmul.mubr.f32.gmra.mrb[0].mxu0 %v425
        %v3884 = vpop.f32.mrb[0].mxu0
        %v3885 = vpop.f32.mrb[0].mxu0
        %3886 = vmatprep.mubr.f32.mxu0 %v517
        %3887 = vmatmul.mubr.f32.gmra.mrb[0].mxu0 %v426
        %v3888 = vpop.f32.mrb[0].mxu0
        %v3889 = vpop.f32.mrb[0].mxu0
        %3890 = vmatprep.mubr.f32.mxu0 %v516
        %3891 = vmatmul.mubr.f32.gmra.mrb[0].mxu0 %v427
        %v3892 = vpop.f32.mrb[0].mxu0
        %v3893 = vadd.f32 0.0, %v3892
        %v3894 = vpop.f32.mrb[0].mxu0
        %3895 = vmatprep.mubr.f32.mxu0 %v515
        %3896 = vmatmul.mubr.f32.gmra.mrb[0].mxu0 %v428
        %v3897 = vpop.f32.mrb[0].mxu0
        %v3898 = vadd.f32 0.0, %v3897
        %v3899 = vpop.f32.mrb[0].mxu0
        %3900 = vmatprep.mubr.f32.mxu0 %v514
        %3901 = vmatmul.mubr.f32.gmra.mrb[0].mxu0 %v429
        %v3902 = vpop.f32.mrb[0].mxu0
        %v3903 = vpop.f32.mrb[0].mxu0
        %3904 = vmatprep.mubr.f32.mxu0 %v593
        %3905 = vmatmul.mubr.f32.gmra.mrb[0].mxu0 %v430
        %v3906 = vpop.f32.mrb[0].mxu0
        %v3907 = vpop.f32.mrb[0].mxu0
        %3908 = vdwg.mxu0
        %3909 = vmatprep.subr.mxu0 0.0
        %3910 = vmatpush1.msra.mxu0 %v3684
        %3911 = vmatprep.subr.mxu0 0.0
        %3912 = vmatpush1.msra.mxu0 %v3685
        %3913 = vmatprep.subr.mxu0 0.0
        %3914 = vmatpush1.msra.mxu0 %v3686
        %3915 = vmatprep.subr.mxu0 0.0
        %3916 = vmatpush1.msra.mxu0 %v3687
        %3917 = vmatprep.subr.mxu0 0.0
        %3918 = vmatpush1.msra.mxu0 %v3688
        %3919 = vmatprep.subr.mxu0 0.0
        %3920 = vmatpush1.msra.mxu0 %v3689
        %3921 = vmatprep.subr.mxu0 0.0
        %3922 = vmatpush1.msra.mxu0 %v3690
        %3923 = vmatprep.subr.mxu0 0.0
        %3924 = vmatpush1.msra.mxu0 %v3691
        %3925 = vmatprep.subr.mxu0 0.0
        %3926 = vmatpush1.msra.mxu0 %v3692
        %3927 = vmatprep.subr.mxu0 0.0
        %3928 = vmatpush1.msra.mxu0 %v3693
        %3929 = vmatprep.subr.mxu0 0.0
        %3930 = vmatpush1.msra.mxu0 %v3694
        %3931 = vmatprep.subr.mxu0 0.0
        %3932 = vmatpush1.msra.mxu0 %v3695
        %3933 = vmatprep.subr.mxu0 0.0
        %3934 = vmatpush1.msra.mxu0 %v3696
        %3935 = vmatprep.subr.mxu0 0.0
        %3936 = vmatpush1.msra.mxu0 %v3697
        %3937 = vmatprep.subr.mxu0 0.0
        %3938 = vmatpush1.msra.mxu0 %v3698
        %3939 = vmatprep.subr.mxu0 0.0
        %3940 = vmatpush1.msra.mxu0 %v3699
        %3941 = vmatprep.subr.mxu0 0.0
        %3942 = vmatpush1.msra.mxu0 0.0
        %3943 = vmatprep.subr.mxu0 0.0
        %3944 = vmatpush1.msra.mxu0 0.0
        %3945 = vmatprep.subr.mxu0 0.0
        %3946 = vmatpush1.msra.mxu0 0.0
        %3947 = vmatprep.subr.mxu0 0.0
        %3948 = vmatpush1.msra.mxu0 0.0
        %3949 = vmatprep.subr.mxu0 0.0
        %3950 = vmatpush1.msra.mxu0 0.0
        %3951 = vmatprep.subr.mxu0 0.0
        %3952 = vmatpush1.msra.mxu0 0.0
        %3953 = vmatprep.subr.mxu0 0.0
        %3954 = vmatpush1.msra.mxu0 0.0
        %3955 = vmatprep.subr.mxu0 0.0
        %3956 = vmatpush1.msra.mxu0 0.0
        %3957 = vmatprep.subr.mxu0 0.0
        %3958 = vmatpush1.msra.mxu0 0.0
        %3959 = vmatprep.subr.mxu0 0.0
        %3960 = vmatpush1.msra.mxu0 0.0
        %3961 = vmatprep.subr.mxu0 0.0
        %3962 = vmatpush1.msra.mxu0 0.0
        %3963 = vmatprep.subr.mxu0 0.0
        %3964 = vmatpush1.msra.mxu0 0.0
        %3965 = vmatprep.subr.mxu0 0.0
        %3966 = vmatpush1.msra.mxu0 0.0
        %3967 = vmatprep.subr.mxu0 0.0
        %3968 = vmatpush1.msra.mxu0 0.0
        %3969 = vmatprep.subr.mxu0 0.0
        %3970 = vmatpush1.msra.mxu0 0.0
        %3971 = vmatprep.subr.mxu0 0.0
        %3972 = vmatpush1.msra.mxu0 0.0
        %3973 = vmatprep.mubr.f32.mxu0 0.0
        %3974 = vmatmul.mubr.f32.gmra.mrb[0].mxu0 %v2667
        %v3975 = vpop.f32.mrb[0].mxu0
        %v3976 = vadd.f32 %v3767, %v3975
        %v3977 = vpop.f32.mrb[0].mxu0
        %3978 = vmatprep.mubr.f32.mxu0 0.0
        %3979 = vmatmul.mubr.f32.gmra.mrb[0].mxu0 %v2666
        %v3980 = vpop.f32.mrb[0].mxu0
        %v3981 = vadd.f32 %v3772, %v3980
        %v3982 = vpop.f32.mrb[0].mxu0
        %3983 = vmatprep.mubr.f32.mxu0 0.0
        %3984 = vmatmul.mubr.f32.gmra.mrb[0].mxu0 %v2665
        %v3985 = vpop.f32.mrb[0].mxu0
        %v3986 = vpop.f32.mrb[0].mxu0
        %3987 = vmatprep.mubr.f32.mxu0 0.0
        %3988 = vmatmul.mubr.f32.gmra.mrb[0].mxu0 %v2664
        %v3989 = vpop.f32.mrb[0].mxu0
        %v3990 = vpop.f32.mrb[0].mxu0
        %3991 = vmatprep.mubr.f32.mxu0 0.0
        %3992 = vmatmul.mubr.f32.gmra.mrb[0].mxu0 %v2663
        %v3993 = vpop.f32.mrb[0].mxu0
        %v3994 = vadd.f32 %v3785, %v3993
        %v3995 = vpop.f32.mrb[0].mxu0
        %3996 = vmatprep.mubr.f32.mxu0 0.0
        %3997 = vmatmul.mubr.f32.gmra.mrb[0].mxu0 %v2662
        %v3998 = vpop.f32.mrb[0].mxu0
        %v3999 = vadd.f32 %v3790, %v3998
        %v4000 = vpop.f32.mrb[0].mxu0
        %4001 = vmatprep.mubr.f32.mxu0 0.0
        %4002 = vmatmul.mubr.f32.gmra.mrb[0].mxu0 %v2661
        %v4003 = vpop.f32.mrb[0].mxu0
        %v4004 = vpop.f32.mrb[0].mxu0
        %4005 = vmatprep.mubr.f32.mxu0 0.0
        %4006 = vmatmul.mubr.f32.gmra.mrb[0].mxu0 %v2660
        %v4007 = vpop.f32.mrb[0].mxu0
        %v4008 = vpop.f32.mrb[0].mxu0
        %4009 = vmatprep.mubr.f32.mxu0 0.0
        %4010 = vmatmul.mubr.f32.gmra.mrb[0].mxu0 %v2659
        %v4011 = vpop.f32.mrb[0].mxu0
        %v4012 = vadd.f32 %v3803, %v4011
        %v4013 = vpop.f32.mrb[0].mxu0
        %4014 = vmatprep.mubr.f32.mxu0 0.0
        %4015 = vmatmul.mubr.f32.gmra.mrb[0].mxu0 %v2658
        %v4016 = vpop.f32.mrb[0].mxu0
        %v4017 = vadd.f32 %v3808, %v4016
        %v4018 = vpop.f32.mrb[0].mxu0
        %4019 = vmatprep.mubr.f32.mxu0 0.0
        %4020 = vmatmul.mubr.f32.gmra.mrb[0].mxu0 %v2657
        %v4021 = vpop.f32.mrb[0].mxu0
        %v4022 = vpop.f32.mrb[0].mxu0
        %4023 = vmatprep.mubr.f32.mxu0 0.0
        %4024 = vmatmul.mubr.f32.gmra.mrb[0].mxu0 %v2656
        %v4025 = vpop.f32.mrb[0].mxu0
        %v4026 = vpop.f32.mrb[0].mxu0
        %4027 = vmatprep.mubr.f32.mxu0 0.0
        %4028 = vmatmul.mubr.f32.gmra.mrb[0].mxu0 %v2655
        %v4029 = vpop.f32.mrb[0].mxu0
        %v4030 = vadd.f32 %v3821, %v4029
        %v4031 = vpop.f32.mrb[0].mxu0
        %4032 = vmatprep.mubr.f32.mxu0 0.0
        %4033 = vmatmul.mubr.f32.gmra.mrb[0].mxu0 %v2654
        %v4034 = vpop.f32.mrb[0].mxu0
        %v4035 = vadd.f32 %v3826, %v4034
        %v4036 = vpop.f32.mrb[0].mxu0
        %4037 = vmatprep.mubr.f32.mxu0 0.0
        %4038 = vmatmul.mubr.f32.gmra.mrb[0].mxu0 %v2653
        %v4039 = vpop.f32.mrb[0].mxu0
        %v4040 = vpop.f32.mrb[0].mxu0
        %4041 = vmatprep.mubr.f32.mxu0 0.0
        %4042 = vmatmul.mubr.f32.gmra.mrb[0].mxu0 %v2652
        %v4043 = vpop.f32.mrb[0].mxu0
        %v4044 = vpop.f32.mrb[0].mxu0
        %4045 = vmatprep.mubr.f32.mxu0 0.0
        %4046 = vmatmul.mubr.f32.gmra.mrb[0].mxu0 %v2651
        %v4047 = vpop.f32.mrb[0].mxu0
        %v4048 = vadd.f32 %v3839, %v4047
        %v4049 = vpop.f32.mrb[0].mxu0
        %4050 = vmatprep.mubr.f32.mxu0 0.0
        %4051 = vmatmul.mubr.f32.gmra.mrb[0].mxu0 %v2650
        %v4052 = vpop.f32.mrb[0].mxu0
        %v4053 = vadd.f32 %v3844, %v4052
        %v4054 = vpop.f32.mrb[0].mxu0
        %4055 = vmatprep.mubr.f32.mxu0 0.0
        %4056 = vmatmul.mubr.f32.gmra.mrb[0].mxu0 %v2649
        %v4057 = vpop.f32.mrb[0].mxu0
        %v4058 = vpop.f32.mrb[0].mxu0
        %4059 = vmatprep.mubr.f32.mxu0 0.0
        %4060 = vmatmul.mubr.f32.gmra.mrb[0].mxu0 %v2648
        %v4061 = vpop.f32.mrb[0].mxu0
        %v4062 = vpop.f32.mrb[0].mxu0
        %4063 = vmatprep.mubr.f32.mxu0 0.0
        %4064 = vmatmul.mubr.f32.gmra.mrb[0].mxu0 %v2647
        %v4065 = vpop.f32.mrb[0].mxu0
        %v4066 = vadd.f32 %v3857, %v4065
        %v4067 = vpop.f32.mrb[0].mxu0
        %4068 = vmatprep.mubr.f32.mxu0 0.0
        %4069 = vmatmul.mubr.f32.gmra.mrb[0].mxu0 %v2646
        %v4070 = vpop.f32.mrb[0].mxu0
        %v4071 = vadd.f32 %v3862, %v4070
        %v4072 = vpop.f32.mrb[0].mxu0
        %4073 = vmatprep.mubr.f32.mxu0 0.0
        %4074 = vmatmul.mubr.f32.gmra.mrb[0].mxu0 %v2645
        %v4075 = vpop.f32.mrb[0].mxu0
        %v4076 = vpop.f32.mrb[0].mxu0
        %4077 = vmatprep.mubr.f32.mxu0 0.0
        %4078 = vmatmul.mubr.f32.gmra.mrb[0].mxu0 %v2644
        %v4079 = vpop.f32.mrb[0].mxu0
        %v4080 = vpop.f32.mrb[0].mxu0
        %4081 = vmatprep.mubr.f32.mxu0 0.0
        %4082 = vmatmul.mubr.f32.gmra.mrb[0].mxu0 %v2643
        %v4083 = vpop.f32.mrb[0].mxu0
        %v4084 = vadd.f32 %v3875, %v4083
        %v4085 = vpop.f32.mrb[0].mxu0
        %4086 = vmatprep.mubr.f32.mxu0 0.0
        %4087 = vmatmul.mubr.f32.gmra.mrb[0].mxu0 %v2642
        %v4088 = vpop.f32.mrb[0].mxu0
        %v4089 = vadd.f32 %v3880, %v4088
        %v4090 = vpop.f32.mrb[0].mxu0
        %4091 = vmatprep.mubr.f32.mxu0 0.0
        %4092 = vmatmul.mubr.f32.gmra.mrb[0].mxu0 %v2641
        %v4093 = vpop.f32.mrb[0].mxu0
        %v4094 = vpop.f32.mrb[0].mxu0
        %4095 = vmatprep.mubr.f32.mxu0 0.0
        %4096 = vmatmul.mubr.f32.gmra.mrb[0].mxu0 %v2640
        %v4097 = vpop.f32.mrb[0].mxu0
        %v4098 = vpop.f32.mrb[0].mxu0
        %4099 = vmatprep.mubr.f32.mxu0 0.0
        %4100 = vmatmul.mubr.f32.gmra.mrb[0].mxu0 %v2639
        %v4101 = vpop.f32.mrb[0].mxu0
        %v4102 = vadd.f32 %v3893, %v4101
        %v4103 = vpop.f32.mrb[0].mxu0
        %4104 = vmatprep.mubr.f32.mxu0 0.0
        %4105 = vmatmul.mubr.f32.gmra.mrb[0].mxu0 %v2638
        %v4106 = vpop.f32.mrb[0].mxu0
        %v4107 = vadd.f32 %v3898, %v4106
        %v4108 = vpop.f32.mrb[0].mxu0
        %4109 = vmatprep.mubr.f32.mxu0 0.0
        %4110 = vmatmul.mubr.f32.gmra.mrb[0].mxu0 %v2717
        %v4111 = vpop.f32.mrb[0].mxu0
        %v4112 = vpop.f32.mrb[0].mxu0
        %4113 = vmatprep.mubr.f32.mxu0 0.0
        %4114 = vmatmul.mubr.f32.gmra.mrb[0].mxu0 %v2716
        %v4115 = vpop.f32.mrb[0].mxu0
        %v4116 = vpop.f32.mrb[0].mxu0
        %4117 = vdwg.mxu0
        %v4118 = vadd.f32 %v3509, %v3976
        %v4119 = vadd.f32 %v3514, %v3981
        %v4120 = vadd.f32 %v3527, %v3994
        %v4121 = vadd.f32 %v3532, %v3999
        %v4122 = vadd.f32 %v3545, %v4012
        %v4123 = vadd.f32 %v3550, %v4017
        %v4124 = vadd.f32 %v3563, %v4030
        %v4125 = vadd.f32 %v3568, %v4035
        %v4126 = vadd.f32 %v3581, %v4048
        %v4127 = vadd.f32 %v3586, %v4053
        %v4128 = vadd.f32 %v3599, %v4066
        %v4129 = vadd.f32 %v3604, %v4071
        %v4130 = vadd.f32 %v3617, %v4084
        %v4131 = vadd.f32 %v3622, %v4089
        %v4132 = vadd.f32 %v3635, %v4102
        %v4133 = vadd.f32 %v3640, %v4107
        %v4134 = vld [vmem:[%s6] sm:$0x1]
        %v4136 = vlaneseq
        %v4137 = vshrl.u32 %v4136, 7
        %v4138 = vsub.s32 0, %v4137
        %v4139 = vrot.slane %v4134, %v4138
        %v4141 = vadd.f32 %v4118, %v4139
        %v4142 = vadd.f32 %v4119, %v4139
        %v4143 = vadd.f32 %v4120, %v4139
        %v4144 = vadd.f32 %v4121, %v4139
        %v4145 = vadd.f32 %v4122, %v4139
        %v4146 = vadd.f32 %v4123, %v4139
        %v4147 = vadd.f32 %v4124, %v4139
        %v4148 = vadd.f32 %v4125, %v4139
        %v4149 = vadd.f32 %v4126, %v4139
        %v4150 = vadd.f32 %v4127, %v4139
        %v4151 = vadd.f32 %v4128, %v4139
        %v4152 = vadd.f32 %v4129, %v4139
        %v4153 = vadd.f32 %v4130, %v4139
        %v4154 = vadd.f32 %v4131, %v4139
        %v4155 = vadd.f32 %v4132, %v4139
        %v4156 = vadd.f32 %v4133, %v4139
        %v4157 = vmax.f32 %v4141, 0.0
        %v4158 = vmax.f32 %v4142, 0.0
        %v4159 = vmax.f32 %v4143, 0.0
        %v4160 = vmax.f32 %v4144, 0.0
        %v4161 = vmax.f32 %v4145, 0.0
        %v4162 = vmax.f32 %v4146, 0.0
        %v4163 = vmax.f32 %v4147, 0.0
        %v4164 = vmax.f32 %v4148, 0.0
        %v4165 = vmax.f32 %v4149, 0.0
        %v4166 = vmax.f32 %v4150, 0.0
        %v4167 = vmax.f32 %v4151, 0.0
        %v4168 = vmax.f32 %v4152, 0.0
        %v4169 = vmax.f32 %v4153, 0.0
        %v4170 = vmax.f32 %v4154, 0.0
        %v4171 = vmax.f32 %v4155, 0.0
        %v4172 = vmax.f32 %v4156, 0.0
        %4173 = vst [vmem:[%s288 + $0x10] sm:$0xff] %v4157
        %4174 = vst [vmem:[%s288 + $0x28] sm:$0xff] %v4158
        %4175 = vst [vmem:[%s288 + $0x40] sm:$0xff] %v4159
        %4176 = vst [vmem:[%s288 + $0x58] sm:$0xff] %v4160
        %4177 = vst [vmem:[%s288 + $0x70] sm:$0xff] %v4161
        %4178 = vst [vmem:[%s288 + $0x88] sm:$0xff] %v4162
        %4179 = vst [vmem:[%s288 + $0xa0] sm:$0xff] %v4163
        %4180 = vst [vmem:[%s288 + $0xb8] sm:$0xff] %v4164
        %4181 = vst [vmem:[%s288 + $0xd0] sm:$0xff] %v4165
        %4182 = vst [vmem:[%s288 + $0xe8] sm:$0xff] %v4166
        %4183 = vst [vmem:[%s288 + $0x100] sm:$0xff] %v4167
        %4184 = vst [vmem:[%s288 + $0x118] sm:$0xff] %v4168
        %4185 = vst [vmem:[%s288 + $0x130] sm:$0xff] %v4169
        %4186 = vst [vmem:[%s288 + $0x148] sm:$0xff] %v4170
        %4187 = vst [vmem:[%s288 + $0x160] sm:$0xff] %v4171
        %4188 = vst [vmem:[%s288 + $0x178] sm:$0xff] %v4172
        %s4189 = sand.u32 %s171, 1
        %s4190 = scalar_lea.sflag [#allocation6], %s4189
        %s4191 = sand.u32 %s171, 1
        %s4192 = smul.addr %s4191, 384
        %s4193 = scalar_lea.vmem [#allocation10], %s4192
        // Predicated region
        $region73: #{tpu_custom_call.1} parent=43 // pred_check
          %p4194 = pneg %p181
        $region74: #{tpu_custom_call.1} parent=43 // pred_check_branch
          %4196 = sbr.rel (%p4194) target = $region76
        $region75: #{tpu_custom_call.1} parent=43 // pred_region
          %s4197 = smul.u32 8, %s28
          %s4199 = ssub.s32 6144, 6144
          %4200 = vsyncadd %s4190, %s4199
          %s4201 = smul.addr %s4197, 6
          %s4202 = smul.addr %s27, 96
          %s4203 = sadd.s32 %s4201, %s4202
          %s4204 = smul.addr %s4203, 128
          %s4205 = scalar_lea.hbm %s7, %s4204
          %s4206 = sshll.u32 %s4193, 4
          %s4207 = int_to_ptr.vmem [resolvable:$true] %s4206
          %4212 = dma.vmem_to_hbm [thread:$0]  %s4207, 6144, %s4205, %s4190, 384, 384, 24
        $region76: #{tpu_custom_call.1} parent=43 // pred_fallthru
          _
      $region44: #{tpu_custom_call.1} parent=5 // pred_fallthru
        _
      %p4213 = scmp.le.s32.totalorder 2, %s18
      // Predicated region
      $region77: #{tpu_custom_call.1} parent=5 // pred_check
        %p4214 = pneg %p4213
      $region78: #{tpu_custom_call.1} parent=5 // pred_check_branch
        %4216 = sbr.rel (%p4214) target = $region80
      $region79: #{tpu_custom_call.1} parent=5 // pred_region
        %s4217 = ssub.s32 %s18, 2
        // Predicated region
        $region81: #{tpu_custom_call.1} parent=79 // pred_check
          %p4218 = pneg %p187
        $region82: #{tpu_custom_call.1} parent=79 // pred_check_branch
          %4220 = sbr.rel (%p4218) target = $region84
        $region83: #{tpu_custom_call.1} parent=79 // pred_region
          %s4221 = sand.u32 %s172, 1
          %s4222 = scalar_lea.sflag [#allocation6], %s4221
          %s4223 = sand.u32 %s172, 1
          %s4224 = smul.addr %s4223, 384
          %s4225 = scalar_lea.vmem [#allocation10], %s4224
          %4226 = dma.done %s4222, 6144
        $region84: #{tpu_custom_call.1} parent=79 // pred_fallthru
          _
      $region80: #{tpu_custom_call.1} parent=5 // pred_fallthru
        _
    $region6: #{tpu_custom_call.1} parent=1 // loop_footer
      %s22 = sadd.s32 1, %s18
    $region7: #{tpu_custom_call.1} parent=1 // loop_footer_branch
      %17 = sbr.rel target = $region3
    $region8: #{tpu_custom_call.1} parent=1 // loop_exit
      _
    %4227 = vsyncpa [#allocation5], 1
    %s4228 = scalar_lea.sflag [#allocation5], 1
    %4229 = vsyncpa %s4228, 1
    %4230 = vsyncpa [#allocation8], 1
    %4231 = vsyncpa [#allocation6], 1
    %s4232 = scalar_lea.sflag [#allocation6], 1
    %4233 = vsyncpa %s4232, 1
  %4234 = vsyncmov [#allocation3]
  %s4235 = vpop.sfrf %4234
  %p4236 = scmp.eq.s32.totalorder %s4235, 0
  %p4237 = pneg %p4236
  %4239 = shalt.err (%p4237)
  %s4240 = scalar_lea.sflag [#allocation3], 1
  %4241 = vsyncmov %s4240
  %s4242 = vpop.sfrf %4241
  %p4243 = scmp.eq.s32.totalorder %s4242, 0
  %p4244 = pneg %p4243
  %4246 = shalt.err (%p4244)

</llo_original>
